<compile_context>
chip_gen: v7x
topology: tpu7x:2x2x1
jax: 0.10.0
libtpu: 0.0.40
codegen_flags: <defaults>
</compile_context>

<pallas_src>
import functools
import math

import jax
import jax.numpy as jnp
import numpy as np
from jax import lax
from jax.experimental import pallas as pl
from jax.experimental.pallas import tpu as pltpu

BN_EPS = 1e-5          # PyTorch BatchNorm2d default eps
COUT_PAD = 128         # lane-dense padded head output channels


# ---------------------------------------------------------------------------
# Wrapper-side constant builders (trace-time numpy)
# ---------------------------------------------------------------------------
def _round_up(v, m):
    return (v + m - 1) // m * m


def _nbytes(a):
    return int(np.prod(a.shape)) * a.dtype.itemsize


def _pool_select_blockdiag(ho, wo, b_blk):
    """(B*Mp, B*Ho*Wo) block-diagonal 0/1 row-selection matrix (bf16-exact)."""
    hp, wp = ho // 2, wo // 2
    mp, my = hp * wp, ho * wo
    sel = np.zeros((b_blk * mp, b_blk * my), np.float32)
    for b in range(b_blk):
        for p in range(hp):
            for q in range(wp):
                sel[b * mp + p * wp + q, b * my + (2 * p) * wo + (2 * q)] = 1.0
    return jnp.asarray(sel, jnp.bfloat16)


def _tap_masks(hp, wp, b_blk, feature):
    """(9, B*Mp, F) 0/1 edge masks for the pad-1 3x3 tap gather done via rolls."""
    mp = hp * wp
    m = np.zeros((9, mp), np.float32)
    for di in range(3):
        for dj in range(3):
            t = di * 3 + dj
            for i in range(hp):
                for j in range(wp):
                    if 0 <= i + di - 1 < hp and 0 <= j + dj - 1 < wp:
                        m[t, i * wp + j] = 1.0
    m = np.tile(m, (1, b_blk))[:, :, None]                   # (9, B*Mp, 1)
    m = np.broadcast_to(m, (9, b_blk * mp, feature))
    return jnp.asarray(m)


def _im2col(x, k, stride, pad):
    # one-off glue for the 7x7/s2 pre-conv only (tiny input), NHWC.
    N, H, W, C = x.shape
    xp = jnp.pad(x, ((0, 0), (pad, pad), (pad, pad), (0, 0)))
    Ho = (H + 2 * pad - k) // stride + 1
    Wo = (W + 2 * pad - k) // stride + 1
    cols = []
    for di in range(k):
        for dj in range(k):
            cols.append(xp[:, di:di + (Ho - 1) * stride + 1:stride,
                              dj:dj + (Wo - 1) * stride + 1:stride, :])
    patches = jnp.stack(cols, axis=3)            # (N, Ho, Wo, k*k, C)
    return patches.reshape(N * Ho * Wo, k * k * C), Ho, Wo


def _fold_bn(p):
    """eval-mode BatchNorm folding: scale, shift = gamma/std, beta - mean*scale."""
    scale = p["gamma"] / jnp.sqrt(p["var"] + BN_EPS)
    shift = p["beta"] - p["mean"] * scale
    return scale, shift


# ---------------------------------------------------------------------------
# Fused whole-network Pallas kernel (one grid step per batch block)
# ---------------------------------------------------------------------------
def _sgsc_kernel(patches_ref, wpre_ref, bpre_ref, sel_ref, mask_ref,
                 wg_ref, bg_ref, gates_ref, wh_ref, bh_ref, out_ref,
                 *, stack, depth, hp, wp, b_blk):
    f32, bf16 = jnp.float32, jnp.bfloat16
    mp = hp * wp
    wo = 2 * wp
    m_act = b_blk * mp            # rows of the post-pool activation
    m_pre = b_blk * 4 * mp        # rows of the pre-pool activation (Ho*Wo each)

    # --- pre: 7x7/s2 conv as one bf16 MXU matmul (BN scale folded) + shift + ReLU
    y = jnp.dot(patches_ref[...], wpre_ref[...], preferred_element_type=f32)
    y = jnp.maximum(y + bpre_ref[...], 0.0)                         # (m_pre, F) f32

    # --- 2x2 maxpool: two sublane rolls + maxes (XLU/VPU), then a single 0/1
    #     block-diagonal bf16 selection matmul to compact the kept rows.
    cmax = jnp.maximum(y, pltpu.roll(y, shift=m_pre - 1, axis=0))      # col pair max
    rmax = jnp.maximum(cmax, pltpu.roll(cmax, shift=m_pre - wo, axis=0))  # row pair max
    x = jnp.dot(sel_ref[...], rmax.astype(bf16), preferred_element_type=f32)  # (m_act, F)

    # --- head-channel mask, hoisted out of the per-stack loop
    is_center = lax.broadcasted_iota(jnp.int32, (m_act, COUT_PAD), 1) == 0

    # --- gated residual block: out = g0*x + g1*relu(conv3x3(x)*bn_scale + bn_shift)
    def grb(x, li):
        # 3x3 gather = 8 sublane rolls + 0/1 edge masks; the 9 taps are
        # lane-concatenated and fused into ONE (M,9F)x(9F,F) bf16 MXU matmul.
        cols = []
        for di in range(3):
            for dj in range(3):
                t = di * 3 + dj
                off = (di - 1) * wp + (dj - 1)
                if off == 0:
                    xt = x
                else:
                    xt = pltpu.roll(x, shift=(-off) % m_act, axis=0) * mask_ref[t]
                cols.append(xt.astype(bf16))
        xs_cat = jnp.concatenate(cols, axis=-1)                      # (m_act, 9F) bf16
        acc = jnp.dot(xs_cat, wg_ref[li], preferred_element_type=f32)
        branch = jnp.maximum(acc + bg_ref[li], 0.0)
        return gates_ref[2 * li] * x + gates_ref[2 * li + 1] * branch

    x = grb(x, 0)                                                    # prelayer GRB
    for s in range(stack):
        for d in range(depth):                                       # Base(depth=4)
            x = grb(x, 1 + s * depth + d)
        # --- 1x1 head: bf16 matmul + bias; sigmoid(ch0)=0.5*tanh(0.5*z)+0.5, tanh(rest)
        z = jnp.dot(x.astype(bf16), wh_ref[s], preferred_element_type=f32) + bh_ref[s]
        t = jnp.tanh(jnp.where(is_center, 0.5 * z, z))
        out_ref[s] = jnp.where(is_center, 0.5 * t + 0.5, t)


# ---------------------------------------------------------------------------
# Forward pass (mirrors SoftGatedSkipConnection.forward)
# ---------------------------------------------------------------------------
def forward(params, x_nchw, stack, depth=4):
    N, Cin, H, W = x_nchw.shape
    feature = params["pre_conv"]["w"].shape[-1]
    out_ch = params["out"][0]["w"].shape[-1]
    L = 1 + stack * depth

    # --- glue: NCHW->NHWC and a single small im2col for the 7x7/s2 pre-conv
    x = jnp.transpose(x_nchw, (0, 2, 3, 1))
    patches, Ho, Wo = _im2col(x, 7, 2, 3)                 # (N*Ho*Wo, 49*Cin)
    assert Ho % 2 == 0 and Wo % 2 == 0, "MaxPool2d(2) expects even spatial dims"
    Kpre = patches.shape[-1]
    Kpad = _round_up(Kpre, 128)                           # 196 -> 256 lane-aligned
    patches = jnp.pad(patches, ((0, 0), (0, Kpad - Kpre))).astype(jnp.bfloat16)
    Hp, Wp = Ho // 2, Wo // 2
    Mp = Hp * Wp

    # --- batch blocking: grow matmul M toward 128 rows, keep >= 2 grid steps
    #     (both v7x TensorCores get work) when the batch allows it.
    b_blk = 1
    for cand in range(1, N + 1):
        if N % cand or cand * Mp > 128:
            continue
        if N >= 2 and N // cand < 2:
            continue
        b_blk = cand
    n_blk = N // b_blk

    # --- fold eval-mode BN into conv weights (epilogue = +shift, ReLU); cast bf16
    pc = params["pre_conv"]
    sc, sh = _fold_bn(pc)
    wpre = jnp.pad(pc["w"].reshape(Kpre, feature) * sc[None, :],
                   ((0, Kpad - Kpre), (0, 0))).astype(jnp.bfloat16)    # (Kpad, F)
    bpre = sh.reshape(1, feature)

    grbs = [params["pre_grb"]] + [g for base in params["bases"] for g in base]
    wg, bg, gates = [], [], []
    for g in grbs:
        scale_g, shift_g = _fold_bn(g)
        wg.append((g["w"] * scale_g[None, None, None, :]).reshape(9 * feature, feature))
        bg.append(shift_g.reshape(1, feature))
        gates.append(g["gates"])
    wg = jnp.stack(wg).astype(jnp.bfloat16)               # (L, 9F, F)
    bg = jnp.stack(bg)                                    # (L, 1, F)
    gates = jnp.stack(gates).reshape(-1)                  # (2L,) -> SMEM

    # --- 1x1 head weights zero-padded to 128 output lanes (lane-dense stores)
    wh = jnp.stack([jnp.pad(o["w"], ((0, 0), (0, COUT_PAD - out_ch)))
                    for o in params["out"]]).astype(jnp.bfloat16)      # (S, F, 128)
    bh = jnp.stack([jnp.pad(o["b"], (0, COUT_PAD - out_ch)).reshape(1, COUT_PAD)
                    for o in params["out"]])                           # (S, 1, 128)

    pool_sel = _pool_select_blockdiag(Ho, Wo, b_blk)       # (B*Mp, B*Ho*Wo) bf16
    tap_mask = _tap_masks(Hp, Wp, b_blk, feature)          # (9, B*Mp, F) f32

    # --- explicit VMEM budget (v7x: 64 MiB physical / 32 MiB default scoped)
    resident = sum(_nbytes(a) for a in (wpre, bpre, pool_sel, tap_mask, wg, bg, wh, bh))
    per_step = _nbytes(patches) // n_blk + stack * b_blk * Mp * COUT_PAD * 4
    vmem_limit = int(min(100 * 2 ** 20, max(16 * 2 ** 20, 4 * (resident + 2 * per_step))))

    out = pl.pallas_call(
        functools.partial(_sgsc_kernel, stack=stack, depth=depth,
                          hp=Hp, wp=Wp, b_blk=b_blk),
        out_shape=jax.ShapeDtypeStruct((stack, N * Mp, COUT_PAD), jnp.float32),
        grid_spec=pltpu.PrefetchScalarGridSpec(
            num_scalar_prefetch=0,
            grid=(n_blk,),                                  # batch-block parallel
            in_specs=[
                pl.BlockSpec((b_blk * Ho * Wo, Kpad), lambda b: (b, 0)),        # patches
                pl.BlockSpec((Kpad, feature), lambda b: (0, 0)),                # wpre
                pl.BlockSpec((1, feature), lambda b: (0, 0)),                   # bpre
                pl.BlockSpec((b_blk * Mp, b_blk * Ho * Wo), lambda b: (0, 0)),  # pool sel
                pl.BlockSpec((9, b_blk * Mp, feature), lambda b: (0, 0, 0)),    # tap masks
                pl.BlockSpec((L, 9 * feature, feature), lambda b: (0, 0, 0)),   # wg
                pl.BlockSpec((L, 1, feature), lambda b: (0, 0, 0)),             # bg
                pl.BlockSpec(memory_space=pltpu.MemorySpace.SMEM),              # gates
                pl.BlockSpec((stack, feature, COUT_PAD), lambda b: (0, 0, 0)),  # wh
                pl.BlockSpec((stack, 1, COUT_PAD), lambda b: (0, 0, 0)),        # bh
            ],
            out_specs=pl.BlockSpec((stack, b_blk * Mp, COUT_PAD), lambda b: (0, b, 0)),
        ),
        compiler_params=pltpu.CompilerParams(
            dimension_semantics=("parallel",),
            vmem_limit_bytes=vmem_limit),
    )(patches, wpre, bpre, pool_sel, tap_mask, wg, bg, gates, wh, bh)

    # --- glue: slice padded channels, back to NCHW, split (center, kps)
    ret = []
    for s in range(stack):
        o = out[s, :, :out_ch].reshape(N, Hp, Wp, out_ch)
        o = jnp.transpose(o, (0, 3, 1, 2))                 # NHWC -> NCHW
        ret.append((o[:, :1], o[:, 1:]))                   # torch.split([1, out_ch-1], 1)
    return ret


# ---------------------------------------------------------------------------
# Deterministic parameter init (synthetic, not a checkpoint load)
# ---------------------------------------------------------------------------
def _conv_params(key, k, cin, cout):
    kw, kg, kb = jax.random.split(key, 3)
    w = jax.random.normal(kw, (k, k, cin, cout), jnp.float32) / math.sqrt(k * k * cin)
    gamma = 1.0 + 0.1 * jax.random.normal(kg, (cout,), jnp.float32)
    beta = 0.1 * jax.random.normal(kb, (cout,), jnp.float32)
    return dict(w=w, gamma=gamma, beta=beta,
                mean=jnp.zeros((cout,), jnp.float32),
                var=jnp.ones((cout,), jnp.float32))


def _grb_params(key, feature):
    kc, kg = jax.random.split(key)
    p = _conv_params(kc, 3, feature, feature)
    p["gates"] = jnp.array([1.0, 1.0], jnp.float32) + 0.1 * jax.random.normal(
        kg, (2,), jnp.float32)
    return p


def init_params(key, stack, feature, num_ch, num_key, depth=4):
    out_ch = 2 * num_key + 1
    n_keys = 2 + stack * (depth + 1)
    keys = jax.random.split(key, n_keys)
    params = {
        "pre_conv": _conv_params(keys[0], 7, num_ch, feature),
        "pre_grb": _grb_params(keys[1], feature),
        "bases": [],
        "out": [],
    }
    idx = 2
    for _ in range(stack):
        base = [_grb_params(keys[idx + d], feature) for d in range(depth)]
        idx += depth
        params["bases"].append(base)
        kw, kb = jax.random.split(keys[idx])
        idx += 1
        w = jax.random.normal(kw, (feature, out_ch), jnp.float32) / math.sqrt(feature)
        b = 0.01 * jax.random.normal(kb, (out_ch,), jnp.float32)
        params["out"].append(dict(w=w, b=b))
    return params


if __name__ == "__main__":
    stack, feature, num_ch, num_key = 2, 32, 4, 3
    key = jax.random.PRNGKey(0)
    kp, kx = jax.random.split(key)
    params = init_params(kp, stack, feature, num_ch, num_key, depth=4)
    x = jax.random.normal(kx, (2, num_ch, 16, 16), jnp.float32)   # NCHW input

    fwd = jax.jit(functools.partial(forward, stack=stack, depth=4))
    ret = fwd(params, x)
    ret = jax.tree_util.tree_map(jax.block_until_ready, ret)

    # shape sanity: 16 -> conv s2 -> 8 -> maxpool2 -> 4
    assert len(ret) == stack
    for center, kps in ret:
        assert center.shape == (2, 1, 4, 4)
        assert kps.shape == (2, 2 * num_key, 4, 4)
        assert bool(jnp.all((center >= 0.0) & (center <= 1.0)))
        assert bool(jnp.all((kps >= -1.0) & (kps <= 1.0)))
    print("KERNEL_OK")
</pallas_src>

<mosaic_0001>
module attributes {stable_mosaic.version = 11 : i64} {
  func.func @_sgsc_kernel(%arg0: i32, %arg1: memref<64x256xbf16, #tpu.memory_space<vmem>>, %arg2: memref<256x32xbf16, #tpu.memory_space<vmem>>, %arg3: memref<1x32xf32, #tpu.memory_space<vmem>>, %arg4: memref<16x64xbf16, #tpu.memory_space<vmem>>, %arg5: memref<9x16x32xf32, #tpu.memory_space<vmem>>, %arg6: memref<9x288x32xbf16, #tpu.memory_space<vmem>>, %arg7: memref<9x1x32xf32, #tpu.memory_space<vmem>>, %arg8: memref<18xf32, #tpu.memory_space<smem>>, %arg9: memref<2x32x128xbf16, #tpu.memory_space<vmem>>, %arg10: memref<2x1x128xf32, #tpu.memory_space<vmem>>, %arg11: memref<2x16x128xf32, #tpu.memory_space<vmem>>) attributes {dimension_semantics = [#tpu.dimension_semantics<parallel>], iteration_bounds = array<i64: 2>, scalar_prefetch = 0 : i64, scratch_operands = 0 : i64, tpu.core_type = #tpu.core_type<tc>, window_params = [{transform_indices = @transform_0, window_bounds = array<i64: 64, 256>}, {pipeline_mode = #tpu.pipeline_mode<synchronous>, transform_indices = @transform_1, window_bounds = array<i64: 256, 32>}, {pipeline_mode = #tpu.pipeline_mode<synchronous>, transform_indices = @transform_2, window_bounds = array<i64: 1, 32>}, {pipeline_mode = #tpu.pipeline_mode<synchronous>, transform_indices = @transform_3, window_bounds = array<i64: 16, 64>}, {pipeline_mode = #tpu.pipeline_mode<synchronous>, transform_indices = @transform_4, window_bounds = array<i64: 9, 16, 32>}, {pipeline_mode = #tpu.pipeline_mode<synchronous>, transform_indices = @transform_5, window_bounds = array<i64: 9, 288, 32>}, {pipeline_mode = #tpu.pipeline_mode<synchronous>, transform_indices = @transform_6, window_bounds = array<i64: 9, 1, 32>}, {transform_indices = @transform_7, window_bounds = array<i64: 18>}, {pipeline_mode = #tpu.pipeline_mode<synchronous>, transform_indices = @transform_8, window_bounds = array<i64: 2, 32, 128>}, {pipeline_mode = #tpu.pipeline_mode<synchronous>, transform_indices = @transform_9, window_bounds = array<i64: 2, 1, 128>}, {transform_indices = @transform_10, window_bounds = array<i64: 2, 16, 128>}]} {
    %c0 = arith.constant 0 : index
    %c0_0 = arith.constant 0 : index
    %0 = vector.load %arg1[%c0, %c0_0] : memref<64x256xbf16, #tpu.memory_space<vmem>>, vector<64x256xbf16>
    %c0_1 = arith.constant 0 : index
    %c0_2 = arith.constant 0 : index
    %1 = vector.load %arg2[%c0_1, %c0_2] : memref<256x32xbf16, #tpu.memory_space<vmem>>, vector<256x32xbf16>
    %cst = arith.constant dense<0.000000e+00> : vector<64x32xf32>
    %2 = tpu.matmul %0, %1, %cst {dimension_numbers = #tpu.dot_dimension_numbers<[1], [0], [0], [1], [0, 0, 1, 1], [], []>} : vector<64x256xbf16>, vector<256x32xbf16>, vector<64x32xf32> -> vector<64x32xf32>
    %c0_3 = arith.constant 0 : index
    %c0_4 = arith.constant 0 : index
    %3 = vector.load %arg3[%c0_3, %c0_4] : memref<1x32xf32, #tpu.memory_space<vmem>>, vector<1x32xf32>
    %4 = vector.broadcast %3 : vector<1x32xf32> to vector<64x32xf32>
    %5 = arith.addf %2, %4 : vector<64x32xf32>
    %cst_5 = arith.constant 0.000000e+00 : f32
    %6 = vector.broadcast %cst_5 : f32 to vector<64x32xf32>
    %7 = arith.maximumf %5, %6 : vector<64x32xf32>
    %c63_i32 = arith.constant 63 : i32
    %8 = tpu.dynamic_rotate %7 by %c63_i32 dim 0 : vector<64x32xf32>, i32 -> vector<64x32xf32>
    %9 = arith.maximumf %7, %8 : vector<64x32xf32>
    %c56_i32 = arith.constant 56 : i32
    %10 = tpu.dynamic_rotate %9 by %c56_i32 dim 0 : vector<64x32xf32>, i32 -> vector<64x32xf32>
    %11 = arith.maximumf %9, %10 : vector<64x32xf32>
    %c0_6 = arith.constant 0 : index
    %c0_7 = arith.constant 0 : index
    %12 = vector.load %arg4[%c0_6, %c0_7] : memref<16x64xbf16, #tpu.memory_space<vmem>>, vector<16x64xbf16>
    %13 = arith.truncf %11 : vector<64x32xf32> to vector<64x32xbf16>
    %cst_8 = arith.constant dense<0.000000e+00> : vector<16x32xf32>
    %14 = tpu.matmul %12, %13, %cst_8 {dimension_numbers = #tpu.dot_dimension_numbers<[1], [0], [0], [1], [0, 0, 1, 1], [], []>} : vector<16x64xbf16>, vector<64x32xbf16>, vector<16x32xf32> -> vector<16x32xf32>
    %15 = tpu.iota {dimensions = array<i32: 1>} : vector<16x128xi32>
    %c0_i32 = arith.constant 0 : i32
    %16 = vector.broadcast %c0_i32 : i32 to vector<16x128xi32>
    %17 = arith.cmpi eq, %15, %16 : vector<16x128xi32>
    %c5_i32 = arith.constant 5 : i32
    %18 = tpu.dynamic_rotate %14 by %c5_i32 dim 0 : vector<16x32xf32>, i32 -> vector<16x32xf32>
    %c0_9 = arith.constant 0 : index
    %c0_10 = arith.constant 0 : index
    %c0_11 = arith.constant 0 : index
    %19 = vector.load %arg5[%c0_9, %c0_10, %c0_11] : memref<9x16x32xf32, #tpu.memory_space<vmem>>, vector<1x16x32xf32>
    %20 = vector.shape_cast %19 : vector<1x16x32xf32> to vector<16x32xf32>
    %21 = arith.mulf %18, %20 : vector<16x32xf32>
    %22 = arith.truncf %21 : vector<16x32xf32> to vector<16x32xbf16>
    %c4_i32 = arith.constant 4 : i32
    %23 = tpu.dynamic_rotate %14 by %c4_i32 dim 0 : vector<16x32xf32>, i32 -> vector<16x32xf32>
    %c1 = arith.constant 1 : index
    %c0_12 = arith.constant 0 : index
    %c0_13 = arith.constant 0 : index
    %24 = vector.load %arg5[%c1, %c0_12, %c0_13] : memref<9x16x32xf32, #tpu.memory_space<vmem>>, vector<1x16x32xf32>
    %25 = vector.shape_cast %24 : vector<1x16x32xf32> to vector<16x32xf32>
    %26 = arith.mulf %23, %25 : vector<16x32xf32>
    %27 = arith.truncf %26 : vector<16x32xf32> to vector<16x32xbf16>
    %c3_i32 = arith.constant 3 : i32
    %28 = tpu.dynamic_rotate %14 by %c3_i32 dim 0 : vector<16x32xf32>, i32 -> vector<16x32xf32>
    %c2 = arith.constant 2 : index
    %c0_14 = arith.constant 0 : index
    %c0_15 = arith.constant 0 : index
    %29 = vector.load %arg5[%c2, %c0_14, %c0_15] : memref<9x16x32xf32, #tpu.memory_space<vmem>>, vector<1x16x32xf32>
    %30 = vector.shape_cast %29 : vector<1x16x32xf32> to vector<16x32xf32>
    %31 = arith.mulf %28, %30 : vector<16x32xf32>
    %32 = arith.truncf %31 : vector<16x32xf32> to vector<16x32xbf16>
    %c1_i32 = arith.constant 1 : i32
    %33 = tpu.dynamic_rotate %14 by %c1_i32 dim 0 : vector<16x32xf32>, i32 -> vector<16x32xf32>
    %c3 = arith.constant 3 : index
    %c0_16 = arith.constant 0 : index
    %c0_17 = arith.constant 0 : index
    %34 = vector.load %arg5[%c3, %c0_16, %c0_17] : memref<9x16x32xf32, #tpu.memory_space<vmem>>, vector<1x16x32xf32>
    %35 = vector.shape_cast %34 : vector<1x16x32xf32> to vector<16x32xf32>
    %36 = arith.mulf %33, %35 : vector<16x32xf32>
    %37 = arith.truncf %36 : vector<16x32xf32> to vector<16x32xbf16>
    %38 = arith.truncf %14 : vector<16x32xf32> to vector<16x32xbf16>
    %c15_i32 = arith.constant 15 : i32
    %39 = tpu.dynamic_rotate %14 by %c15_i32 dim 0 : vector<16x32xf32>, i32 -> vector<16x32xf32>
    %c5 = arith.constant 5 : index
    %c0_18 = arith.constant 0 : index
    %c0_19 = arith.constant 0 : index
    %40 = vector.load %arg5[%c5, %c0_18, %c0_19] : memref<9x16x32xf32, #tpu.memory_space<vmem>>, vector<1x16x32xf32>
    %41 = vector.shape_cast %40 : vector<1x16x32xf32> to vector<16x32xf32>
    %42 = arith.mulf %39, %41 : vector<16x32xf32>
    %43 = arith.truncf %42 : vector<16x32xf32> to vector<16x32xbf16>
    %c13_i32 = arith.constant 13 : i32
    %44 = tpu.dynamic_rotate %14 by %c13_i32 dim 0 : vector<16x32xf32>, i32 -> vector<16x32xf32>
    %c6 = arith.constant 6 : index
    %c0_20 = arith.constant 0 : index
    %c0_21 = arith.constant 0 : index
    %45 = vector.load %arg5[%c6, %c0_20, %c0_21] : memref<9x16x32xf32, #tpu.memory_space<vmem>>, vector<1x16x32xf32>
    %46 = vector.shape_cast %45 : vector<1x16x32xf32> to vector<16x32xf32>
    %47 = arith.mulf %44, %46 : vector<16x32xf32>
    %48 = arith.truncf %47 : vector<16x32xf32> to vector<16x32xbf16>
    %c12_i32 = arith.constant 12 : i32
    %49 = tpu.dynamic_rotate %14 by %c12_i32 dim 0 : vector<16x32xf32>, i32 -> vector<16x32xf32>
    %c7 = arith.constant 7 : index
    %c0_22 = arith.constant 0 : index
    %c0_23 = arith.constant 0 : index
    %50 = vector.load %arg5[%c7, %c0_22, %c0_23] : memref<9x16x32xf32, #tpu.memory_space<vmem>>, vector<1x16x32xf32>
    %51 = vector.shape_cast %50 : vector<1x16x32xf32> to vector<16x32xf32>
    %52 = arith.mulf %49, %51 : vector<16x32xf32>
    %53 = arith.truncf %52 : vector<16x32xf32> to vector<16x32xbf16>
    %c11_i32 = arith.constant 11 : i32
    %54 = tpu.dynamic_rotate %14 by %c11_i32 dim 0 : vector<16x32xf32>, i32 -> vector<16x32xf32>
    %c8 = arith.constant 8 : index
    %c0_24 = arith.constant 0 : index
    %c0_25 = arith.constant 0 : index
    %55 = vector.load %arg5[%c8, %c0_24, %c0_25] : memref<9x16x32xf32, #tpu.memory_space<vmem>>, vector<1x16x32xf32>
    %56 = vector.shape_cast %55 : vector<1x16x32xf32> to vector<16x32xf32>
    %57 = arith.mulf %54, %56 : vector<16x32xf32>
    %58 = arith.truncf %57 : vector<16x32xf32> to vector<16x32xbf16>
    %59 = tpu.concatenate %22, %27, %32, %37, %38, %43, %48, %53, %58 in 1 : vector<16x32xbf16>, vector<16x32xbf16>, vector<16x32xbf16>, vector<16x32xbf16>, vector<16x32xbf16>, vector<16x32xbf16>, vector<16x32xbf16>, vector<16x32xbf16>, vector<16x32xbf16> -> vector<16x288xbf16>
    %c0_26 = arith.constant 0 : index
    %c0_27 = arith.constant 0 : index
    %c0_28 = arith.constant 0 : index
    %60 = vector.load %arg6[%c0_26, %c0_27, %c0_28] : memref<9x288x32xbf16, #tpu.memory_space<vmem>>, vector<1x288x32xbf16>
    %61 = vector.shape_cast %60 : vector<1x288x32xbf16> to vector<288x32xbf16>
    %cst_29 = arith.constant dense<0.000000e+00> : vector<16x32xf32>
    %62 = tpu.matmul %59, %61, %cst_29 {dimension_numbers = #tpu.dot_dimension_numbers<[1], [0], [0], [1], [0, 0, 1, 1], [], []>} : vector<16x288xbf16>, vector<288x32xbf16>, vector<16x32xf32> -> vector<16x32xf32>
    %c0_30 = arith.constant 0 : index
    %c0_31 = arith.constant 0 : index
    %c0_32 = arith.constant 0 : index
    %63 = vector.load %arg7[%c0_30, %c0_31, %c0_32] : memref<9x1x32xf32, #tpu.memory_space<vmem>>, vector<1x1x32xf32>
    %64 = vector.shape_cast %63 : vector<1x1x32xf32> to vector<1x32xf32>
    %65 = vector.broadcast %64 : vector<1x32xf32> to vector<16x32xf32>
    %66 = arith.addf %62, %65 : vector<16x32xf32>
    %cst_33 = arith.constant 0.000000e+00 : f32
    %67 = vector.broadcast %cst_33 : f32 to vector<16x32xf32>
    %68 = arith.maximumf %66, %67 : vector<16x32xf32>
    %c0_34 = arith.constant 0 : index
    %69 = memref.load %arg8[%c0_34] : memref<18xf32, #tpu.memory_space<smem>>
    %70 = vector.broadcast %69 : f32 to vector<16x32xf32>
    %71 = arith.mulf %70, %14 : vector<16x32xf32>
    %c1_35 = arith.constant 1 : index
    %72 = memref.load %arg8[%c1_35] : memref<18xf32, #tpu.memory_space<smem>>
    %73 = vector.broadcast %72 : f32 to vector<16x32xf32>
    %74 = arith.mulf %73, %68 : vector<16x32xf32>
    %75 = arith.addf %71, %74 : vector<16x32xf32>
    %c5_i32_36 = arith.constant 5 : i32
    %76 = tpu.dynamic_rotate %75 by %c5_i32_36 dim 0 : vector<16x32xf32>, i32 -> vector<16x32xf32>
    %c0_37 = arith.constant 0 : index
    %c0_38 = arith.constant 0 : index
    %c0_39 = arith.constant 0 : index
    %77 = vector.load %arg5[%c0_37, %c0_38, %c0_39] : memref<9x16x32xf32, #tpu.memory_space<vmem>>, vector<1x16x32xf32>
    %78 = vector.shape_cast %77 : vector<1x16x32xf32> to vector<16x32xf32>
    %79 = arith.mulf %76, %78 : vector<16x32xf32>
    %80 = arith.truncf %79 : vector<16x32xf32> to vector<16x32xbf16>
    %c4_i32_40 = arith.constant 4 : i32
    %81 = tpu.dynamic_rotate %75 by %c4_i32_40 dim 0 : vector<16x32xf32>, i32 -> vector<16x32xf32>
    %c1_41 = arith.constant 1 : index
    %c0_42 = arith.constant 0 : index
    %c0_43 = arith.constant 0 : index
    %82 = vector.load %arg5[%c1_41, %c0_42, %c0_43] : memref<9x16x32xf32, #tpu.memory_space<vmem>>, vector<1x16x32xf32>
    %83 = vector.shape_cast %82 : vector<1x16x32xf32> to vector<16x32xf32>
    %84 = arith.mulf %81, %83 : vector<16x32xf32>
    %85 = arith.truncf %84 : vector<16x32xf32> to vector<16x32xbf16>
    %c3_i32_44 = arith.constant 3 : i32
    %86 = tpu.dynamic_rotate %75 by %c3_i32_44 dim 0 : vector<16x32xf32>, i32 -> vector<16x32xf32>
    %c2_45 = arith.constant 2 : index
    %c0_46 = arith.constant 0 : index
    %c0_47 = arith.constant 0 : index
    %87 = vector.load %arg5[%c2_45, %c0_46, %c0_47] : memref<9x16x32xf32, #tpu.memory_space<vmem>>, vector<1x16x32xf32>
    %88 = vector.shape_cast %87 : vector<1x16x32xf32> to vector<16x32xf32>
    %89 = arith.mulf %86, %88 : vector<16x32xf32>
    %90 = arith.truncf %89 : vector<16x32xf32> to vector<16x32xbf16>
    %c1_i32_48 = arith.constant 1 : i32
    %91 = tpu.dynamic_rotate %75 by %c1_i32_48 dim 0 : vector<16x32xf32>, i32 -> vector<16x32xf32>
    %c3_49 = arith.constant 3 : index
    %c0_50 = arith.constant 0 : index
    %c0_51 = arith.constant 0 : index
    %92 = vector.load %arg5[%c3_49, %c0_50, %c0_51] : memref<9x16x32xf32, #tpu.memory_space<vmem>>, vector<1x16x32xf32>
    %93 = vector.shape_cast %92 : vector<1x16x32xf32> to vector<16x32xf32>
    %94 = arith.mulf %91, %93 : vector<16x32xf32>
    %95 = arith.truncf %94 : vector<16x32xf32> to vector<16x32xbf16>
    %96 = arith.truncf %75 : vector<16x32xf32> to vector<16x32xbf16>
    %c15_i32_52 = arith.constant 15 : i32
    %97 = tpu.dynamic_rotate %75 by %c15_i32_52 dim 0 : vector<16x32xf32>, i32 -> vector<16x32xf32>
    %c5_53 = arith.constant 5 : index
    %c0_54 = arith.constant 0 : index
    %c0_55 = arith.constant 0 : index
    %98 = vector.load %arg5[%c5_53, %c0_54, %c0_55] : memref<9x16x32xf32, #tpu.memory_space<vmem>>, vector<1x16x32xf32>
    %99 = vector.shape_cast %98 : vector<1x16x32xf32> to vector<16x32xf32>
    %100 = arith.mulf %97, %99 : vector<16x32xf32>
    %101 = arith.truncf %100 : vector<16x32xf32> to vector<16x32xbf16>
    %c13_i32_56 = arith.constant 13 : i32
    %102 = tpu.dynamic_rotate %75 by %c13_i32_56 dim 0 : vector<16x32xf32>, i32 -> vector<16x32xf32>
    %c6_57 = arith.constant 6 : index
    %c0_58 = arith.constant 0 : index
    %c0_59 = arith.constant 0 : index
    %103 = vector.load %arg5[%c6_57, %c0_58, %c0_59] : memref<9x16x32xf32, #tpu.memory_space<vmem>>, vector<1x16x32xf32>
    %104 = vector.shape_cast %103 : vector<1x16x32xf32> to vector<16x32xf32>
    %105 = arith.mulf %102, %104 : vector<16x32xf32>
    %106 = arith.truncf %105 : vector<16x32xf32> to vector<16x32xbf16>
    %c12_i32_60 = arith.constant 12 : i32
    %107 = tpu.dynamic_rotate %75 by %c12_i32_60 dim 0 : vector<16x32xf32>, i32 -> vector<16x32xf32>
    %c7_61 = arith.constant 7 : index
    %c0_62 = arith.constant 0 : index
    %c0_63 = arith.constant 0 : index
    %108 = vector.load %arg5[%c7_61, %c0_62, %c0_63] : memref<9x16x32xf32, #tpu.memory_space<vmem>>, vector<1x16x32xf32>
    %109 = vector.shape_cast %108 : vector<1x16x32xf32> to vector<16x32xf32>
    %110 = arith.mulf %107, %109 : vector<16x32xf32>
    %111 = arith.truncf %110 : vector<16x32xf32> to vector<16x32xbf16>
    %c11_i32_64 = arith.constant 11 : i32
    %112 = tpu.dynamic_rotate %75 by %c11_i32_64 dim 0 : vector<16x32xf32>, i32 -> vector<16x32xf32>
    %c8_65 = arith.constant 8 : index
    %c0_66 = arith.constant 0 : index
    %c0_67 = arith.constant 0 : index
    %113 = vector.load %arg5[%c8_65, %c0_66, %c0_67] : memref<9x16x32xf32, #tpu.memory_space<vmem>>, vector<1x16x32xf32>
    %114 = vector.shape_cast %113 : vector<1x16x32xf32> to vector<16x32xf32>
    %115 = arith.mulf %112, %114 : vector<16x32xf32>
    %116 = arith.truncf %115 : vector<16x32xf32> to vector<16x32xbf16>
    %117 = tpu.concatenate %80, %85, %90, %95, %96, %101, %106, %111, %116 in 1 : vector<16x32xbf16>, vector<16x32xbf16>, vector<16x32xbf16>, vector<16x32xbf16>, vector<16x32xbf16>, vector<16x32xbf16>, vector<16x32xbf16>, vector<16x32xbf16>, vector<16x32xbf16> -> vector<16x288xbf16>
    %c1_68 = arith.constant 1 : index
    %c0_69 = arith.constant 0 : index
    %c0_70 = arith.constant 0 : index
    %118 = vector.load %arg6[%c1_68, %c0_69, %c0_70] : memref<9x288x32xbf16, #tpu.memory_space<vmem>>, vector<1x288x32xbf16>
    %119 = vector.shape_cast %118 : vector<1x288x32xbf16> to vector<288x32xbf16>
    %cst_71 = arith.constant dense<0.000000e+00> : vector<16x32xf32>
    %120 = tpu.matmul %117, %119, %cst_71 {dimension_numbers = #tpu.dot_dimension_numbers<[1], [0], [0], [1], [0, 0, 1, 1], [], []>} : vector<16x288xbf16>, vector<288x32xbf16>, vector<16x32xf32> -> vector<16x32xf32>
    %c1_72 = arith.constant 1 : index
    %c0_73 = arith.constant 0 : index
    %c0_74 = arith.constant 0 : index
    %121 = vector.load %arg7[%c1_72, %c0_73, %c0_74] : memref<9x1x32xf32, #tpu.memory_space<vmem>>, vector<1x1x32xf32>
    %122 = vector.shape_cast %121 : vector<1x1x32xf32> to vector<1x32xf32>
    %123 = vector.broadcast %122 : vector<1x32xf32> to vector<16x32xf32>
    %124 = arith.addf %120, %123 : vector<16x32xf32>
    %cst_75 = arith.constant 0.000000e+00 : f32
    %125 = vector.broadcast %cst_75 : f32 to vector<16x32xf32>
    %126 = arith.maximumf %124, %125 : vector<16x32xf32>
    %c2_76 = arith.constant 2 : index
    %127 = memref.load %arg8[%c2_76] : memref<18xf32, #tpu.memory_space<smem>>
    %128 = vector.broadcast %127 : f32 to vector<16x32xf32>
    %129 = arith.mulf %128, %75 : vector<16x32xf32>
    %c3_77 = arith.constant 3 : index
    %130 = memref.load %arg8[%c3_77] : memref<18xf32, #tpu.memory_space<smem>>
    %131 = vector.broadcast %130 : f32 to vector<16x32xf32>
    %132 = arith.mulf %131, %126 : vector<16x32xf32>
    %133 = arith.addf %129, %132 : vector<16x32xf32>
    %c5_i32_78 = arith.constant 5 : i32
    %134 = tpu.dynamic_rotate %133 by %c5_i32_78 dim 0 : vector<16x32xf32>, i32 -> vector<16x32xf32>
    %c0_79 = arith.constant 0 : index
    %c0_80 = arith.constant 0 : index
    %c0_81 = arith.constant 0 : index
    %135 = vector.load %arg5[%c0_79, %c0_80, %c0_81] : memref<9x16x32xf32, #tpu.memory_space<vmem>>, vector<1x16x32xf32>
    %136 = vector.shape_cast %135 : vector<1x16x32xf32> to vector<16x32xf32>
    %137 = arith.mulf %134, %136 : vector<16x32xf32>
    %138 = arith.truncf %137 : vector<16x32xf32> to vector<16x32xbf16>
    %c4_i32_82 = arith.constant 4 : i32
    %139 = tpu.dynamic_rotate %133 by %c4_i32_82 dim 0 : vector<16x32xf32>, i32 -> vector<16x32xf32>
    %c1_83 = arith.constant 1 : index
    %c0_84 = arith.constant 0 : index
    %c0_85 = arith.constant 0 : index
    %140 = vector.load %arg5[%c1_83, %c0_84, %c0_85] : memref<9x16x32xf32, #tpu.memory_space<vmem>>, vector<1x16x32xf32>
    %141 = vector.shape_cast %140 : vector<1x16x32xf32> to vector<16x32xf32>
    %142 = arith.mulf %139, %141 : vector<16x32xf32>
    %143 = arith.truncf %142 : vector<16x32xf32> to vector<16x32xbf16>
    %c3_i32_86 = arith.constant 3 : i32
    %144 = tpu.dynamic_rotate %133 by %c3_i32_86 dim 0 : vector<16x32xf32>, i32 -> vector<16x32xf32>
    %c2_87 = arith.constant 2 : index
    %c0_88 = arith.constant 0 : index
    %c0_89 = arith.constant 0 : index
    %145 = vector.load %arg5[%c2_87, %c0_88, %c0_89] : memref<9x16x32xf32, #tpu.memory_space<vmem>>, vector<1x16x32xf32>
    %146 = vector.shape_cast %145 : vector<1x16x32xf32> to vector<16x32xf32>
    %147 = arith.mulf %144, %146 : vector<16x32xf32>
    %148 = arith.truncf %147 : vector<16x32xf32> to vector<16x32xbf16>
    %c1_i32_90 = arith.constant 1 : i32
    %149 = tpu.dynamic_rotate %133 by %c1_i32_90 dim 0 : vector<16x32xf32>, i32 -> vector<16x32xf32>
    %c3_91 = arith.constant 3 : index
    %c0_92 = arith.constant 0 : index
    %c0_93 = arith.constant 0 : index
    %150 = vector.load %arg5[%c3_91, %c0_92, %c0_93] : memref<9x16x32xf32, #tpu.memory_space<vmem>>, vector<1x16x32xf32>
    %151 = vector.shape_cast %150 : vector<1x16x32xf32> to vector<16x32xf32>
    %152 = arith.mulf %149, %151 : vector<16x32xf32>
    %153 = arith.truncf %152 : vector<16x32xf32> to vector<16x32xbf16>
    %154 = arith.truncf %133 : vector<16x32xf32> to vector<16x32xbf16>
    %c15_i32_94 = arith.constant 15 : i32
    %155 = tpu.dynamic_rotate %133 by %c15_i32_94 dim 0 : vector<16x32xf32>, i32 -> vector<16x32xf32>
    %c5_95 = arith.constant 5 : index
    %c0_96 = arith.constant 0 : index
    %c0_97 = arith.constant 0 : index
    %156 = vector.load %arg5[%c5_95, %c0_96, %c0_97] : memref<9x16x32xf32, #tpu.memory_space<vmem>>, vector<1x16x32xf32>
    %157 = vector.shape_cast %156 : vector<1x16x32xf32> to vector<16x32xf32>
    %158 = arith.mulf %155, %157 : vector<16x32xf32>
    %159 = arith.truncf %158 : vector<16x32xf32> to vector<16x32xbf16>
    %c13_i32_98 = arith.constant 13 : i32
    %160 = tpu.dynamic_rotate %133 by %c13_i32_98 dim 0 : vector<16x32xf32>, i32 -> vector<16x32xf32>
    %c6_99 = arith.constant 6 : index
    %c0_100 = arith.constant 0 : index
    %c0_101 = arith.constant 0 : index
    %161 = vector.load %arg5[%c6_99, %c0_100, %c0_101] : memref<9x16x32xf32, #tpu.memory_space<vmem>>, vector<1x16x32xf32>
    %162 = vector.shape_cast %161 : vector<1x16x32xf32> to vector<16x32xf32>
    %163 = arith.mulf %160, %162 : vector<16x32xf32>
    %164 = arith.truncf %163 : vector<16x32xf32> to vector<16x32xbf16>
    %c12_i32_102 = arith.constant 12 : i32
    %165 = tpu.dynamic_rotate %133 by %c12_i32_102 dim 0 : vector<16x32xf32>, i32 -> vector<16x32xf32>
    %c7_103 = arith.constant 7 : index
    %c0_104 = arith.constant 0 : index
    %c0_105 = arith.constant 0 : index
    %166 = vector.load %arg5[%c7_103, %c0_104, %c0_105] : memref<9x16x32xf32, #tpu.memory_space<vmem>>, vector<1x16x32xf32>
    %167 = vector.shape_cast %166 : vector<1x16x32xf32> to vector<16x32xf32>
    %168 = arith.mulf %165, %167 : vector<16x32xf32>
    %169 = arith.truncf %168 : vector<16x32xf32> to vector<16x32xbf16>
    %c11_i32_106 = arith.constant 11 : i32
    %170 = tpu.dynamic_rotate %133 by %c11_i32_106 dim 0 : vector<16x32xf32>, i32 -> vector<16x32xf32>
    %c8_107 = arith.constant 8 : index
    %c0_108 = arith.constant 0 : index
    %c0_109 = arith.constant 0 : index
    %171 = vector.load %arg5[%c8_107, %c0_108, %c0_109] : memref<9x16x32xf32, #tpu.memory_space<vmem>>, vector<1x16x32xf32>
    %172 = vector.shape_cast %171 : vector<1x16x32xf32> to vector<16x32xf32>
    %173 = arith.mulf %170, %172 : vector<16x32xf32>
    %174 = arith.truncf %173 : vector<16x32xf32> to vector<16x32xbf16>
    %175 = tpu.concatenate %138, %143, %148, %153, %154, %159, %164, %169, %174 in 1 : vector<16x32xbf16>, vector<16x32xbf16>, vector<16x32xbf16>, vector<16x32xbf16>, vector<16x32xbf16>, vector<16x32xbf16>, vector<16x32xbf16>, vector<16x32xbf16>, vector<16x32xbf16> -> vector<16x288xbf16>
    %c2_110 = arith.constant 2 : index
    %c0_111 = arith.constant 0 : index
    %c0_112 = arith.constant 0 : index
    %176 = vector.load %arg6[%c2_110, %c0_111, %c0_112] : memref<9x288x32xbf16, #tpu.memory_space<vmem>>, vector<1x288x32xbf16>
    %177 = vector.shape_cast %176 : vector<1x288x32xbf16> to vector<288x32xbf16>
    %cst_113 = arith.constant dense<0.000000e+00> : vector<16x32xf32>
    %178 = tpu.matmul %175, %177, %cst_113 {dimension_numbers = #tpu.dot_dimension_numbers<[1], [0], [0], [1], [0, 0, 1, 1], [], []>} : vector<16x288xbf16>, vector<288x32xbf16>, vector<16x32xf32> -> vector<16x32xf32>
    %c2_114 = arith.constant 2 : index
    %c0_115 = arith.constant 0 : index
    %c0_116 = arith.constant 0 : index
    %179 = vector.load %arg7[%c2_114, %c0_115, %c0_116] : memref<9x1x32xf32, #tpu.memory_space<vmem>>, vector<1x1x32xf32>
    %180 = vector.shape_cast %179 : vector<1x1x32xf32> to vector<1x32xf32>
    %181 = vector.broadcast %180 : vector<1x32xf32> to vector<16x32xf32>
    %182 = arith.addf %178, %181 : vector<16x32xf32>
    %cst_117 = arith.constant 0.000000e+00 : f32
    %183 = vector.broadcast %cst_117 : f32 to vector<16x32xf32>
    %184 = arith.maximumf %182, %183 : vector<16x32xf32>
    %c4 = arith.constant 4 : index
    %185 = memref.load %arg8[%c4] : memref<18xf32, #tpu.memory_space<smem>>
    %186 = vector.broadcast %185 : f32 to vector<16x32xf32>
    %187 = arith.mulf %186, %133 : vector<16x32xf32>
    %c5_118 = arith.constant 5 : index
    %188 = memref.load %arg8[%c5_118] : memref<18xf32, #tpu.memory_space<smem>>
    %189 = vector.broadcast %188 : f32 to vector<16x32xf32>
    %190 = arith.mulf %189, %184 : vector<16x32xf32>
    %191 = arith.addf %187, %190 : vector<16x32xf32>
    %c5_i32_119 = arith.constant 5 : i32
    %192 = tpu.dynamic_rotate %191 by %c5_i32_119 dim 0 : vector<16x32xf32>, i32 -> vector<16x32xf32>
    %c0_120 = arith.constant 0 : index
    %c0_121 = arith.constant 0 : index
    %c0_122 = arith.constant 0 : index
    %193 = vector.load %arg5[%c0_120, %c0_121, %c0_122] : memref<9x16x32xf32, #tpu.memory_space<vmem>>, vector<1x16x32xf32>
    %194 = vector.shape_cast %193 : vector<1x16x32xf32> to vector<16x32xf32>
    %195 = arith.mulf %192, %194 : vector<16x32xf32>
    %196 = arith.truncf %195 : vector<16x32xf32> to vector<16x32xbf16>
    %c4_i32_123 = arith.constant 4 : i32
    %197 = tpu.dynamic_rotate %191 by %c4_i32_123 dim 0 : vector<16x32xf32>, i32 -> vector<16x32xf32>
    %c1_124 = arith.constant 1 : index
    %c0_125 = arith.constant 0 : index
    %c0_126 = arith.constant 0 : index
    %198 = vector.load %arg5[%c1_124, %c0_125, %c0_126] : memref<9x16x32xf32, #tpu.memory_space<vmem>>, vector<1x16x32xf32>
    %199 = vector.shape_cast %198 : vector<1x16x32xf32> to vector<16x32xf32>
    %200 = arith.mulf %197, %199 : vector<16x32xf32>
    %201 = arith.truncf %200 : vector<16x32xf32> to vector<16x32xbf16>
    %c3_i32_127 = arith.constant 3 : i32
    %202 = tpu.dynamic_rotate %191 by %c3_i32_127 dim 0 : vector<16x32xf32>, i32 -> vector<16x32xf32>
    %c2_128 = arith.constant 2 : index
    %c0_129 = arith.constant 0 : index
    %c0_130 = arith.constant 0 : index
    %203 = vector.load %arg5[%c2_128, %c0_129, %c0_130] : memref<9x16x32xf32, #tpu.memory_space<vmem>>, vector<1x16x32xf32>
    %204 = vector.shape_cast %203 : vector<1x16x32xf32> to vector<16x32xf32>
    %205 = arith.mulf %202, %204 : vector<16x32xf32>
    %206 = arith.truncf %205 : vector<16x32xf32> to vector<16x32xbf16>
    %c1_i32_131 = arith.constant 1 : i32
    %207 = tpu.dynamic_rotate %191 by %c1_i32_131 dim 0 : vector<16x32xf32>, i32 -> vector<16x32xf32>
    %c3_132 = arith.constant 3 : index
    %c0_133 = arith.constant 0 : index
    %c0_134 = arith.constant 0 : index
    %208 = vector.load %arg5[%c3_132, %c0_133, %c0_134] : memref<9x16x32xf32, #tpu.memory_space<vmem>>, vector<1x16x32xf32>
    %209 = vector.shape_cast %208 : vector<1x16x32xf32> to vector<16x32xf32>
    %210 = arith.mulf %207, %209 : vector<16x32xf32>
    %211 = arith.truncf %210 : vector<16x32xf32> to vector<16x32xbf16>
    %212 = arith.truncf %191 : vector<16x32xf32> to vector<16x32xbf16>
    %c15_i32_135 = arith.constant 15 : i32
    %213 = tpu.dynamic_rotate %191 by %c15_i32_135 dim 0 : vector<16x32xf32>, i32 -> vector<16x32xf32>
    %c5_136 = arith.constant 5 : index
    %c0_137 = arith.constant 0 : index
    %c0_138 = arith.constant 0 : index
    %214 = vector.load %arg5[%c5_136, %c0_137, %c0_138] : memref<9x16x32xf32, #tpu.memory_space<vmem>>, vector<1x16x32xf32>
    %215 = vector.shape_cast %214 : vector<1x16x32xf32> to vector<16x32xf32>
    %216 = arith.mulf %213, %215 : vector<16x32xf32>
    %217 = arith.truncf %216 : vector<16x32xf32> to vector<16x32xbf16>
    %c13_i32_139 = arith.constant 13 : i32
    %218 = tpu.dynamic_rotate %191 by %c13_i32_139 dim 0 : vector<16x32xf32>, i32 -> vector<16x32xf32>
    %c6_140 = arith.constant 6 : index
    %c0_141 = arith.constant 0 : index
    %c0_142 = arith.constant 0 : index
    %219 = vector.load %arg5[%c6_140, %c0_141, %c0_142] : memref<9x16x32xf32, #tpu.memory_space<vmem>>, vector<1x16x32xf32>
    %220 = vector.shape_cast %219 : vector<1x16x32xf32> to vector<16x32xf32>
    %221 = arith.mulf %218, %220 : vector<16x32xf32>
    %222 = arith.truncf %221 : vector<16x32xf32> to vector<16x32xbf16>
    %c12_i32_143 = arith.constant 12 : i32
    %223 = tpu.dynamic_rotate %191 by %c12_i32_143 dim 0 : vector<16x32xf32>, i32 -> vector<16x32xf32>
    %c7_144 = arith.constant 7 : index
    %c0_145 = arith.constant 0 : index
    %c0_146 = arith.constant 0 : index
    %224 = vector.load %arg5[%c7_144, %c0_145, %c0_146] : memref<9x16x32xf32, #tpu.memory_space<vmem>>, vector<1x16x32xf32>
    %225 = vector.shape_cast %224 : vector<1x16x32xf32> to vector<16x32xf32>
    %226 = arith.mulf %223, %225 : vector<16x32xf32>
    %227 = arith.truncf %226 : vector<16x32xf32> to vector<16x32xbf16>
    %c11_i32_147 = arith.constant 11 : i32
    %228 = tpu.dynamic_rotate %191 by %c11_i32_147 dim 0 : vector<16x32xf32>, i32 -> vector<16x32xf32>
    %c8_148 = arith.constant 8 : index
    %c0_149 = arith.constant 0 : index
    %c0_150 = arith.constant 0 : index
    %229 = vector.load %arg5[%c8_148, %c0_149, %c0_150] : memref<9x16x32xf32, #tpu.memory_space<vmem>>, vector<1x16x32xf32>
    %230 = vector.shape_cast %229 : vector<1x16x32xf32> to vector<16x32xf32>
    %231 = arith.mulf %228, %230 : vector<16x32xf32>
    %232 = arith.truncf %231 : vector<16x32xf32> to vector<16x32xbf16>
    %233 = tpu.concatenate %196, %201, %206, %211, %212, %217, %222, %227, %232 in 1 : vector<16x32xbf16>, vector<16x32xbf16>, vector<16x32xbf16>, vector<16x32xbf16>, vector<16x32xbf16>, vector<16x32xbf16>, vector<16x32xbf16>, vector<16x32xbf16>, vector<16x32xbf16> -> vector<16x288xbf16>
    %c3_151 = arith.constant 3 : index
    %c0_152 = arith.constant 0 : index
    %c0_153 = arith.constant 0 : index
    %234 = vector.load %arg6[%c3_151, %c0_152, %c0_153] : memref<9x288x32xbf16, #tpu.memory_space<vmem>>, vector<1x288x32xbf16>
    %235 = vector.shape_cast %234 : vector<1x288x32xbf16> to vector<288x32xbf16>
    %cst_154 = arith.constant dense<0.000000e+00> : vector<16x32xf32>
    %236 = tpu.matmul %233, %235, %cst_154 {dimension_numbers = #tpu.dot_dimension_numbers<[1], [0], [0], [1], [0, 0, 1, 1], [], []>} : vector<16x288xbf16>, vector<288x32xbf16>, vector<16x32xf32> -> vector<16x32xf32>
    %c3_155 = arith.constant 3 : index
    %c0_156 = arith.constant 0 : index
    %c0_157 = arith.constant 0 : index
    %237 = vector.load %arg7[%c3_155, %c0_156, %c0_157] : memref<9x1x32xf32, #tpu.memory_space<vmem>>, vector<1x1x32xf32>
    %238 = vector.shape_cast %237 : vector<1x1x32xf32> to vector<1x32xf32>
    %239 = vector.broadcast %238 : vector<1x32xf32> to vector<16x32xf32>
    %240 = arith.addf %236, %239 : vector<16x32xf32>
    %cst_158 = arith.constant 0.000000e+00 : f32
    %241 = vector.broadcast %cst_158 : f32 to vector<16x32xf32>
    %242 = arith.maximumf %240, %241 : vector<16x32xf32>
    %c6_159 = arith.constant 6 : index
    %243 = memref.load %arg8[%c6_159] : memref<18xf32, #tpu.memory_space<smem>>
    %244 = vector.broadcast %243 : f32 to vector<16x32xf32>
    %245 = arith.mulf %244, %191 : vector<16x32xf32>
    %c7_160 = arith.constant 7 : index
    %246 = memref.load %arg8[%c7_160] : memref<18xf32, #tpu.memory_space<smem>>
    %247 = vector.broadcast %246 : f32 to vector<16x32xf32>
    %248 = arith.mulf %247, %242 : vector<16x32xf32>
    %249 = arith.addf %245, %248 : vector<16x32xf32>
    %c5_i32_161 = arith.constant 5 : i32
    %250 = tpu.dynamic_rotate %249 by %c5_i32_161 dim 0 : vector<16x32xf32>, i32 -> vector<16x32xf32>
    %c0_162 = arith.constant 0 : index
    %c0_163 = arith.constant 0 : index
    %c0_164 = arith.constant 0 : index
    %251 = vector.load %arg5[%c0_162, %c0_163, %c0_164] : memref<9x16x32xf32, #tpu.memory_space<vmem>>, vector<1x16x32xf32>
    %252 = vector.shape_cast %251 : vector<1x16x32xf32> to vector<16x32xf32>
    %253 = arith.mulf %250, %252 : vector<16x32xf32>
    %254 = arith.truncf %253 : vector<16x32xf32> to vector<16x32xbf16>
    %c4_i32_165 = arith.constant 4 : i32
    %255 = tpu.dynamic_rotate %249 by %c4_i32_165 dim 0 : vector<16x32xf32>, i32 -> vector<16x32xf32>
    %c1_166 = arith.constant 1 : index
    %c0_167 = arith.constant 0 : index
    %c0_168 = arith.constant 0 : index
    %256 = vector.load %arg5[%c1_166, %c0_167, %c0_168] : memref<9x16x32xf32, #tpu.memory_space<vmem>>, vector<1x16x32xf32>
    %257 = vector.shape_cast %256 : vector<1x16x32xf32> to vector<16x32xf32>
    %258 = arith.mulf %255, %257 : vector<16x32xf32>
    %259 = arith.truncf %258 : vector<16x32xf32> to vector<16x32xbf16>
    %c3_i32_169 = arith.constant 3 : i32
    %260 = tpu.dynamic_rotate %249 by %c3_i32_169 dim 0 : vector<16x32xf32>, i32 -> vector<16x32xf32>
    %c2_170 = arith.constant 2 : index
    %c0_171 = arith.constant 0 : index
    %c0_172 = arith.constant 0 : index
    %261 = vector.load %arg5[%c2_170, %c0_171, %c0_172] : memref<9x16x32xf32, #tpu.memory_space<vmem>>, vector<1x16x32xf32>
    %262 = vector.shape_cast %261 : vector<1x16x32xf32> to vector<16x32xf32>
    %263 = arith.mulf %260, %262 : vector<16x32xf32>
    %264 = arith.truncf %263 : vector<16x32xf32> to vector<16x32xbf16>
    %c1_i32_173 = arith.constant 1 : i32
    %265 = tpu.dynamic_rotate %249 by %c1_i32_173 dim 0 : vector<16x32xf32>, i32 -> vector<16x32xf32>
    %c3_174 = arith.constant 3 : index
    %c0_175 = arith.constant 0 : index
    %c0_176 = arith.constant 0 : index
    %266 = vector.load %arg5[%c3_174, %c0_175, %c0_176] : memref<9x16x32xf32, #tpu.memory_space<vmem>>, vector<1x16x32xf32>
    %267 = vector.shape_cast %266 : vector<1x16x32xf32> to vector<16x32xf32>
    %268 = arith.mulf %265, %267 : vector<16x32xf32>
    %269 = arith.truncf %268 : vector<16x32xf32> to vector<16x32xbf16>
    %270 = arith.truncf %249 : vector<16x32xf32> to vector<16x32xbf16>
    %c15_i32_177 = arith.constant 15 : i32
    %271 = tpu.dynamic_rotate %249 by %c15_i32_177 dim 0 : vector<16x32xf32>, i32 -> vector<16x32xf32>
    %c5_178 = arith.constant 5 : index
    %c0_179 = arith.constant 0 : index
    %c0_180 = arith.constant 0 : index
    %272 = vector.load %arg5[%c5_178, %c0_179, %c0_180] : memref<9x16x32xf32, #tpu.memory_space<vmem>>, vector<1x16x32xf32>
    %273 = vector.shape_cast %272 : vector<1x16x32xf32> to vector<16x32xf32>
    %274 = arith.mulf %271, %273 : vector<16x32xf32>
    %275 = arith.truncf %274 : vector<16x32xf32> to vector<16x32xbf16>
    %c13_i32_181 = arith.constant 13 : i32
    %276 = tpu.dynamic_rotate %249 by %c13_i32_181 dim 0 : vector<16x32xf32>, i32 -> vector<16x32xf32>
    %c6_182 = arith.constant 6 : index
    %c0_183 = arith.constant 0 : index
    %c0_184 = arith.constant 0 : index
    %277 = vector.load %arg5[%c6_182, %c0_183, %c0_184] : memref<9x16x32xf32, #tpu.memory_space<vmem>>, vector<1x16x32xf32>
    %278 = vector.shape_cast %277 : vector<1x16x32xf32> to vector<16x32xf32>
    %279 = arith.mulf %276, %278 : vector<16x32xf32>
    %280 = arith.truncf %279 : vector<16x32xf32> to vector<16x32xbf16>
    %c12_i32_185 = arith.constant 12 : i32
    %281 = tpu.dynamic_rotate %249 by %c12_i32_185 dim 0 : vector<16x32xf32>, i32 -> vector<16x32xf32>
    %c7_186 = arith.constant 7 : index
    %c0_187 = arith.constant 0 : index
    %c0_188 = arith.constant 0 : index
    %282 = vector.load %arg5[%c7_186, %c0_187, %c0_188] : memref<9x16x32xf32, #tpu.memory_space<vmem>>, vector<1x16x32xf32>
    %283 = vector.shape_cast %282 : vector<1x16x32xf32> to vector<16x32xf32>
    %284 = arith.mulf %281, %283 : vector<16x32xf32>
    %285 = arith.truncf %284 : vector<16x32xf32> to vector<16x32xbf16>
    %c11_i32_189 = arith.constant 11 : i32
    %286 = tpu.dynamic_rotate %249 by %c11_i32_189 dim 0 : vector<16x32xf32>, i32 -> vector<16x32xf32>
    %c8_190 = arith.constant 8 : index
    %c0_191 = arith.constant 0 : index
    %c0_192 = arith.constant 0 : index
    %287 = vector.load %arg5[%c8_190, %c0_191, %c0_192] : memref<9x16x32xf32, #tpu.memory_space<vmem>>, vector<1x16x32xf32>
    %288 = vector.shape_cast %287 : vector<1x16x32xf32> to vector<16x32xf32>
    %289 = arith.mulf %286, %288 : vector<16x32xf32>
    %290 = arith.truncf %289 : vector<16x32xf32> to vector<16x32xbf16>
    %291 = tpu.concatenate %254, %259, %264, %269, %270, %275, %280, %285, %290 in 1 : vector<16x32xbf16>, vector<16x32xbf16>, vector<16x32xbf16>, vector<16x32xbf16>, vector<16x32xbf16>, vector<16x32xbf16>, vector<16x32xbf16>, vector<16x32xbf16>, vector<16x32xbf16> -> vector<16x288xbf16>
    %c4_193 = arith.constant 4 : index
    %c0_194 = arith.constant 0 : index
    %c0_195 = arith.constant 0 : index
    %292 = vector.load %arg6[%c4_193, %c0_194, %c0_195] : memref<9x288x32xbf16, #tpu.memory_space<vmem>>, vector<1x288x32xbf16>
    %293 = vector.shape_cast %292 : vector<1x288x32xbf16> to vector<288x32xbf16>
    %cst_196 = arith.constant dense<0.000000e+00> : vector<16x32xf32>
    %294 = tpu.matmul %291, %293, %cst_196 {dimension_numbers = #tpu.dot_dimension_numbers<[1], [0], [0], [1], [0, 0, 1, 1], [], []>} : vector<16x288xbf16>, vector<288x32xbf16>, vector<16x32xf32> -> vector<16x32xf32>
    %c4_197 = arith.constant 4 : index
    %c0_198 = arith.constant 0 : index
    %c0_199 = arith.constant 0 : index
    %295 = vector.load %arg7[%c4_197, %c0_198, %c0_199] : memref<9x1x32xf32, #tpu.memory_space<vmem>>, vector<1x1x32xf32>
    %296 = vector.shape_cast %295 : vector<1x1x32xf32> to vector<1x32xf32>
    %297 = vector.broadcast %296 : vector<1x32xf32> to vector<16x32xf32>
    %298 = arith.addf %294, %297 : vector<16x32xf32>
    %cst_200 = arith.constant 0.000000e+00 : f32
    %299 = vector.broadcast %cst_200 : f32 to vector<16x32xf32>
    %300 = arith.maximumf %298, %299 : vector<16x32xf32>
    %c8_201 = arith.constant 8 : index
    %301 = memref.load %arg8[%c8_201] : memref<18xf32, #tpu.memory_space<smem>>
    %302 = vector.broadcast %301 : f32 to vector<16x32xf32>
    %303 = arith.mulf %302, %249 : vector<16x32xf32>
    %c9 = arith.constant 9 : index
    %304 = memref.load %arg8[%c9] : memref<18xf32, #tpu.memory_space<smem>>
    %305 = vector.broadcast %304 : f32 to vector<16x32xf32>
    %306 = arith.mulf %305, %300 : vector<16x32xf32>
    %307 = arith.addf %303, %306 : vector<16x32xf32>
    %308 = arith.truncf %307 : vector<16x32xf32> to vector<16x32xbf16>
    %c0_202 = arith.constant 0 : index
    %c0_203 = arith.constant 0 : index
    %c0_204 = arith.constant 0 : index
    %309 = vector.load %arg9[%c0_202, %c0_203, %c0_204] : memref<2x32x128xbf16, #tpu.memory_space<vmem>>, vector<1x32x128xbf16>
    %310 = vector.shape_cast %309 : vector<1x32x128xbf16> to vector<32x128xbf16>
    %cst_205 = arith.constant dense<0.000000e+00> : vector<16x128xf32>
    %311 = tpu.matmul %308, %310, %cst_205 {dimension_numbers = #tpu.dot_dimension_numbers<[1], [0], [0], [1], [0, 0, 1, 1], [], []>} : vector<16x32xbf16>, vector<32x128xbf16>, vector<16x128xf32> -> vector<16x128xf32>
    %c0_206 = arith.constant 0 : index
    %c0_207 = arith.constant 0 : index
    %c0_208 = arith.constant 0 : index
    %312 = vector.load %arg10[%c0_206, %c0_207, %c0_208] : memref<2x1x128xf32, #tpu.memory_space<vmem>>, vector<1x1x128xf32>
    %313 = vector.shape_cast %312 : vector<1x1x128xf32> to vector<1x128xf32>
    %314 = vector.broadcast %313 : vector<1x128xf32> to vector<16x128xf32>
    %315 = arith.addf %311, %314 : vector<16x128xf32>
    %cst_209 = arith.constant 5.000000e-01 : f32
    %316 = vector.broadcast %cst_209 : f32 to vector<16x128xf32>
    %317 = arith.mulf %316, %315 : vector<16x128xf32>
    %318 = arith.select %17, %317, %315 : vector<16x128xi1>, vector<16x128xf32>
    %319 = math.tanh %318 : vector<16x128xf32>
    %cst_210 = arith.constant 5.000000e-01 : f32
    %320 = vector.broadcast %cst_210 : f32 to vector<16x128xf32>
    %321 = arith.mulf %320, %319 : vector<16x128xf32>
    %cst_211 = arith.constant 5.000000e-01 : f32
    %322 = vector.broadcast %cst_211 : f32 to vector<16x128xf32>
    %323 = arith.addf %321, %322 : vector<16x128xf32>
    %324 = arith.select %17, %323, %319 : vector<16x128xi1>, vector<16x128xf32>
    %c0_212 = arith.constant 0 : index
    %c0_213 = arith.constant 0 : index
    %c0_214 = arith.constant 0 : index
    %325 = vector.load %arg11[%c0_212, %c0_213, %c0_214] : memref<2x16x128xf32, #tpu.memory_space<vmem>>, vector<1x16x128xf32>
    %326 = vector.shape_cast %325 : vector<1x16x128xf32> to vector<16x128xf32>
    %327 = vector.shape_cast %324 : vector<16x128xf32> to vector<1x16x128xf32>
    tpu.vector_store %arg11[%c0_212, %c0_213, %c0_214], %327 {strides = array<i32>} : memref<2x16x128xf32, #tpu.memory_space<vmem>>, vector<1x16x128xf32>,
    %c5_i32_215 = arith.constant 5 : i32
    %328 = tpu.dynamic_rotate %307 by %c5_i32_215 dim 0 : vector<16x32xf32>, i32 -> vector<16x32xf32>
    %c0_216 = arith.constant 0 : index
    %c0_217 = arith.constant 0 : index
    %c0_218 = arith.constant 0 : index
    %329 = vector.load %arg5[%c0_216, %c0_217, %c0_218] : memref<9x16x32xf32, #tpu.memory_space<vmem>>, vector<1x16x32xf32>
    %330 = vector.shape_cast %329 : vector<1x16x32xf32> to vector<16x32xf32>
    %331 = arith.mulf %328, %330 : vector<16x32xf32>
    %332 = arith.truncf %331 : vector<16x32xf32> to vector<16x32xbf16>
    %c4_i32_219 = arith.constant 4 : i32
    %333 = tpu.dynamic_rotate %307 by %c4_i32_219 dim 0 : vector<16x32xf32>, i32 -> vector<16x32xf32>
    %c1_220 = arith.constant 1 : index
    %c0_221 = arith.constant 0 : index
    %c0_222 = arith.constant 0 : index
    %334 = vector.load %arg5[%c1_220, %c0_221, %c0_222] : memref<9x16x32xf32, #tpu.memory_space<vmem>>, vector<1x16x32xf32>
    %335 = vector.shape_cast %334 : vector<1x16x32xf32> to vector<16x32xf32>
    %336 = arith.mulf %333, %335 : vector<16x32xf32>
    %337 = arith.truncf %336 : vector<16x32xf32> to vector<16x32xbf16>
    %c3_i32_223 = arith.constant 3 : i32
    %338 = tpu.dynamic_rotate %307 by %c3_i32_223 dim 0 : vector<16x32xf32>, i32 -> vector<16x32xf32>
    %c2_224 = arith.constant 2 : index
    %c0_225 = arith.constant 0 : index
    %c0_226 = arith.constant 0 : index
    %339 = vector.load %arg5[%c2_224, %c0_225, %c0_226] : memref<9x16x32xf32, #tpu.memory_space<vmem>>, vector<1x16x32xf32>
    %340 = vector.shape_cast %339 : vector<1x16x32xf32> to vector<16x32xf32>
    %341 = arith.mulf %338, %340 : vector<16x32xf32>
    %342 = arith.truncf %341 : vector<16x32xf32> to vector<16x32xbf16>
    %c1_i32_227 = arith.constant 1 : i32
    %343 = tpu.dynamic_rotate %307 by %c1_i32_227 dim 0 : vector<16x32xf32>, i32 -> vector<16x32xf32>
    %c3_228 = arith.constant 3 : index
    %c0_229 = arith.constant 0 : index
    %c0_230 = arith.constant 0 : index
    %344 = vector.load %arg5[%c3_228, %c0_229, %c0_230] : memref<9x16x32xf32, #tpu.memory_space<vmem>>, vector<1x16x32xf32>
    %345 = vector.shape_cast %344 : vector<1x16x32xf32> to vector<16x32xf32>
    %346 = arith.mulf %343, %345 : vector<16x32xf32>
    %347 = arith.truncf %346 : vector<16x32xf32> to vector<16x32xbf16>
    %348 = arith.truncf %307 : vector<16x32xf32> to vector<16x32xbf16>
    %c15_i32_231 = arith.constant 15 : i32
    %349 = tpu.dynamic_rotate %307 by %c15_i32_231 dim 0 : vector<16x32xf32>, i32 -> vector<16x32xf32>
    %c5_232 = arith.constant 5 : index
    %c0_233 = arith.constant 0 : index
    %c0_234 = arith.constant 0 : index
    %350 = vector.load %arg5[%c5_232, %c0_233, %c0_234] : memref<9x16x32xf32, #tpu.memory_space<vmem>>, vector<1x16x32xf32>
    %351 = vector.shape_cast %350 : vector<1x16x32xf32> to vector<16x32xf32>
    %352 = arith.mulf %349, %351 : vector<16x32xf32>
    %353 = arith.truncf %352 : vector<16x32xf32> to vector<16x32xbf16>
    %c13_i32_235 = arith.constant 13 : i32
    %354 = tpu.dynamic_rotate %307 by %c13_i32_235 dim 0 : vector<16x32xf32>, i32 -> vector<16x32xf32>
    %c6_236 = arith.constant 6 : index
    %c0_237 = arith.constant 0 : index
    %c0_238 = arith.constant 0 : index
    %355 = vector.load %arg5[%c6_236, %c0_237, %c0_238] : memref<9x16x32xf32, #tpu.memory_space<vmem>>, vector<1x16x32xf32>
    %356 = vector.shape_cast %355 : vector<1x16x32xf32> to vector<16x32xf32>
    %357 = arith.mulf %354, %356 : vector<16x32xf32>
    %358 = arith.truncf %357 : vector<16x32xf32> to vector<16x32xbf16>
    %c12_i32_239 = arith.constant 12 : i32
    %359 = tpu.dynamic_rotate %307 by %c12_i32_239 dim 0 : vector<16x32xf32>, i32 -> vector<16x32xf32>
    %c7_240 = arith.constant 7 : index
    %c0_241 = arith.constant 0 : index
    %c0_242 = arith.constant 0 : index
    %360 = vector.load %arg5[%c7_240, %c0_241, %c0_242] : memref<9x16x32xf32, #tpu.memory_space<vmem>>, vector<1x16x32xf32>
    %361 = vector.shape_cast %360 : vector<1x16x32xf32> to vector<16x32xf32>
    %362 = arith.mulf %359, %361 : vector<16x32xf32>
    %363 = arith.truncf %362 : vector<16x32xf32> to vector<16x32xbf16>
    %c11_i32_243 = arith.constant 11 : i32
    %364 = tpu.dynamic_rotate %307 by %c11_i32_243 dim 0 : vector<16x32xf32>, i32 -> vector<16x32xf32>
    %c8_244 = arith.constant 8 : index
    %c0_245 = arith.constant 0 : index
    %c0_246 = arith.constant 0 : index
    %365 = vector.load %arg5[%c8_244, %c0_245, %c0_246] : memref<9x16x32xf32, #tpu.memory_space<vmem>>, vector<1x16x32xf32>
    %366 = vector.shape_cast %365 : vector<1x16x32xf32> to vector<16x32xf32>
    %367 = arith.mulf %364, %366 : vector<16x32xf32>
    %368 = arith.truncf %367 : vector<16x32xf32> to vector<16x32xbf16>
    %369 = tpu.concatenate %332, %337, %342, %347, %348, %353, %358, %363, %368 in 1 : vector<16x32xbf16>, vector<16x32xbf16>, vector<16x32xbf16>, vector<16x32xbf16>, vector<16x32xbf16>, vector<16x32xbf16>, vector<16x32xbf16>, vector<16x32xbf16>, vector<16x32xbf16> -> vector<16x288xbf16>
    %c5_247 = arith.constant 5 : index
    %c0_248 = arith.constant 0 : index
    %c0_249 = arith.constant 0 : index
    %370 = vector.load %arg6[%c5_247, %c0_248, %c0_249] : memref<9x288x32xbf16, #tpu.memory_space<vmem>>, vector<1x288x32xbf16>
    %371 = vector.shape_cast %370 : vector<1x288x32xbf16> to vector<288x32xbf16>
    %cst_250 = arith.constant dense<0.000000e+00> : vector<16x32xf32>
    %372 = tpu.matmul %369, %371, %cst_250 {dimension_numbers = #tpu.dot_dimension_numbers<[1], [0], [0], [1], [0, 0, 1, 1], [], []>} : vector<16x288xbf16>, vector<288x32xbf16>, vector<16x32xf32> -> vector<16x32xf32>
    %c5_251 = arith.constant 5 : index
    %c0_252 = arith.constant 0 : index
    %c0_253 = arith.constant 0 : index
    %373 = vector.load %arg7[%c5_251, %c0_252, %c0_253] : memref<9x1x32xf32, #tpu.memory_space<vmem>>, vector<1x1x32xf32>
    %374 = vector.shape_cast %373 : vector<1x1x32xf32> to vector<1x32xf32>
    %375 = vector.broadcast %374 : vector<1x32xf32> to vector<16x32xf32>
    %376 = arith.addf %372, %375 : vector<16x32xf32>
    %cst_254 = arith.constant 0.000000e+00 : f32
    %377 = vector.broadcast %cst_254 : f32 to vector<16x32xf32>
    %378 = arith.maximumf %376, %377 : vector<16x32xf32>
    %c10 = arith.constant 10 : index
    %379 = memref.load %arg8[%c10] : memref<18xf32, #tpu.memory_space<smem>>
    %380 = vector.broadcast %379 : f32 to vector<16x32xf32>
    %381 = arith.mulf %380, %307 : vector<16x32xf32>
    %c11 = arith.constant 11 : index
    %382 = memref.load %arg8[%c11] : memref<18xf32, #tpu.memory_space<smem>>
    %383 = vector.broadcast %382 : f32 to vector<16x32xf32>
    %384 = arith.mulf %383, %378 : vector<16x32xf32>
    %385 = arith.addf %381, %384 : vector<16x32xf32>
    %c5_i32_255 = arith.constant 5 : i32
    %386 = tpu.dynamic_rotate %385 by %c5_i32_255 dim 0 : vector<16x32xf32>, i32 -> vector<16x32xf32>
    %c0_256 = arith.constant 0 : index
    %c0_257 = arith.constant 0 : index
    %c0_258 = arith.constant 0 : index
    %387 = vector.load %arg5[%c0_256, %c0_257, %c0_258] : memref<9x16x32xf32, #tpu.memory_space<vmem>>, vector<1x16x32xf32>
    %388 = vector.shape_cast %387 : vector<1x16x32xf32> to vector<16x32xf32>
    %389 = arith.mulf %386, %388 : vector<16x32xf32>
    %390 = arith.truncf %389 : vector<16x32xf32> to vector<16x32xbf16>
    %c4_i32_259 = arith.constant 4 : i32
    %391 = tpu.dynamic_rotate %385 by %c4_i32_259 dim 0 : vector<16x32xf32>, i32 -> vector<16x32xf32>
    %c1_260 = arith.constant 1 : index
    %c0_261 = arith.constant 0 : index
    %c0_262 = arith.constant 0 : index
    %392 = vector.load %arg5[%c1_260, %c0_261, %c0_262] : memref<9x16x32xf32, #tpu.memory_space<vmem>>, vector<1x16x32xf32>
    %393 = vector.shape_cast %392 : vector<1x16x32xf32> to vector<16x32xf32>
    %394 = arith.mulf %391, %393 : vector<16x32xf32>
    %395 = arith.truncf %394 : vector<16x32xf32> to vector<16x32xbf16>
    %c3_i32_263 = arith.constant 3 : i32
    %396 = tpu.dynamic_rotate %385 by %c3_i32_263 dim 0 : vector<16x32xf32>, i32 -> vector<16x32xf32>
    %c2_264 = arith.constant 2 : index
    %c0_265 = arith.constant 0 : index
    %c0_266 = arith.constant 0 : index
    %397 = vector.load %arg5[%c2_264, %c0_265, %c0_266] : memref<9x16x32xf32, #tpu.memory_space<vmem>>, vector<1x16x32xf32>
    %398 = vector.shape_cast %397 : vector<1x16x32xf32> to vector<16x32xf32>
    %399 = arith.mulf %396, %398 : vector<16x32xf32>
    %400 = arith.truncf %399 : vector<16x32xf32> to vector<16x32xbf16>
    %c1_i32_267 = arith.constant 1 : i32
    %401 = tpu.dynamic_rotate %385 by %c1_i32_267 dim 0 : vector<16x32xf32>, i32 -> vector<16x32xf32>
    %c3_268 = arith.constant 3 : index
    %c0_269 = arith.constant 0 : index
    %c0_270 = arith.constant 0 : index
    %402 = vector.load %arg5[%c3_268, %c0_269, %c0_270] : memref<9x16x32xf32, #tpu.memory_space<vmem>>, vector<1x16x32xf32>
    %403 = vector.shape_cast %402 : vector<1x16x32xf32> to vector<16x32xf32>
    %404 = arith.mulf %401, %403 : vector<16x32xf32>
    %405 = arith.truncf %404 : vector<16x32xf32> to vector<16x32xbf16>
    %406 = arith.truncf %385 : vector<16x32xf32> to vector<16x32xbf16>
    %c15_i32_271 = arith.constant 15 : i32
    %407 = tpu.dynamic_rotate %385 by %c15_i32_271 dim 0 : vector<16x32xf32>, i32 -> vector<16x32xf32>
    %c5_272 = arith.constant 5 : index
    %c0_273 = arith.constant 0 : index
    %c0_274 = arith.constant 0 : index
    %408 = vector.load %arg5[%c5_272, %c0_273, %c0_274] : memref<9x16x32xf32, #tpu.memory_space<vmem>>, vector<1x16x32xf32>
    %409 = vector.shape_cast %408 : vector<1x16x32xf32> to vector<16x32xf32>
    %410 = arith.mulf %407, %409 : vector<16x32xf32>
    %411 = arith.truncf %410 : vector<16x32xf32> to vector<16x32xbf16>
    %c13_i32_275 = arith.constant 13 : i32
    %412 = tpu.dynamic_rotate %385 by %c13_i32_275 dim 0 : vector<16x32xf32>, i32 -> vector<16x32xf32>
    %c6_276 = arith.constant 6 : index
    %c0_277 = arith.constant 0 : index
    %c0_278 = arith.constant 0 : index
    %413 = vector.load %arg5[%c6_276, %c0_277, %c0_278] : memref<9x16x32xf32, #tpu.memory_space<vmem>>, vector<1x16x32xf32>
    %414 = vector.shape_cast %413 : vector<1x16x32xf32> to vector<16x32xf32>
    %415 = arith.mulf %412, %414 : vector<16x32xf32>
    %416 = arith.truncf %415 : vector<16x32xf32> to vector<16x32xbf16>
    %c12_i32_279 = arith.constant 12 : i32
    %417 = tpu.dynamic_rotate %385 by %c12_i32_279 dim 0 : vector<16x32xf32>, i32 -> vector<16x32xf32>
    %c7_280 = arith.constant 7 : index
    %c0_281 = arith.constant 0 : index
    %c0_282 = arith.constant 0 : index
    %418 = vector.load %arg5[%c7_280, %c0_281, %c0_282] : memref<9x16x32xf32, #tpu.memory_space<vmem>>, vector<1x16x32xf32>
    %419 = vector.shape_cast %418 : vector<1x16x32xf32> to vector<16x32xf32>
    %420 = arith.mulf %417, %419 : vector<16x32xf32>
    %421 = arith.truncf %420 : vector<16x32xf32> to vector<16x32xbf16>
    %c11_i32_283 = arith.constant 11 : i32
    %422 = tpu.dynamic_rotate %385 by %c11_i32_283 dim 0 : vector<16x32xf32>, i32 -> vector<16x32xf32>
    %c8_284 = arith.constant 8 : index
    %c0_285 = arith.constant 0 : index
    %c0_286 = arith.constant 0 : index
    %423 = vector.load %arg5[%c8_284, %c0_285, %c0_286] : memref<9x16x32xf32, #tpu.memory_space<vmem>>, vector<1x16x32xf32>
    %424 = vector.shape_cast %423 : vector<1x16x32xf32> to vector<16x32xf32>
    %425 = arith.mulf %422, %424 : vector<16x32xf32>
    %426 = arith.truncf %425 : vector<16x32xf32> to vector<16x32xbf16>
    %427 = tpu.concatenate %390, %395, %400, %405, %406, %411, %416, %421, %426 in 1 : vector<16x32xbf16>, vector<16x32xbf16>, vector<16x32xbf16>, vector<16x32xbf16>, vector<16x32xbf16>, vector<16x32xbf16>, vector<16x32xbf16>, vector<16x32xbf16>, vector<16x32xbf16> -> vector<16x288xbf16>
    %c6_287 = arith.constant 6 : index
    %c0_288 = arith.constant 0 : index
    %c0_289 = arith.constant 0 : index
    %428 = vector.load %arg6[%c6_287, %c0_288, %c0_289] : memref<9x288x32xbf16, #tpu.memory_space<vmem>>, vector<1x288x32xbf16>
    %429 = vector.shape_cast %428 : vector<1x288x32xbf16> to vector<288x32xbf16>
    %cst_290 = arith.constant dense<0.000000e+00> : vector<16x32xf32>
    %430 = tpu.matmul %427, %429, %cst_290 {dimension_numbers = #tpu.dot_dimension_numbers<[1], [0], [0], [1], [0, 0, 1, 1], [], []>} : vector<16x288xbf16>, vector<288x32xbf16>, vector<16x32xf32> -> vector<16x32xf32>
    %c6_291 = arith.constant 6 : index
    %c0_292 = arith.constant 0 : index
    %c0_293 = arith.constant 0 : index
    %431 = vector.load %arg7[%c6_291, %c0_292, %c0_293] : memref<9x1x32xf32, #tpu.memory_space<vmem>>, vector<1x1x32xf32>
    %432 = vector.shape_cast %431 : vector<1x1x32xf32> to vector<1x32xf32>
    %433 = vector.broadcast %432 : vector<1x32xf32> to vector<16x32xf32>
    %434 = arith.addf %430, %433 : vector<16x32xf32>
    %cst_294 = arith.constant 0.000000e+00 : f32
    %435 = vector.broadcast %cst_294 : f32 to vector<16x32xf32>
    %436 = arith.maximumf %434, %435 : vector<16x32xf32>
    %c12 = arith.constant 12 : index
    %437 = memref.load %arg8[%c12] : memref<18xf32, #tpu.memory_space<smem>>
    %438 = vector.broadcast %437 : f32 to vector<16x32xf32>
    %439 = arith.mulf %438, %385 : vector<16x32xf32>
    %c13 = arith.constant 13 : index
    %440 = memref.load %arg8[%c13] : memref<18xf32, #tpu.memory_space<smem>>
    %441 = vector.broadcast %440 : f32 to vector<16x32xf32>
    %442 = arith.mulf %441, %436 : vector<16x32xf32>
    %443 = arith.addf %439, %442 : vector<16x32xf32>
    %c5_i32_295 = arith.constant 5 : i32
    %444 = tpu.dynamic_rotate %443 by %c5_i32_295 dim 0 : vector<16x32xf32>, i32 -> vector<16x32xf32>
    %c0_296 = arith.constant 0 : index
    %c0_297 = arith.constant 0 : index
    %c0_298 = arith.constant 0 : index
    %445 = vector.load %arg5[%c0_296, %c0_297, %c0_298] : memref<9x16x32xf32, #tpu.memory_space<vmem>>, vector<1x16x32xf32>
    %446 = vector.shape_cast %445 : vector<1x16x32xf32> to vector<16x32xf32>
    %447 = arith.mulf %444, %446 : vector<16x32xf32>
    %448 = arith.truncf %447 : vector<16x32xf32> to vector<16x32xbf16>
    %c4_i32_299 = arith.constant 4 : i32
    %449 = tpu.dynamic_rotate %443 by %c4_i32_299 dim 0 : vector<16x32xf32>, i32 -> vector<16x32xf32>
    %c1_300 = arith.constant 1 : index
    %c0_301 = arith.constant 0 : index
    %c0_302 = arith.constant 0 : index
    %450 = vector.load %arg5[%c1_300, %c0_301, %c0_302] : memref<9x16x32xf32, #tpu.memory_space<vmem>>, vector<1x16x32xf32>
    %451 = vector.shape_cast %450 : vector<1x16x32xf32> to vector<16x32xf32>
    %452 = arith.mulf %449, %451 : vector<16x32xf32>
    %453 = arith.truncf %452 : vector<16x32xf32> to vector<16x32xbf16>
    %c3_i32_303 = arith.constant 3 : i32
    %454 = tpu.dynamic_rotate %443 by %c3_i32_303 dim 0 : vector<16x32xf32>, i32 -> vector<16x32xf32>
    %c2_304 = arith.constant 2 : index
    %c0_305 = arith.constant 0 : index
    %c0_306 = arith.constant 0 : index
    %455 = vector.load %arg5[%c2_304, %c0_305, %c0_306] : memref<9x16x32xf32, #tpu.memory_space<vmem>>, vector<1x16x32xf32>
    %456 = vector.shape_cast %455 : vector<1x16x32xf32> to vector<16x32xf32>
    %457 = arith.mulf %454, %456 : vector<16x32xf32>
    %458 = arith.truncf %457 : vector<16x32xf32> to vector<16x32xbf16>
    %c1_i32_307 = arith.constant 1 : i32
    %459 = tpu.dynamic_rotate %443 by %c1_i32_307 dim 0 : vector<16x32xf32>, i32 -> vector<16x32xf32>
    %c3_308 = arith.constant 3 : index
    %c0_309 = arith.constant 0 : index
    %c0_310 = arith.constant 0 : index
    %460 = vector.load %arg5[%c3_308, %c0_309, %c0_310] : memref<9x16x32xf32, #tpu.memory_space<vmem>>, vector<1x16x32xf32>
    %461 = vector.shape_cast %460 : vector<1x16x32xf32> to vector<16x32xf32>
    %462 = arith.mulf %459, %461 : vector<16x32xf32>
    %463 = arith.truncf %462 : vector<16x32xf32> to vector<16x32xbf16>
    %464 = arith.truncf %443 : vector<16x32xf32> to vector<16x32xbf16>
    %c15_i32_311 = arith.constant 15 : i32
    %465 = tpu.dynamic_rotate %443 by %c15_i32_311 dim 0 : vector<16x32xf32>, i32 -> vector<16x32xf32>
    %c5_312 = arith.constant 5 : index
    %c0_313 = arith.constant 0 : index
    %c0_314 = arith.constant 0 : index
    %466 = vector.load %arg5[%c5_312, %c0_313, %c0_314] : memref<9x16x32xf32, #tpu.memory_space<vmem>>, vector<1x16x32xf32>
    %467 = vector.shape_cast %466 : vector<1x16x32xf32> to vector<16x32xf32>
    %468 = arith.mulf %465, %467 : vector<16x32xf32>
    %469 = arith.truncf %468 : vector<16x32xf32> to vector<16x32xbf16>
    %c13_i32_315 = arith.constant 13 : i32
    %470 = tpu.dynamic_rotate %443 by %c13_i32_315 dim 0 : vector<16x32xf32>, i32 -> vector<16x32xf32>
    %c6_316 = arith.constant 6 : index
    %c0_317 = arith.constant 0 : index
    %c0_318 = arith.constant 0 : index
    %471 = vector.load %arg5[%c6_316, %c0_317, %c0_318] : memref<9x16x32xf32, #tpu.memory_space<vmem>>, vector<1x16x32xf32>
    %472 = vector.shape_cast %471 : vector<1x16x32xf32> to vector<16x32xf32>
    %473 = arith.mulf %470, %472 : vector<16x32xf32>
    %474 = arith.truncf %473 : vector<16x32xf32> to vector<16x32xbf16>
    %c12_i32_319 = arith.constant 12 : i32
    %475 = tpu.dynamic_rotate %443 by %c12_i32_319 dim 0 : vector<16x32xf32>, i32 -> vector<16x32xf32>
    %c7_320 = arith.constant 7 : index
    %c0_321 = arith.constant 0 : index
    %c0_322 = arith.constant 0 : index
    %476 = vector.load %arg5[%c7_320, %c0_321, %c0_322] : memref<9x16x32xf32, #tpu.memory_space<vmem>>, vector<1x16x32xf32>
    %477 = vector.shape_cast %476 : vector<1x16x32xf32> to vector<16x32xf32>
    %478 = arith.mulf %475, %477 : vector<16x32xf32>
    %479 = arith.truncf %478 : vector<16x32xf32> to vector<16x32xbf16>
    %c11_i32_323 = arith.constant 11 : i32
    %480 = tpu.dynamic_rotate %443 by %c11_i32_323 dim 0 : vector<16x32xf32>, i32 -> vector<16x32xf32>
    %c8_324 = arith.constant 8 : index
    %c0_325 = arith.constant 0 : index
    %c0_326 = arith.constant 0 : index
    %481 = vector.load %arg5[%c8_324, %c0_325, %c0_326] : memref<9x16x32xf32, #tpu.memory_space<vmem>>, vector<1x16x32xf32>
    %482 = vector.shape_cast %481 : vector<1x16x32xf32> to vector<16x32xf32>
    %483 = arith.mulf %480, %482 : vector<16x32xf32>
    %484 = arith.truncf %483 : vector<16x32xf32> to vector<16x32xbf16>
    %485 = tpu.concatenate %448, %453, %458, %463, %464, %469, %474, %479, %484 in 1 : vector<16x32xbf16>, vector<16x32xbf16>, vector<16x32xbf16>, vector<16x32xbf16>, vector<16x32xbf16>, vector<16x32xbf16>, vector<16x32xbf16>, vector<16x32xbf16>, vector<16x32xbf16> -> vector<16x288xbf16>
    %c7_327 = arith.constant 7 : index
    %c0_328 = arith.constant 0 : index
    %c0_329 = arith.constant 0 : index
    %486 = vector.load %arg6[%c7_327, %c0_328, %c0_329] : memref<9x288x32xbf16, #tpu.memory_space<vmem>>, vector<1x288x32xbf16>
    %487 = vector.shape_cast %486 : vector<1x288x32xbf16> to vector<288x32xbf16>
    %cst_330 = arith.constant dense<0.000000e+00> : vector<16x32xf32>
    %488 = tpu.matmul %485, %487, %cst_330 {dimension_numbers = #tpu.dot_dimension_numbers<[1], [0], [0], [1], [0, 0, 1, 1], [], []>} : vector<16x288xbf16>, vector<288x32xbf16>, vector<16x32xf32> -> vector<16x32xf32>
    %c7_331 = arith.constant 7 : index
    %c0_332 = arith.constant 0 : index
    %c0_333 = arith.constant 0 : index
    %489 = vector.load %arg7[%c7_331, %c0_332, %c0_333] : memref<9x1x32xf32, #tpu.memory_space<vmem>>, vector<1x1x32xf32>
    %490 = vector.shape_cast %489 : vector<1x1x32xf32> to vector<1x32xf32>
    %491 = vector.broadcast %490 : vector<1x32xf32> to vector<16x32xf32>
    %492 = arith.addf %488, %491 : vector<16x32xf32>
    %cst_334 = arith.constant 0.000000e+00 : f32
    %493 = vector.broadcast %cst_334 : f32 to vector<16x32xf32>
    %494 = arith.maximumf %492, %493 : vector<16x32xf32>
    %c14 = arith.constant 14 : index
    %495 = memref.load %arg8[%c14] : memref<18xf32, #tpu.memory_space<smem>>
    %496 = vector.broadcast %495 : f32 to vector<16x32xf32>
    %497 = arith.mulf %496, %443 : vector<16x32xf32>
    %c15 = arith.constant 15 : index
    %498 = memref.load %arg8[%c15] : memref<18xf32, #tpu.memory_space<smem>>
    %499 = vector.broadcast %498 : f32 to vector<16x32xf32>
    %500 = arith.mulf %499, %494 : vector<16x32xf32>
    %501 = arith.addf %497, %500 : vector<16x32xf32>
    %c5_i32_335 = arith.constant 5 : i32
    %502 = tpu.dynamic_rotate %501 by %c5_i32_335 dim 0 : vector<16x32xf32>, i32 -> vector<16x32xf32>
    %c0_336 = arith.constant 0 : index
    %c0_337 = arith.constant 0 : index
    %c0_338 = arith.constant 0 : index
    %503 = vector.load %arg5[%c0_336, %c0_337, %c0_338] : memref<9x16x32xf32, #tpu.memory_space<vmem>>, vector<1x16x32xf32>
    %504 = vector.shape_cast %503 : vector<1x16x32xf32> to vector<16x32xf32>
    %505 = arith.mulf %502, %504 : vector<16x32xf32>
    %506 = arith.truncf %505 : vector<16x32xf32> to vector<16x32xbf16>
    %c4_i32_339 = arith.constant 4 : i32
    %507 = tpu.dynamic_rotate %501 by %c4_i32_339 dim 0 : vector<16x32xf32>, i32 -> vector<16x32xf32>
    %c1_340 = arith.constant 1 : index
    %c0_341 = arith.constant 0 : index
    %c0_342 = arith.constant 0 : index
    %508 = vector.load %arg5[%c1_340, %c0_341, %c0_342] : memref<9x16x32xf32, #tpu.memory_space<vmem>>, vector<1x16x32xf32>
    %509 = vector.shape_cast %508 : vector<1x16x32xf32> to vector<16x32xf32>
    %510 = arith.mulf %507, %509 : vector<16x32xf32>
    %511 = arith.truncf %510 : vector<16x32xf32> to vector<16x32xbf16>
    %c3_i32_343 = arith.constant 3 : i32
    %512 = tpu.dynamic_rotate %501 by %c3_i32_343 dim 0 : vector<16x32xf32>, i32 -> vector<16x32xf32>
    %c2_344 = arith.constant 2 : index
    %c0_345 = arith.constant 0 : index
    %c0_346 = arith.constant 0 : index
    %513 = vector.load %arg5[%c2_344, %c0_345, %c0_346] : memref<9x16x32xf32, #tpu.memory_space<vmem>>, vector<1x16x32xf32>
    %514 = vector.shape_cast %513 : vector<1x16x32xf32> to vector<16x32xf32>
    %515 = arith.mulf %512, %514 : vector<16x32xf32>
    %516 = arith.truncf %515 : vector<16x32xf32> to vector<16x32xbf16>
    %c1_i32_347 = arith.constant 1 : i32
    %517 = tpu.dynamic_rotate %501 by %c1_i32_347 dim 0 : vector<16x32xf32>, i32 -> vector<16x32xf32>
    %c3_348 = arith.constant 3 : index
    %c0_349 = arith.constant 0 : index
    %c0_350 = arith.constant 0 : index
    %518 = vector.load %arg5[%c3_348, %c0_349, %c0_350] : memref<9x16x32xf32, #tpu.memory_space<vmem>>, vector<1x16x32xf32>
    %519 = vector.shape_cast %518 : vector<1x16x32xf32> to vector<16x32xf32>
    %520 = arith.mulf %517, %519 : vector<16x32xf32>
    %521 = arith.truncf %520 : vector<16x32xf32> to vector<16x32xbf16>
    %522 = arith.truncf %501 : vector<16x32xf32> to vector<16x32xbf16>
    %c15_i32_351 = arith.constant 15 : i32
    %523 = tpu.dynamic_rotate %501 by %c15_i32_351 dim 0 : vector<16x32xf32>, i32 -> vector<16x32xf32>
    %c5_352 = arith.constant 5 : index
    %c0_353 = arith.constant 0 : index
    %c0_354 = arith.constant 0 : index
    %524 = vector.load %arg5[%c5_352, %c0_353, %c0_354] : memref<9x16x32xf32, #tpu.memory_space<vmem>>, vector<1x16x32xf32>
    %525 = vector.shape_cast %524 : vector<1x16x32xf32> to vector<16x32xf32>
    %526 = arith.mulf %523, %525 : vector<16x32xf32>
    %527 = arith.truncf %526 : vector<16x32xf32> to vector<16x32xbf16>
    %c13_i32_355 = arith.constant 13 : i32
    %528 = tpu.dynamic_rotate %501 by %c13_i32_355 dim 0 : vector<16x32xf32>, i32 -> vector<16x32xf32>
    %c6_356 = arith.constant 6 : index
    %c0_357 = arith.constant 0 : index
    %c0_358 = arith.constant 0 : index
    %529 = vector.load %arg5[%c6_356, %c0_357, %c0_358] : memref<9x16x32xf32, #tpu.memory_space<vmem>>, vector<1x16x32xf32>
    %530 = vector.shape_cast %529 : vector<1x16x32xf32> to vector<16x32xf32>
    %531 = arith.mulf %528, %530 : vector<16x32xf32>
    %532 = arith.truncf %531 : vector<16x32xf32> to vector<16x32xbf16>
    %c12_i32_359 = arith.constant 12 : i32
    %533 = tpu.dynamic_rotate %501 by %c12_i32_359 dim 0 : vector<16x32xf32>, i32 -> vector<16x32xf32>
    %c7_360 = arith.constant 7 : index
    %c0_361 = arith.constant 0 : index
    %c0_362 = arith.constant 0 : index
    %534 = vector.load %arg5[%c7_360, %c0_361, %c0_362] : memref<9x16x32xf32, #tpu.memory_space<vmem>>, vector<1x16x32xf32>
    %535 = vector.shape_cast %534 : vector<1x16x32xf32> to vector<16x32xf32>
    %536 = arith.mulf %533, %535 : vector<16x32xf32>
    %537 = arith.truncf %536 : vector<16x32xf32> to vector<16x32xbf16>
    %c11_i32_363 = arith.constant 11 : i32
    %538 = tpu.dynamic_rotate %501 by %c11_i32_363 dim 0 : vector<16x32xf32>, i32 -> vector<16x32xf32>
    %c8_364 = arith.constant 8 : index
    %c0_365 = arith.constant 0 : index
    %c0_366 = arith.constant 0 : index
    %539 = vector.load %arg5[%c8_364, %c0_365, %c0_366] : memref<9x16x32xf32, #tpu.memory_space<vmem>>, vector<1x16x32xf32>
    %540 = vector.shape_cast %539 : vector<1x16x32xf32> to vector<16x32xf32>
    %541 = arith.mulf %538, %540 : vector<16x32xf32>
    %542 = arith.truncf %541 : vector<16x32xf32> to vector<16x32xbf16>
    %543 = tpu.concatenate %506, %511, %516, %521, %522, %527, %532, %537, %542 in 1 : vector<16x32xbf16>, vector<16x32xbf16>, vector<16x32xbf16>, vector<16x32xbf16>, vector<16x32xbf16>, vector<16x32xbf16>, vector<16x32xbf16>, vector<16x32xbf16>, vector<16x32xbf16> -> vector<16x288xbf16>
    %c8_367 = arith.constant 8 : index
    %c0_368 = arith.constant 0 : index
    %c0_369 = arith.constant 0 : index
    %544 = vector.load %arg6[%c8_367, %c0_368, %c0_369] : memref<9x288x32xbf16, #tpu.memory_space<vmem>>, vector<1x288x32xbf16>
    %545 = vector.shape_cast %544 : vector<1x288x32xbf16> to vector<288x32xbf16>
    %cst_370 = arith.constant dense<0.000000e+00> : vector<16x32xf32>
    %546 = tpu.matmul %543, %545, %cst_370 {dimension_numbers = #tpu.dot_dimension_numbers<[1], [0], [0], [1], [0, 0, 1, 1], [], []>} : vector<16x288xbf16>, vector<288x32xbf16>, vector<16x32xf32> -> vector<16x32xf32>
    %c8_371 = arith.constant 8 : index
    %c0_372 = arith.constant 0 : index
    %c0_373 = arith.constant 0 : index
    %547 = vector.load %arg7[%c8_371, %c0_372, %c0_373] : memref<9x1x32xf32, #tpu.memory_space<vmem>>, vector<1x1x32xf32>
    %548 = vector.shape_cast %547 : vector<1x1x32xf32> to vector<1x32xf32>
    %549 = vector.broadcast %548 : vector<1x32xf32> to vector<16x32xf32>
    %550 = arith.addf %546, %549 : vector<16x32xf32>
    %cst_374 = arith.constant 0.000000e+00 : f32
    %551 = vector.broadcast %cst_374 : f32 to vector<16x32xf32>
    %552 = arith.maximumf %550, %551 : vector<16x32xf32>
    %c16 = arith.constant 16 : index
    %553 = memref.load %arg8[%c16] : memref<18xf32, #tpu.memory_space<smem>>
    %554 = vector.broadcast %553 : f32 to vector<16x32xf32>
    %555 = arith.mulf %554, %501 : vector<16x32xf32>
    %c17 = arith.constant 17 : index
    %556 = memref.load %arg8[%c17] : memref<18xf32, #tpu.memory_space<smem>>
    %557 = vector.broadcast %556 : f32 to vector<16x32xf32>
    %558 = arith.mulf %557, %552 : vector<16x32xf32>
    %559 = arith.addf %555, %558 : vector<16x32xf32>
    %560 = arith.truncf %559 : vector<16x32xf32> to vector<16x32xbf16>
    %c1_375 = arith.constant 1 : index
    %c0_376 = arith.constant 0 : index
    %c0_377 = arith.constant 0 : index
    %561 = vector.load %arg9[%c1_375, %c0_376, %c0_377] : memref<2x32x128xbf16, #tpu.memory_space<vmem>>, vector<1x32x128xbf16>
    %562 = vector.shape_cast %561 : vector<1x32x128xbf16> to vector<32x128xbf16>
    %cst_378 = arith.constant dense<0.000000e+00> : vector<16x128xf32>
    %563 = tpu.matmul %560, %562, %cst_378 {dimension_numbers = #tpu.dot_dimension_numbers<[1], [0], [0], [1], [0, 0, 1, 1], [], []>} : vector<16x32xbf16>, vector<32x128xbf16>, vector<16x128xf32> -> vector<16x128xf32>
    %c1_379 = arith.constant 1 : index
    %c0_380 = arith.constant 0 : index
    %c0_381 = arith.constant 0 : index
    %564 = vector.load %arg10[%c1_379, %c0_380, %c0_381] : memref<2x1x128xf32, #tpu.memory_space<vmem>>, vector<1x1x128xf32>
    %565 = vector.shape_cast %564 : vector<1x1x128xf32> to vector<1x128xf32>
    %566 = vector.broadcast %565 : vector<1x128xf32> to vector<16x128xf32>
    %567 = arith.addf %563, %566 : vector<16x128xf32>
    %cst_382 = arith.constant 5.000000e-01 : f32
    %568 = vector.broadcast %cst_382 : f32 to vector<16x128xf32>
    %569 = arith.mulf %568, %567 : vector<16x128xf32>
    %570 = arith.select %17, %569, %567 : vector<16x128xi1>, vector<16x128xf32>
    %571 = math.tanh %570 : vector<16x128xf32>
    %cst_383 = arith.constant 5.000000e-01 : f32
    %572 = vector.broadcast %cst_383 : f32 to vector<16x128xf32>
    %573 = arith.mulf %572, %571 : vector<16x128xf32>
    %cst_384 = arith.constant 5.000000e-01 : f32
    %574 = vector.broadcast %cst_384 : f32 to vector<16x128xf32>
    %575 = arith.addf %573, %574 : vector<16x128xf32>
    %576 = arith.select %17, %575, %571 : vector<16x128xi1>, vector<16x128xf32>
    %c1_385 = arith.constant 1 : index
    %c0_386 = arith.constant 0 : index
    %c0_387 = arith.constant 0 : index
    %577 = vector.load %arg11[%c1_385, %c0_386, %c0_387] : memref<2x16x128xf32, #tpu.memory_space<vmem>>, vector<1x16x128xf32>
    %578 = vector.shape_cast %577 : vector<1x16x128xf32> to vector<16x128xf32>
    %579 = vector.shape_cast %576 : vector<16x128xf32> to vector<1x16x128xf32>
    tpu.vector_store %arg11[%c1_385, %c0_386, %c0_387], %579 {strides = array<i32>} : memref<2x16x128xf32, #tpu.memory_space<vmem>>, vector<1x16x128xf32>,
    return
  }
  func.func @transform_0(%arg0: i32) -> (i32, i32) {
    %c0_i32 = arith.constant 0 : i32
    %c0_i32_0 = arith.constant 0 : i32
    return %arg0, %c0_i32 : i32, i32
  }
  func.func @transform_1(%arg0: i32) -> (i32, i32) {
    %c0_i32 = arith.constant 0 : i32
    %c0_i32_0 = arith.constant 0 : i32
    %c0_i32_1 = arith.constant 0 : i32
    return %c0_i32, %c0_i32_0 : i32, i32
  }
  func.func @transform_2(%arg0: i32) -> (i32, i32) {
    %c0_i32 = arith.constant 0 : i32
    %c0_i32_0 = arith.constant 0 : i32
    %c0_i32_1 = arith.constant 0 : i32
    return %c0_i32, %c0_i32_0 : i32, i32
  }
  func.func @transform_3(%arg0: i32) -> (i32, i32) {
    %c0_i32 = arith.constant 0 : i32
    %c0_i32_0 = arith.constant 0 : i32
    %c0_i32_1 = arith.constant 0 : i32
    return %c0_i32, %c0_i32_0 : i32, i32
  }
  func.func @transform_4(%arg0: i32) -> (i32, i32, i32) {
    %c0_i32 = arith.constant 0 : i32
    %c0_i32_0 = arith.constant 0 : i32
    %c0_i32_1 = arith.constant 0 : i32
    %c0_i32_2 = arith.constant 0 : i32
    return %c0_i32, %c0_i32_0, %c0_i32_1 : i32, i32, i32
  }
  func.func @transform_5(%arg0: i32) -> (i32, i32, i32) {
    %c0_i32 = arith.constant 0 : i32
    %c0_i32_0 = arith.constant 0 : i32
    %c0_i32_1 = arith.constant 0 : i32
    %c0_i32_2 = arith.constant 0 : i32
    return %c0_i32, %c0_i32_0, %c0_i32_1 : i32, i32, i32
  }
  func.func @transform_6(%arg0: i32) -> (i32, i32, i32) {
    %c0_i32 = arith.constant 0 : i32
    %c0_i32_0 = arith.constant 0 : i32
    %c0_i32_1 = arith.constant 0 : i32
    %c0_i32_2 = arith.constant 0 : i32
    return %c0_i32, %c0_i32_0, %c0_i32_1 : i32, i32, i32
  }
  func.func @transform_7(%arg0: i32) -> i32 {
    %c0_i32 = arith.constant 0 : i32
    %c0_i32_0 = arith.constant 0 : i32
    return %c0_i32 : i32
  }
  func.func @transform_8(%arg0: i32) -> (i32, i32, i32) {
    %c0_i32 = arith.constant 0 : i32
    %c0_i32_0 = arith.constant 0 : i32
    %c0_i32_1 = arith.constant 0 : i32
    %c0_i32_2 = arith.constant 0 : i32
    return %c0_i32, %c0_i32_0, %c0_i32_1 : i32, i32, i32
  }
  func.func @transform_9(%arg0: i32) -> (i32, i32, i32) {
    %c0_i32 = arith.constant 0 : i32
    %c0_i32_0 = arith.constant 0 : i32
    %c0_i32_1 = arith.constant 0 : i32
    %c0_i32_2 = arith.constant 0 : i32
    return %c0_i32, %c0_i32_0, %c0_i32_1 : i32, i32, i32
  }
  func.func @transform_10(%arg0: i32) -> (i32, i32, i32) {
    %c0_i32 = arith.constant 0 : i32
    %c0_i32_0 = arith.constant 0 : i32
    %c0_i32_1 = arith.constant 0 : i32
    return %c0_i32, %arg0, %c0_i32_0 : i32, i32, i32
  }
}

</mosaic_0001>

<llo_original>
// kernel: forward.1
$region0: #{forward.1}
  #allocation0 [shape = 'u32[]', space=smem, size = 0x4, offset = 0x4, fixed_abs, tag = 'smem constant byte address 0x4 - core index']
  #allocation1 [shape = 'u32[144,128]{1,0:T(1,128)}', space=vmem, size = 0x12000, scoped, tag = 'internal scratch']
  %s0 = inlined_call_operand.vmem [shape: bf16[128,256], index: 0, kind: input, shape index: {}]
  %s1 = inlined_call_operand.vmem [shape: bf16[256,32], index: 1, kind: input, shape index: {}]
  %s2 = inlined_call_operand.vmem [shape: f32[1,32], index: 2, kind: input, shape index: {}]
  %s3 = inlined_call_operand.vmem [shape: bf16[16,64], index: 3, kind: input, shape index: {}]
  %s4 = inlined_call_operand.vmem [shape: f32[9,16,32], index: 4, kind: input, shape index: {}]
  %s5 = inlined_call_operand.vmem [shape: bf16[9,288,32], index: 5, kind: input, shape index: {}]
  %s6 = inlined_call_operand.vmem [shape: f32[9,1,32], index: 6, kind: input, shape index: {}]
  %s7 = inlined_call_operand.vmem [shape: f32[18], index: 7, kind: input, shape index: {}]
  %s8 = inlined_call_operand.vmem [shape: bf16[2,32,128], index: 8, kind: input, shape index: {}]
  %s9 = inlined_call_operand.vmem [shape: f32[2,1,128], index: 9, kind: input, shape index: {}]
  %s10 = inlined_call_operand.vmem [shape: f32[2,32,128], index: 10, kind: output, shape index: {}]
  %s11 = sld [smem:[#allocation0]]
  $region111: #{forward.1} parent=0
    _
  %s13 = ssub.s32 1, %s11
  %s14 = scalar_select 0, %s13, %s11
  $region1: #{forward.1} parent=0
    #allocation2 [shape = 'u8[512]{0}', space=smem, size = 0x200, scoped, tag = 'input window, operand 7, single buffered']
    #allocation3 [shape = 's32[2]{0}', space=sflag, size = 0x8, scoped, tag = 'scoped memory for forward.1']
    #allocation4 [shape = 'u8[32768]{0}', space=vmem, size = 0x8000, scoped, tag = 'output window, operand 0']
    %15 = vsyncpa [#allocation3], 0
    loop: start=0, step=1, limit=4
    $region2: #{forward.1} parent=1 // loop_pre_header
      _
    $region3: #{forward.1} parent=1 // loop_header
      %s17 = sphi 0, %s21
      %p18 = scmp.ge.s32.totalorder %s17, 4
      %s27 = sphi 0, %s29
      %s30 = sphi 0, %s27
      %s31 = sphi 0, %s30
      %s47 = sphi 0, %s31
      %s51 = sphi 0, %s51
      %s53 = sphi 0, %s51
      %s54 = sphi 0, %s53
      %s68 = sphi 0, %s54
      %s72 = sphi 0, %s72
      %s74 = sphi 0, %s72
      %s75 = sphi 0, %s74
      %s89 = sphi 0, %s75
      %s93 = sphi 0, %s93
      %s95 = sphi 0, %s93
      %s96 = sphi 0, %s95
      %s110 = sphi 0, %s96
      %s114 = sphi 0, %s114
      %s116 = sphi 0, %s114
      %s117 = sphi 0, %s116
      %s131 = sphi 0, %s117
      %s135 = sphi 0, %s135
      %s137 = sphi 0, %s135
      %s138 = sphi 0, %s137
      %s152 = sphi 0, %s138
      %s156 = sphi 0, %s156
      %s158 = sphi 0, %s156
      %s159 = sphi 0, %s158
      %s173 = sphi 0, %s159
      %s177 = sphi 0, %s177
      %s179 = sphi 0, %s177
      %s180 = sphi 0, %s179
      %s194 = sphi 0, %s180
      %s198 = sphi 0, %s198
      %s200 = sphi 0, %s198
      %s201 = sphi 0, %s200
      %s215 = sphi 0, %s201
      %s219 = sphi 0, %s219
      %s221 = sphi 0, %s219
      %s222 = sphi 0, %s221
      %s236 = sphi 0, %s222
      %s242 = sphi 0, %s244
      %s245 = sphi 0, %s242
      %s246 = sphi 0, %s245
      %s262 = sphi 0, %s246
    $region4: #{forward.1} parent=1 // loop_header_branch
      %20 = sbr.rel (%p18) target = $region8
    $region5: #{forward.1} parent=1 // loop_body
      %s22 = ssub.s32 %s17, 1
      %s23 = ssub.s32 %s17, 2
      %s24 = sadd.s32 %s17, 1
      %s25 = ssub.s32 %s17, %s24
      %p26 = scmp.eq.s32.totalorder %s25, 0
      %s28 = sadd.s32 %s27, 1
      %s29 = scalar_select %p26, %s27, %s28
      %p32 = pneg %p26
      %p33 = scmp.eq.s32.totalorder %s17, 1
      %p34 = por %p32, %p33
      %p35 = scmp.ne.s32.totalorder %s27, %s30
      %p36 = scmp.eq.s32.totalorder %s17, 0
      %p37 = por %p35, %p36
      %p38 = scmp.ne.s32.totalorder %s27, %s30
      %p39 = scmp.eq.s32.totalorder %s22, 1
      %p40 = por %p38, %p39
      %p41 = scmp.ne.s32.totalorder %s30, %s31
      %p42 = scmp.eq.s32.totalorder %s22, 0
      %p43 = por %p41, %p42
      %p44 = scmp.ne.s32.totalorder %s30, %s31
      %p45 = scmp.eq.s32.totalorder %s23, 1
      %p46 = por %p44, %p45
      %p48 = scmp.ne.s32.totalorder %s31, %s47
      %p49 = scmp.eq.s32.totalorder %s23, 0
      %p50 = por %p48, %p49
      %s52 = sadd.s32 %s51, 1
      %p55 = scmp.eq.s32.totalorder %s17, 1
      %p56 = scmp.ne.s32.totalorder %s51, %s53
      %p57 = scmp.eq.s32.totalorder %s17, 0
      %p58 = por %p56, %p57
      %p59 = scmp.ne.s32.totalorder %s51, %s53
      %p60 = scmp.eq.s32.totalorder %s22, 1
      %p61 = por %p59, %p60
      %p62 = scmp.ne.s32.totalorder %s53, %s54
      %p63 = scmp.eq.s32.totalorder %s22, 0
      %p64 = por %p62, %p63
      %p65 = scmp.ne.s32.totalorder %s53, %s54
      %p66 = scmp.eq.s32.totalorder %s23, 1
      %p67 = por %p65, %p66
      %p69 = scmp.ne.s32.totalorder %s54, %s68
      %p70 = scmp.eq.s32.totalorder %s23, 0
      %p71 = por %p69, %p70
      %s73 = sadd.s32 %s72, 1
      %p76 = scmp.eq.s32.totalorder %s17, 1
      %p77 = scmp.ne.s32.totalorder %s72, %s74
      %p78 = scmp.eq.s32.totalorder %s17, 0
      %p79 = por %p77, %p78
      %p80 = scmp.ne.s32.totalorder %s72, %s74
      %p81 = scmp.eq.s32.totalorder %s22, 1
      %p82 = por %p80, %p81
      %p83 = scmp.ne.s32.totalorder %s74, %s75
      %p84 = scmp.eq.s32.totalorder %s22, 0
      %p85 = por %p83, %p84
      %p86 = scmp.ne.s32.totalorder %s74, %s75
      %p87 = scmp.eq.s32.totalorder %s23, 1
      %p88 = por %p86, %p87
      %p90 = scmp.ne.s32.totalorder %s75, %s89
      %p91 = scmp.eq.s32.totalorder %s23, 0
      %p92 = por %p90, %p91
      %s94 = sadd.s32 %s93, 1
      %p97 = scmp.eq.s32.totalorder %s17, 1
      %p98 = scmp.ne.s32.totalorder %s93, %s95
      %p99 = scmp.eq.s32.totalorder %s17, 0
      %p100 = por %p98, %p99
      %p101 = scmp.ne.s32.totalorder %s93, %s95
      %p102 = scmp.eq.s32.totalorder %s22, 1
      %p103 = por %p101, %p102
      %p104 = scmp.ne.s32.totalorder %s95, %s96
      %p105 = scmp.eq.s32.totalorder %s22, 0
      %p106 = por %p104, %p105
      %p107 = scmp.ne.s32.totalorder %s95, %s96
      %p108 = scmp.eq.s32.totalorder %s23, 1
      %p109 = por %p107, %p108
      %p111 = scmp.ne.s32.totalorder %s96, %s110
      %p112 = scmp.eq.s32.totalorder %s23, 0
      %p113 = por %p111, %p112
      %s115 = sadd.s32 %s114, 1
      %p118 = scmp.eq.s32.totalorder %s17, 1
      %p119 = scmp.ne.s32.totalorder %s114, %s116
      %p120 = scmp.eq.s32.totalorder %s17, 0
      %p121 = por %p119, %p120
      %p122 = scmp.ne.s32.totalorder %s114, %s116
      %p123 = scmp.eq.s32.totalorder %s22, 1
      %p124 = por %p122, %p123
      %p125 = scmp.ne.s32.totalorder %s116, %s117
      %p126 = scmp.eq.s32.totalorder %s22, 0
      %p127 = por %p125, %p126
      %p128 = scmp.ne.s32.totalorder %s116, %s117
      %p129 = scmp.eq.s32.totalorder %s23, 1
      %p130 = por %p128, %p129
      %p132 = scmp.ne.s32.totalorder %s117, %s131
      %p133 = scmp.eq.s32.totalorder %s23, 0
      %p134 = por %p132, %p133
      %s136 = sadd.s32 %s135, 1
      %p139 = scmp.eq.s32.totalorder %s17, 1
      %p140 = scmp.ne.s32.totalorder %s135, %s137
      %p141 = scmp.eq.s32.totalorder %s17, 0
      %p142 = por %p140, %p141
      %p143 = scmp.ne.s32.totalorder %s135, %s137
      %p144 = scmp.eq.s32.totalorder %s22, 1
      %p145 = por %p143, %p144
      %p146 = scmp.ne.s32.totalorder %s137, %s138
      %p147 = scmp.eq.s32.totalorder %s22, 0
      %p148 = por %p146, %p147
      %p149 = scmp.ne.s32.totalorder %s137, %s138
      %p150 = scmp.eq.s32.totalorder %s23, 1
      %p151 = por %p149, %p150
      %p153 = scmp.ne.s32.totalorder %s138, %s152
      %p154 = scmp.eq.s32.totalorder %s23, 0
      %p155 = por %p153, %p154
      %s157 = sadd.s32 %s156, 1
      %p160 = scmp.eq.s32.totalorder %s17, 1
      %p161 = scmp.ne.s32.totalorder %s156, %s158
      %p162 = scmp.eq.s32.totalorder %s17, 0
      %p163 = por %p161, %p162
      %p164 = scmp.ne.s32.totalorder %s156, %s158
      %p165 = scmp.eq.s32.totalorder %s22, 1
      %p166 = por %p164, %p165
      %p167 = scmp.ne.s32.totalorder %s158, %s159
      %p168 = scmp.eq.s32.totalorder %s22, 0
      %p169 = por %p167, %p168
      %p170 = scmp.ne.s32.totalorder %s158, %s159
      %p171 = scmp.eq.s32.totalorder %s23, 1
      %p172 = por %p170, %p171
      %p174 = scmp.ne.s32.totalorder %s159, %s173
      %p175 = scmp.eq.s32.totalorder %s23, 0
      %p176 = por %p174, %p175
      %s178 = sadd.s32 %s177, 1
      %p181 = scmp.eq.s32.totalorder %s17, 1
      %p182 = scmp.ne.s32.totalorder %s177, %s179
      %p183 = scmp.eq.s32.totalorder %s17, 0
      %p184 = por %p182, %p183
      %p185 = scmp.ne.s32.totalorder %s177, %s179
      %p186 = scmp.eq.s32.totalorder %s22, 1
      %p187 = por %p185, %p186
      %p188 = scmp.ne.s32.totalorder %s179, %s180
      %p189 = scmp.eq.s32.totalorder %s22, 0
      %p190 = por %p188, %p189
      %p191 = scmp.ne.s32.totalorder %s179, %s180
      %p192 = scmp.eq.s32.totalorder %s23, 1
      %p193 = por %p191, %p192
      %p195 = scmp.ne.s32.totalorder %s180, %s194
      %p196 = scmp.eq.s32.totalorder %s23, 0
      %p197 = por %p195, %p196
      %s199 = sadd.s32 %s198, 1
      %p202 = scmp.eq.s32.totalorder %s17, 1
      %p203 = scmp.ne.s32.totalorder %s198, %s200
      %p204 = scmp.eq.s32.totalorder %s17, 0
      %p205 = por %p203, %p204
      %p206 = scmp.ne.s32.totalorder %s198, %s200
      %p207 = scmp.eq.s32.totalorder %s22, 1
      %p208 = por %p206, %p207
      %p209 = scmp.ne.s32.totalorder %s200, %s201
      %p210 = scmp.eq.s32.totalorder %s22, 0
      %p211 = por %p209, %p210
      %p212 = scmp.ne.s32.totalorder %s200, %s201
      %p213 = scmp.eq.s32.totalorder %s23, 1
      %p214 = por %p212, %p213
      %p216 = scmp.ne.s32.totalorder %s201, %s215
      %p217 = scmp.eq.s32.totalorder %s23, 0
      %p218 = por %p216, %p217
      %s220 = sadd.s32 %s219, 1
      %p223 = scmp.eq.s32.totalorder %s17, 1
      %p224 = scmp.ne.s32.totalorder %s219, %s221
      %p225 = scmp.eq.s32.totalorder %s17, 0
      %p226 = por %p224, %p225
      %p227 = scmp.ne.s32.totalorder %s219, %s221
      %p228 = scmp.eq.s32.totalorder %s22, 1
      %p229 = por %p227, %p228
      %p230 = scmp.ne.s32.totalorder %s221, %s222
      %p231 = scmp.eq.s32.totalorder %s22, 0
      %p232 = por %p230, %p231
      %p233 = scmp.ne.s32.totalorder %s221, %s222
      %p234 = scmp.eq.s32.totalorder %s23, 1
      %p235 = por %p233, %p234
      %p237 = scmp.ne.s32.totalorder %s222, %s236
      %p238 = scmp.eq.s32.totalorder %s23, 0
      %p239 = por %p237, %p238
      %s240 = ssub.s32 %s17, %s24
      %p241 = scmp.eq.s32.totalorder %s240, 0
      %s243 = sadd.s32 %s242, 1
      %s244 = scalar_select %p241, %s242, %s243
      %p247 = pneg %p241
      %p248 = scmp.eq.s32.totalorder %s17, 1
      %p249 = por %p247, %p248
      %p250 = scmp.ne.s32.totalorder %s242, %s245
      %p251 = scmp.eq.s32.totalorder %s17, 0
      %p252 = por %p250, %p251
      %p253 = scmp.ne.s32.totalorder %s242, %s245
      %p254 = scmp.eq.s32.totalorder %s22, 1
      %p255 = por %p253, %p254
      %p256 = scmp.ne.s32.totalorder %s245, %s246
      %p257 = scmp.eq.s32.totalorder %s22, 0
      %p258 = por %p256, %p257
      %p259 = scmp.ne.s32.totalorder %s245, %s246
      %p260 = scmp.eq.s32.totalorder %s23, 1
      %p261 = por %p259, %p260
      %p263 = scmp.ne.s32.totalorder %s246, %s262
      %p264 = scmp.eq.s32.totalorder %s23, 0
      %p265 = por %p263, %p264
      %p266 = scmp.le.s32.totalorder 1, %s17
      %p267 = scmp.lt.s32.totalorder %s17, 3
      %p268 = pnand %p266, %p267
      %p269 = pneg %p268
      // Predicated region
      $region9: #{forward.1} parent=5 // pred_check
        _
      $region10: #{forward.1} parent=5 // pred_check_branch
        %271 = sbr.rel (%p268) target = $region12
      $region11: #{forward.1} parent=5 // pred_region
        %s272 = ssub.s32 %s17, 1
        // Predicated region
        $region13: #{forward.1} parent=11 // pred_check
          %p273 = pneg %p64
        $region14: #{forward.1} parent=11 // pred_check_branch
          %275 = sbr.rel (%p273) target = $region16
        $region15: #{forward.1} parent=11 // pred_region
          _
        $region16: #{forward.1} parent=11 // pred_fallthru
          _
        // Predicated region
        $region17: #{forward.1} parent=11 // pred_check
          %p276 = pneg %p85
        $region18: #{forward.1} parent=11 // pred_check_branch
          %278 = sbr.rel (%p276) target = $region20
        $region19: #{forward.1} parent=11 // pred_region
          _
        $region20: #{forward.1} parent=11 // pred_fallthru
          _
        // Predicated region
        $region21: #{forward.1} parent=11 // pred_check
          %p279 = pneg %p106
        $region22: #{forward.1} parent=11 // pred_check_branch
          %281 = sbr.rel (%p279) target = $region24
        $region23: #{forward.1} parent=11 // pred_region
          _
        $region24: #{forward.1} parent=11 // pred_fallthru
          _
        // Predicated region
        $region25: #{forward.1} parent=11 // pred_check
          %p282 = pneg %p127
        $region26: #{forward.1} parent=11 // pred_check_branch
          %284 = sbr.rel (%p282) target = $region28
        $region27: #{forward.1} parent=11 // pred_region
          _
        $region28: #{forward.1} parent=11 // pred_fallthru
          _
        // Predicated region
        $region29: #{forward.1} parent=11 // pred_check
          %p285 = pneg %p148
        $region30: #{forward.1} parent=11 // pred_check_branch
          %287 = sbr.rel (%p285) target = $region32
        $region31: #{forward.1} parent=11 // pred_region
          _
        $region32: #{forward.1} parent=11 // pred_fallthru
          _
        // Predicated region
        $region33: #{forward.1} parent=11 // pred_check
          %p288 = pneg %p169
        $region34: #{forward.1} parent=11 // pred_check_branch
          %290 = sbr.rel (%p288) target = $region36
        $region35: #{forward.1} parent=11 // pred_region
          _
        $region36: #{forward.1} parent=11 // pred_fallthru
          _
        // Predicated region
        $region37: #{forward.1} parent=11 // pred_check
          %p291 = pneg %p190
        $region38: #{forward.1} parent=11 // pred_check_branch
          %293 = sbr.rel (%p291) target = $region40
        $region39: #{forward.1} parent=11 // pred_region
          %s295 = ssub.s32 16, 16
          %296 = vsyncadd [#allocation3], %s295
          %s298 = sshll.u32 %s7, 4
          %s299 = int_to_ptr.vmem [resolvable:$true] %s298
          %301 = dma.vmem_to_smem %s299, 16, [#allocation2], [#allocation3]
        $region40: #{forward.1} parent=11 // pred_fallthru
          _
        // Predicated region
        $region41: #{forward.1} parent=11 // pred_check
          %p302 = pneg %p211
        $region42: #{forward.1} parent=11 // pred_check_branch
          %304 = sbr.rel (%p302) target = $region44
        $region43: #{forward.1} parent=11 // pred_region
          _
        $region44: #{forward.1} parent=11 // pred_fallthru
          _
        // Predicated region
        $region45: #{forward.1} parent=11 // pred_check
          %p305 = pneg %p232
        $region46: #{forward.1} parent=11 // pred_check_branch
          %307 = sbr.rel (%p305) target = $region48
        $region47: #{forward.1} parent=11 // pred_region
          _
        $region48: #{forward.1} parent=11 // pred_fallthru
          _
      $region12: #{forward.1} parent=5 // pred_fallthru
        _
      %p308 = scmp.lt.s32.totalorder %s17, 2
      // Predicated region
      $region49: #{forward.1} parent=5 // pred_check
        %p309 = pneg %p308
      $region50: #{forward.1} parent=5 // pred_check_branch
        %311 = sbr.rel (%p309) target = $region52
      $region51: #{forward.1} parent=5 // pred_region
        // Predicated region
        $region53: #{forward.1} parent=51 // pred_check
          %p312 = pneg %p37
        $region54: #{forward.1} parent=51 // pred_check_branch
          %314 = sbr.rel (%p312) target = $region56
        $region55: #{forward.1} parent=51 // pred_region
          %s315 = smul.u32 8, %s17
          %p316 = scmp.lt.s32.totalorder %s315, 15
          %s317 = scalar_select %p316, %s315, 15
          %s318 = smul.addr %s317, 2
          %s319 = smul.addr %s318, 4
          %s320 = scalar_lea.vmem %s0, %s319
          %s321 = smul.u32 8, %s17
        $region56: #{forward.1} parent=51 // pred_fallthru
          _
      $region52: #{forward.1} parent=5 // pred_fallthru
        _
      %p322 = scmp.le.s32.totalorder 1, %s17
      %p323 = scmp.lt.s32.totalorder %s17, 3
      %p324 = pnand %p322, %p323
      %p325 = pneg %p324
      // Predicated region
      $region57: #{forward.1} parent=5 // pred_check
        _
      $region58: #{forward.1} parent=5 // pred_check_branch
        %327 = sbr.rel (%p324) target = $region60
      $region59: #{forward.1} parent=5 // pred_region
        %s328 = ssub.s32 %s17, 1
        // Predicated region
        $region61: #{forward.1} parent=59 // pred_check
          %p329 = pneg %p190
        $region62: #{forward.1} parent=59 // pred_check_branch
          %331 = sbr.rel (%p329) target = $region64
        $region63: #{forward.1} parent=59 // pred_region
          %332 = dma.done [#allocation3], 16
        $region64: #{forward.1} parent=59 // pred_fallthru
          _
        %333 = sfence
        %s334 = smul.u32 8, %s22
        %p335 = scmp.lt.s32.totalorder %s334, 15
        %s336 = scalar_select %p335, %s334, 15
        %s337 = smul.addr %s336, 2
        %s338 = smul.addr %s337, 4
        %s339 = scalar_lea.vmem %s0, %s338
        %p340 = pneg %p43
        %p341 = pneg %p40
        %p342 = pneg %p64
        %p343 = pneg %p61
        %p344 = pneg %p85
        %p345 = pneg %p82
        %p346 = pneg %p106
        %p347 = pneg %p103
        %p348 = pneg %p127
        %p349 = pneg %p124
        %p350 = pneg %p148
        %p351 = pneg %p145
        %p352 = pneg %p169
        %p353 = pneg %p166
        %p354 = pneg %p190
        %p355 = pneg %p187
        %p356 = pneg %p211
        %p357 = pneg %p208
        %p358 = pneg %p232
        %p359 = pneg %p229
        %p360 = pneg %p258
        %p361 = pneg %p255
        %s362 = sand.u32 %s245, 1
        %s363 = sand.u32 %s245, 1
        %s364 = smul.addr %s363, 32
        %s365 = scalar_lea.vmem [#allocation4], %s364
        %s366 = smul.u32 8, %s22
        %p367 = scmp.lt.s32.totalorder %s366, 15
        %s368 = scalar_select %p367, %s366, 15
        %s369 = smul.addr %s368, 2
        %s370 = smul.addr %s369, 4
        %s371 = scalar_lea.vmem %s0, %s370
        %s372 = smul.u32 8, %s22
        %s373 = smul.u32 2, %s22
        %v375 = vld [vmem:[%s371] sm:$0xff]
        %v376 = vld [vmem:[%s371 + $0x8] sm:$0xff]
        %v377 = vld [vmem:[%s371 + $0x10] sm:$0xff]
        %v378 = vld [vmem:[%s371 + $0x18] sm:$0xff]
        %v379 = vld [vmem:[%s371 + $0x20] sm:$0xff]
        %v380 = vld [vmem:[%s371 + $0x28] sm:$0xff]
        %v381 = vld [vmem:[%s371 + $0x30] sm:$0xff]
        %v382 = vld [vmem:[%s371 + $0x38] sm:$0xff]
        %v383 = vld [vmem:[%s1] sm:$0xf]
        %v384 = vld [vmem:[%s1 + $0x4] sm:$0xf]
        %v385 = vld [vmem:[%s1 + $0x8] sm:$0xf]
        %v386 = vld [vmem:[%s1 + $0xc] sm:$0xf]
        %v387 = vld [vmem:[%s1 + $0x10] sm:$0xf]
        %v388 = vld [vmem:[%s1 + $0x14] sm:$0xf]
        %v389 = vld [vmem:[%s1 + $0x18] sm:$0xf]
        %v390 = vld [vmem:[%s1 + $0x1c] sm:$0xf]
        %v391 = vld [vmem:[%s1 + $0x20] sm:$0xf]
        %v392 = vld [vmem:[%s1 + $0x24] sm:$0xf]
        %v393 = vld [vmem:[%s1 + $0x28] sm:$0xf]
        %v394 = vld [vmem:[%s1 + $0x2c] sm:$0xf]
        %v395 = vld [vmem:[%s1 + $0x30] sm:$0xf]
        %v396 = vld [vmem:[%s1 + $0x34] sm:$0xf]
        %v397 = vld [vmem:[%s1 + $0x38] sm:$0xf]
        %v398 = vld [vmem:[%s1 + $0x3c] sm:$0xf]
        %v399 = vld [vmem:[%s1 + $0x40] sm:$0xf]
        %v400 = vld [vmem:[%s1 + $0x44] sm:$0xf]
        %v401 = vld [vmem:[%s1 + $0x48] sm:$0xf]
        %v402 = vld [vmem:[%s1 + $0x4c] sm:$0xf]
        %v403 = vld [vmem:[%s1 + $0x50] sm:$0xf]
        %v404 = vld [vmem:[%s1 + $0x54] sm:$0xf]
        %v405 = vld [vmem:[%s1 + $0x58] sm:$0xf]
        %v406 = vld [vmem:[%s1 + $0x5c] sm:$0xf]
        %v407 = vld [vmem:[%s1 + $0x60] sm:$0xf]
        %v408 = vld [vmem:[%s1 + $0x64] sm:$0xf]
        %v409 = vld [vmem:[%s1 + $0x68] sm:$0xf]
        %v410 = vld [vmem:[%s1 + $0x6c] sm:$0xf]
        %v411 = vld [vmem:[%s1 + $0x70] sm:$0xf]
        %v412 = vld [vmem:[%s1 + $0x74] sm:$0xf]
        %v413 = vld [vmem:[%s1 + $0x78] sm:$0xf]
        %v414 = vld [vmem:[%s1 + $0x7c] sm:$0xf]
        %v415 = vld [vmem:[%s2] sm:$0x1]
        %v417 = vlaneseq
        %v418 = vshrl.u32 %v417, 7
        %v419 = vsub.s32 0, %v418
        %v420 = vrot.slane %v415, %v419
        %v430 = vunpack.c.l.b16 %v375
        %v431 = vunpack.c.h.b16 %v375
        %v432 = vunpack.c.l.b16 %v376
        %v433 = vunpack.c.h.b16 %v376
        %v434 = vunpack.c.l.b16 %v377
        %v435 = vunpack.c.h.b16 %v377
        %v436 = vunpack.c.l.b16 %v378
        %v437 = vunpack.c.h.b16 %v378
        %v438 = vunpack.c.l.b16 %v379
        %v439 = vunpack.c.h.b16 %v379
        %v440 = vunpack.c.l.b16 %v380
        %v441 = vunpack.c.h.b16 %v380
        %v442 = vunpack.c.l.b16 %v381
        %v443 = vunpack.c.h.b16 %v381
        %v444 = vunpack.c.l.b16 %v382
        %v445 = vunpack.c.h.b16 %v382
        %v446 = vpack.c.b16 %v432, %v430
        %v447 = vpack.c.b16 %v433, %v431
        %v448 = vpack.c.b16 %v436, %v434
        %v449 = vpack.c.b16 %v437, %v435
        %v450 = vpack.c.b16 %v440, %v438
        %v451 = vpack.c.b16 %v441, %v439
        %v452 = vpack.c.b16 %v444, %v442
        %v453 = vpack.c.b16 %v445, %v443
        %v494 = vunpack.c.l.b16 %v383
        %v495 = vunpack.c.l.b16 %v384
        %v496 = vunpack.c.l.b16 %v385
        %v497 = vunpack.c.l.b16 %v386
        %v498 = vunpack.c.l.b16 %v387
        %v499 = vunpack.c.l.b16 %v388
        %v500 = vunpack.c.l.b16 %v389
        %v501 = vunpack.c.l.b16 %v390
        %v502 = vunpack.c.l.b16 %v391
        %v503 = vunpack.c.l.b16 %v392
        %v504 = vunpack.c.l.b16 %v393
        %v505 = vunpack.c.l.b16 %v394
        %v506 = vunpack.c.l.b16 %v395
        %v507 = vunpack.c.l.b16 %v396
        %v508 = vunpack.c.l.b16 %v397
        %v509 = vunpack.c.l.b16 %v398
        %v510 = vunpack.c.l.b16 %v399
        %v511 = vunpack.c.l.b16 %v400
        %v512 = vunpack.c.l.b16 %v401
        %v513 = vunpack.c.l.b16 %v402
        %v514 = vunpack.c.l.b16 %v403
        %v515 = vunpack.c.l.b16 %v404
        %v516 = vunpack.c.l.b16 %v405
        %v517 = vunpack.c.l.b16 %v406
        %v518 = vunpack.c.l.b16 %v407
        %v519 = vunpack.c.l.b16 %v408
        %v520 = vunpack.c.l.b16 %v409
        %v521 = vunpack.c.l.b16 %v410
        %v522 = vunpack.c.l.b16 %v411
        %v523 = vunpack.c.l.b16 %v412
        %v524 = vunpack.c.l.b16 %v413
        %v525 = vunpack.c.l.b16 %v414
        %v526 = vpack.c.b16 %v495, %v494
        %v527 = vpack.c.b16 %v497, %v496
        %v528 = vpack.c.b16 %v499, %v498
        %v529 = vpack.c.b16 %v501, %v500
        %v530 = vpack.c.b16 %v503, %v502
        %v531 = vpack.c.b16 %v505, %v504
        %v532 = vpack.c.b16 %v507, %v506
        %v533 = vpack.c.b16 %v509, %v508
        %v534 = vpack.c.b16 %v511, %v510
        %v535 = vpack.c.b16 %v513, %v512
        %v536 = vpack.c.b16 %v515, %v514
        %v537 = vpack.c.b16 %v517, %v516
        %v538 = vpack.c.b16 %v519, %v518
        %v539 = vpack.c.b16 %v521, %v520
        %v540 = vpack.c.b16 %v523, %v522
        %v541 = vpack.c.b16 %v525, %v524
        %558 = vmatprep.subr.bf16.mxu0 0
        %559 = vmatpush1.bf16.msra.mxu0 %v526
        %560 = vmatprep.subr.bf16.mxu0 0
        %561 = vmatpush1.bf16.msra.mxu0 %v527
        %562 = vmatprep.subr.bf16.mxu0 0
        %563 = vmatpush1.bf16.msra.mxu0 %v528
        %564 = vmatprep.subr.bf16.mxu0 0
        %565 = vmatpush1.bf16.msra.mxu0 %v529
        %566 = vmatprep.subr.bf16.mxu0 0
        %567 = vmatpush1.bf16.msra.mxu0 %v530
        %568 = vmatprep.subr.bf16.mxu0 0
        %569 = vmatpush1.bf16.msra.mxu0 %v531
        %570 = vmatprep.subr.bf16.mxu0 0
        %571 = vmatpush1.bf16.msra.mxu0 %v532
        %572 = vmatprep.subr.bf16.mxu0 0
        %573 = vmatpush1.bf16.msra.mxu0 %v533
        %574 = vmatprep.subr.bf16.mxu0 0
        %575 = vmatpush1.bf16.msra.mxu0 %v534
        %576 = vmatprep.subr.bf16.mxu0 0
        %577 = vmatpush1.bf16.msra.mxu0 %v535
        %578 = vmatprep.subr.bf16.mxu0 0
        %579 = vmatpush1.bf16.msra.mxu0 %v536
        %580 = vmatprep.subr.bf16.mxu0 0
        %581 = vmatpush1.bf16.msra.mxu0 %v537
        %582 = vmatprep.subr.bf16.mxu0 0
        %583 = vmatpush1.bf16.msra.mxu0 %v538
        %584 = vmatprep.subr.bf16.mxu0 0
        %585 = vmatpush1.bf16.msra.mxu0 %v539
        %586 = vmatprep.subr.bf16.mxu0 0
        %587 = vmatpush1.bf16.msra.mxu0 %v540
        %588 = vmatprep.subr.bf16.mxu0 0
        %589 = vmatpush1.bf16.msra.mxu0 %v541
        %590 = vmatprep.mubr.bf16.mxu0 %v447
        %591 = vmatmul.mubr.bf16.gmra.mrb[0].mxu0 %v446
        %v592 = vpop.f32.mrb[0].mxu0
        %v593 = vadd.f32 %v420, %v592
        %v594 = vpop.f32.mrb[0].mxu0
        %v595 = vpop.f32.mrb[0].mxu0
        %v596 = vadd.f32 %v420, %v595
        %v597 = vpop.f32.mrb[0].mxu0
        %598 = vmatprep.mubr.bf16.mxu0 %v449
        %599 = vmatmul.mubr.bf16.gmra.mrb[0].mxu0 %v448
        %v600 = vpop.f32.mrb[0].mxu0
        %v601 = vadd.f32 %v420, %v600
        %v602 = vpop.f32.mrb[0].mxu0
        %v603 = vpop.f32.mrb[0].mxu0
        %v604 = vadd.f32 %v420, %v603
        %v605 = vpop.f32.mrb[0].mxu0
        %606 = vmatprep.mubr.bf16.mxu0 %v451
        %607 = vmatmul.mubr.bf16.gmra.mrb[0].mxu0 %v450
        %v608 = vpop.f32.mrb[0].mxu0
        %v609 = vadd.f32 %v420, %v608
        %v610 = vpop.f32.mrb[0].mxu0
        %v611 = vpop.f32.mrb[0].mxu0
        %v612 = vadd.f32 %v420, %v611
        %v613 = vpop.f32.mrb[0].mxu0
        %614 = vmatprep.mubr.bf16.mxu0 %v453
        %615 = vmatmul.mubr.bf16.gmra.mrb[0].mxu0 %v452
        %v616 = vpop.f32.mrb[0].mxu0
        %v617 = vadd.f32 %v420, %v616
        %v618 = vpop.f32.mrb[0].mxu0
        %v619 = vpop.f32.mrb[0].mxu0
        %v620 = vadd.f32 %v420, %v619
        %v621 = vpop.f32.mrb[0].mxu0
        %622 = vdwg.mxu0
        %v623 = vmax.f32 %v593, 0.0
        %v624 = vmax.f32 %v596, 0.0
        %v625 = vmax.f32 %v601, 0.0
        %v626 = vmax.f32 %v604, 0.0
        %v627 = vmax.f32 %v609, 0.0
        %v628 = vmax.f32 %v612, 0.0
        %v629 = vmax.f32 %v617, 0.0
        %v630 = vmax.f32 %v620, 0.0
        %v631 = vrot.slane %v623, 1
        %v632 = vrot.slane %v624, 1
        %v633 = vrot.slane %v625, 1
        %v634 = vrot.slane %v626, 1
        %v635 = vrot.slane %v627, 1
        %v636 = vrot.slane %v628, 1
        %v637 = vrot.slane %v629, 1
        %v638 = vrot.slane %v630, 1
        %v639 = vlaneseq
        %v640 = vshrl.u32 %v639, 7
        %vm641 = vcmp.lt.s32.totalorder %v640, 7
        %v642 = vsel %vm641, %v637, %v638
        %v643 = vsel %vm641, %v636, %v637
        %v644 = vsel %vm641, %v635, %v636
        %v645 = vsel %vm641, %v634, %v635
        %v646 = vsel %vm641, %v633, %v634
        %v647 = vsel %vm641, %v632, %v633
        %v648 = vsel %vm641, %v631, %v632
        %v649 = vsel %vm641, %v638, %v631
        %v650 = vmax.f32 %v623, %v648
        %v651 = vmax.f32 %v624, %v647
        %v652 = vmax.f32 %v625, %v646
        %v653 = vmax.f32 %v626, %v645
        %v654 = vmax.f32 %v627, %v644
        %v655 = vmax.f32 %v628, %v643
        %v656 = vmax.f32 %v629, %v642
        %v657 = vmax.f32 %v630, %v649
        %v658 = vmax.f32 %v650, %v651
        %v659 = vmax.f32 %v651, %v652
        %v660 = vmax.f32 %v652, %v653
        %v661 = vmax.f32 %v653, %v654
        %v662 = vmax.f32 %v654, %v655
        %v663 = vmax.f32 %v655, %v656
        %v664 = vmax.f32 %v656, %v657
        %v665 = vmax.f32 %v657, %v650
        %v666 = vld [vmem:[%s3] sm:$0xf]
        %v667 = vld [vmem:[%s3 + $0x4] sm:$0xf]
        %v668 = vpack.c.bf16 %v659, %v658
        %v669 = vpack.c.bf16 %v661, %v660
        %v670 = vpack.c.bf16 %v663, %v662
        %v671 = vpack.c.bf16 %v665, %v664
        %v674 = vunpack.c.l.b16 %v666
        %v675 = vunpack.c.l.b16 %v667
        %v676 = vpack.c.b16 %v675, %v674
        %vm677 = vcmask 523264
        %v679 = vsel %vm677, %v676, 0
        %681 = vmatprep.subr.bf16.mxu0 0
        %682 = vmatpush1.bf16.msra.mxu0 %v668
        %683 = vmatprep.subr.bf16.mxu0 0
        %684 = vmatpush1.bf16.msra.mxu0 %v669
        %685 = vmatprep.subr.bf16.mxu0 0
        %686 = vmatpush1.bf16.msra.mxu0 %v670
        %687 = vmatprep.subr.bf16.mxu0 0
        %688 = vmatpush1.bf16.msra.mxu0 %v671
        %689 = vmatprep.subr.bf16.mxu0 0
        %690 = vmatpush1.bf16.msra.mxu0 0
        %691 = vmatprep.subr.bf16.mxu0 0
        %692 = vmatpush1.bf16.msra.mxu0 0
        %693 = vmatprep.subr.bf16.mxu0 0
        %694 = vmatpush1.bf16.msra.mxu0 0
        %695 = vmatprep.subr.bf16.mxu0 0
        %696 = vmatpush1.bf16.msra.mxu0 0
        %697 = vmatprep.subr.bf16.mxu0 0
        %698 = vmatpush1.bf16.msra.mxu0 0
        %699 = vmatprep.subr.bf16.mxu0 0
        %700 = vmatpush1.bf16.msra.mxu0 0
        %701 = vmatprep.subr.bf16.mxu0 0
        %702 = vmatpush1.bf16.msra.mxu0 0
        %703 = vmatprep.subr.bf16.mxu0 0
        %704 = vmatpush1.bf16.msra.mxu0 0
        %705 = vmatprep.subr.bf16.mxu0 0
        %706 = vmatpush1.bf16.msra.mxu0 0
        %707 = vmatprep.subr.bf16.mxu0 0
        %708 = vmatpush1.bf16.msra.mxu0 0
        %709 = vmatprep.subr.bf16.mxu0 0
        %710 = vmatpush1.bf16.msra.mxu0 0
        %711 = vmatprep.subr.bf16.mxu0 0
        %712 = vmatpush1.bf16.msra.mxu0 0
        %713 = vmatprep.mubr.bf16.mxu0 0
        %714 = vmatmul.mubr.bf16.gmra.mrb[0].mxu0 %v679
        %v715 = vpop.f32.mrb[0].mxu0
        %v716 = vadd.f32 0.0, %v715
        %v717 = vpop.f32.mrb[0].mxu0
        %v718 = vpop.f32.mrb[0].mxu0
        %v719 = vadd.f32 0.0, %v718
        %v720 = vpop.f32.mrb[0].mxu0
        %721 = vdwg.mxu0
        %v722 = vlaneseq
        %v723 = vand.u32 %v722, 127
        %vm724 = vcmp.eq.s32.totalorder %v723, 0
        %v725 = vrot.slane %v716, 3
        %v726 = vrot.slane %v719, 3
        %vm727 = vcmp.lt.s32.totalorder %v640, 5
        %v728 = vsel %vm727, %v725, %v726
        %v729 = vsel %vm727, %v726, %v725
        %v730 = vld [vmem:[%s4] sm:$0xff]
        %v731 = vld [vmem:[%s4 + $0x8] sm:$0xff]
        %v732 = vmul.f32 %v729, %v730
        %v733 = vmul.f32 %v728, %v731
        %v734 = vpack.c.bf16 %v733, %v732
        %v735 = vrot.slane %v716, 4
        %v736 = vrot.slane %v719, 4
        %vm737 = vcmp.lt.s32.totalorder %v640, 4
        %v738 = vsel %vm737, %v735, %v736
        %v739 = vsel %vm737, %v736, %v735
        %s740 = scalar_lea.vmem %s4, 16
        %v741 = vld [vmem:[%s740] sm:$0xff]
        %v742 = vld [vmem:[%s740 + $0x8] sm:$0xff]
        %v743 = vmul.f32 %v739, %v741
        %v744 = vmul.f32 %v738, %v742
        %v745 = vpack.c.bf16 %v744, %v743
        %v746 = vrot.slane %v716, 5
        %v747 = vrot.slane %v719, 5
        %vm748 = vcmp.lt.s32.totalorder %v640, 3
        %v749 = vsel %vm748, %v746, %v747
        %v750 = vsel %vm748, %v747, %v746
        %s751 = scalar_lea.vmem %s4, 32
        %v752 = vld [vmem:[%s751] sm:$0xff]
        %v753 = vld [vmem:[%s751 + $0x8] sm:$0xff]
        %v754 = vmul.f32 %v750, %v752
        %v755 = vmul.f32 %v749, %v753
        %v756 = vpack.c.bf16 %v755, %v754
        %v757 = vrot.slane %v716, 7
        %v758 = vrot.slane %v719, 7
        %vm759 = vcmp.lt.s32.totalorder %v640, 1
        %v760 = vsel %vm759, %v757, %v758
        %v761 = vsel %vm759, %v758, %v757
        %s762 = scalar_lea.vmem %s4, 48
        %v763 = vld [vmem:[%s762] sm:$0xff]
        %v764 = vld [vmem:[%s762 + $0x8] sm:$0xff]
        %v765 = vmul.f32 %v761, %v763
        %v766 = vmul.f32 %v760, %v764
        %v767 = vpack.c.bf16 %v766, %v765
        %v768 = vpack.c.bf16 %v719, %v716
        %v769 = vrot.slane %v716, 1
        %v770 = vrot.slane %v719, 1
        %v771 = vsel %vm641, %v769, %v770
        %v772 = vsel %vm641, %v770, %v769
        %s773 = scalar_lea.vmem %s4, 80
        %v774 = vld [vmem:[%s773] sm:$0xff]
        %v775 = vld [vmem:[%s773 + $0x8] sm:$0xff]
        %v776 = vmul.f32 %v771, %v774
        %v777 = vmul.f32 %v772, %v775
        %v778 = vpack.c.bf16 %v777, %v776
        %s779 = scalar_lea.vmem %s4, 96
        %v780 = vld [vmem:[%s779] sm:$0xff]
        %v781 = vld [vmem:[%s779 + $0x8] sm:$0xff]
        %v782 = vmul.f32 %v728, %v780
        %v783 = vmul.f32 %v729, %v781
        %v784 = vpack.c.bf16 %v783, %v782
        %s785 = scalar_lea.vmem %s4, 112
        %v786 = vld [vmem:[%s785] sm:$0xff]
        %v787 = vld [vmem:[%s785 + $0x8] sm:$0xff]
        %v788 = vmul.f32 %v738, %v786
        %v789 = vmul.f32 %v739, %v787
        %v790 = vpack.c.bf16 %v789, %v788
        %s791 = scalar_lea.vmem %s4, 128
        %v792 = vld [vmem:[%s791] sm:$0xff]
        %v793 = vld [vmem:[%s791 + $0x8] sm:$0xff]
        %v794 = vmul.f32 %v749, %v792
        %v795 = vmul.f32 %v750, %v793
        %v796 = vpack.c.bf16 %v795, %v794
        %798 = vrot.lane.b32.xlu0 %v745, 32
        %v799 = vpop.permute.xlu0 %798
        %801 = vrot.lane.b32.xlu0 %v756, 64
        %v802 = vpop.permute.xlu0 %801
        %804 = vrot.lane.b32.xlu0 %v767, 96
        %v805 = vpop.permute.xlu0 %804
        %807 = vrot.lane.b32.xlu0 %v778, 32
        %v808 = vpop.permute.xlu0 %807
        %810 = vrot.lane.b32.xlu0 %v784, 64
        %v811 = vpop.permute.xlu0 %810
        %813 = vrot.lane.b32.xlu0 %v790, 96
        %v814 = vpop.permute.xlu0 %813
        %vm815 = vcmask 261120
        %v818 = vsel %vm815, %v734, %v799
        %v820 = vsel %vm677, %v818, %v802
        %vm821 = vcmask 785408
        %v823 = vsel %vm821, %v820, %v805
        %v827 = vsel %vm815, %v768, %v808
        %v829 = vsel %vm677, %v827, %v811
        %v831 = vsel %vm821, %v829, %v814
        %v833 = vld [vmem:[%s5] sm:$0xf]
        %v834 = vld [vmem:[%s5 + $0x4] sm:$0xf]
        %v835 = vld [vmem:[%s5 + $0x8] sm:$0xf]
        %v836 = vld [vmem:[%s5 + $0xc] sm:$0xf]
        %v837 = vld [vmem:[%s5 + $0x10] sm:$0xf]
        %v838 = vld [vmem:[%s5 + $0x14] sm:$0xf]
        %v839 = vld [vmem:[%s5 + $0x18] sm:$0xf]
        %v840 = vld [vmem:[%s5 + $0x1c] sm:$0xf]
        %v841 = vld [vmem:[%s5 + $0x20] sm:$0xf]
        %v842 = vld [vmem:[%s5 + $0x24] sm:$0xf]
        %v843 = vld [vmem:[%s5 + $0x28] sm:$0xf]
        %v844 = vld [vmem:[%s5 + $0x2c] sm:$0xf]
        %v845 = vld [vmem:[%s5 + $0x30] sm:$0xf]
        %v846 = vld [vmem:[%s5 + $0x34] sm:$0xf]
        %v847 = vld [vmem:[%s5 + $0x38] sm:$0xf]
        %v848 = vld [vmem:[%s5 + $0x3c] sm:$0xf]
        %v849 = vld [vmem:[%s5 + $0x40] sm:$0xf]
        %v850 = vld [vmem:[%s5 + $0x44] sm:$0xf]
        %v851 = vld [vmem:[%s5 + $0x48] sm:$0xf]
        %v852 = vld [vmem:[%s5 + $0x4c] sm:$0xf]
        %v853 = vld [vmem:[%s5 + $0x50] sm:$0xf]
        %v854 = vld [vmem:[%s5 + $0x54] sm:$0xf]
        %v855 = vld [vmem:[%s5 + $0x58] sm:$0xf]
        %v856 = vld [vmem:[%s5 + $0x5c] sm:$0xf]
        %v857 = vld [vmem:[%s5 + $0x60] sm:$0xf]
        %v858 = vld [vmem:[%s5 + $0x64] sm:$0xf]
        %v859 = vld [vmem:[%s5 + $0x68] sm:$0xf]
        %v860 = vld [vmem:[%s5 + $0x6c] sm:$0xf]
        %v861 = vld [vmem:[%s5 + $0x70] sm:$0xf]
        %v862 = vld [vmem:[%s5 + $0x74] sm:$0xf]
        %v863 = vld [vmem:[%s5 + $0x78] sm:$0xf]
        %v864 = vld [vmem:[%s5 + $0x7c] sm:$0xf]
        %v865 = vld [vmem:[%s5 + $0x80] sm:$0xf]
        %v866 = vld [vmem:[%s5 + $0x84] sm:$0xf]
        %v867 = vld [vmem:[%s5 + $0x88] sm:$0xf]
        %v868 = vld [vmem:[%s5 + $0x8c] sm:$0xf]
        %v869 = vld [vmem:[%s6] sm:$0x1]
        %v871 = vlaneseq
        %v872 = vshrl.u32 %v871, 7
        %v873 = vsub.s32 0, %v872
        %v874 = vrot.slane %v869, %v873
        %v912 = vunpack.c.l.b16 %v833
        %v913 = vunpack.c.l.b16 %v834
        %v914 = vunpack.c.l.b16 %v835
        %v915 = vunpack.c.l.b16 %v836
        %v916 = vunpack.c.l.b16 %v837
        %v917 = vunpack.c.l.b16 %v838
        %v918 = vunpack.c.l.b16 %v839
        %v919 = vunpack.c.l.b16 %v840
        %v920 = vunpack.c.l.b16 %v841
        %v921 = vunpack.c.l.b16 %v842
        %v922 = vunpack.c.l.b16 %v843
        %v923 = vunpack.c.l.b16 %v844
        %v924 = vunpack.c.l.b16 %v845
        %v925 = vunpack.c.l.b16 %v846
        %v926 = vunpack.c.l.b16 %v847
        %v927 = vunpack.c.l.b16 %v848
        %v928 = vunpack.c.l.b16 %v849
        %v929 = vunpack.c.l.b16 %v850
        %v930 = vunpack.c.l.b16 %v851
        %v931 = vunpack.c.l.b16 %v852
        %v932 = vunpack.c.l.b16 %v853
        %v933 = vunpack.c.l.b16 %v854
        %v934 = vunpack.c.l.b16 %v855
        %v935 = vunpack.c.l.b16 %v856
        %v936 = vunpack.c.l.b16 %v857
        %v937 = vunpack.c.l.b16 %v858
        %v938 = vunpack.c.l.b16 %v859
        %v939 = vunpack.c.l.b16 %v860
        %v940 = vunpack.c.l.b16 %v861
        %v941 = vunpack.c.l.b16 %v862
        %v942 = vunpack.c.l.b16 %v863
        %v943 = vunpack.c.l.b16 %v864
        %v944 = vunpack.c.l.b16 %v865
        %v945 = vunpack.c.l.b16 %v866
        %v946 = vunpack.c.l.b16 %v867
        %v947 = vunpack.c.l.b16 %v868
        %v948 = vpack.c.b16 %v913, %v912
        %v949 = vpack.c.b16 %v915, %v914
        %v950 = vpack.c.b16 %v917, %v916
        %v951 = vpack.c.b16 %v919, %v918
        %v952 = vpack.c.b16 %v921, %v920
        %v953 = vpack.c.b16 %v923, %v922
        %v954 = vpack.c.b16 %v925, %v924
        %v955 = vpack.c.b16 %v927, %v926
        %v956 = vpack.c.b16 %v929, %v928
        %v957 = vpack.c.b16 %v931, %v930
        %v958 = vpack.c.b16 %v933, %v932
        %v959 = vpack.c.b16 %v935, %v934
        %v960 = vpack.c.b16 %v937, %v936
        %v961 = vpack.c.b16 %v939, %v938
        %v962 = vpack.c.b16 %v941, %v940
        %v963 = vpack.c.b16 %v943, %v942
        %v964 = vpack.c.b16 %v945, %v944
        %v965 = vpack.c.b16 %v947, %v946
        %v985 = vsel %vm815, %v796, 0
        %987 = vmatprep.subr.bf16.mxu0 0
        %988 = vmatpush1.bf16.msra.mxu0 %v948
        %989 = vmatprep.subr.bf16.mxu0 0
        %990 = vmatpush1.bf16.msra.mxu0 %v949
        %991 = vmatprep.subr.bf16.mxu0 0
        %992 = vmatpush1.bf16.msra.mxu0 %v950
        %993 = vmatprep.subr.bf16.mxu0 0
        %994 = vmatpush1.bf16.msra.mxu0 %v951
        %995 = vmatprep.subr.bf16.mxu0 0
        %996 = vmatpush1.bf16.msra.mxu0 %v952
        %997 = vmatprep.subr.bf16.mxu0 0
        %998 = vmatpush1.bf16.msra.mxu0 %v953
        %999 = vmatprep.subr.bf16.mxu0 0
        %1000 = vmatpush1.bf16.msra.mxu0 %v954
        %1001 = vmatprep.subr.bf16.mxu0 0
        %1002 = vmatpush1.bf16.msra.mxu0 %v955
        %1003 = vmatprep.subr.bf16.mxu0 0
        %1004 = vmatpush1.bf16.msra.mxu0 %v956
        %1005 = vmatprep.subr.bf16.mxu0 0
        %1006 = vmatpush1.bf16.msra.mxu0 %v957
        %1007 = vmatprep.subr.bf16.mxu0 0
        %1008 = vmatpush1.bf16.msra.mxu0 %v958
        %1009 = vmatprep.subr.bf16.mxu0 0
        %1010 = vmatpush1.bf16.msra.mxu0 %v959
        %1011 = vmatprep.subr.bf16.mxu0 0
        %1012 = vmatpush1.bf16.msra.mxu0 %v960
        %1013 = vmatprep.subr.bf16.mxu0 0
        %1014 = vmatpush1.bf16.msra.mxu0 %v961
        %1015 = vmatprep.subr.bf16.mxu0 0
        %1016 = vmatpush1.bf16.msra.mxu0 %v962
        %1017 = vmatprep.subr.bf16.mxu0 0
        %1018 = vmatpush1.bf16.msra.mxu0 %v963
        %1019 = vmatprep.mubr.bf16.mxu0 %v831
        %1020 = vmatmul.mubr.bf16.gmra.mrb[0].mxu0 %v823
        %v1021 = vpop.f32.mrb[0].mxu0
        %v1022 = vadd.f32 %v874, %v1021
        %v1023 = vpop.f32.mrb[0].mxu0
        %v1024 = vpop.f32.mrb[0].mxu0
        %v1025 = vadd.f32 %v874, %v1024
        %v1026 = vpop.f32.mrb[0].mxu0
        %1027 = vdwg.mxu0
        %1028 = vmatprep.subr.bf16.mxu0 0
        %1029 = vmatpush1.bf16.msra.mxu0 %v964
        %1030 = vmatprep.subr.bf16.mxu0 0
        %1031 = vmatpush1.bf16.msra.mxu0 %v965
        %1032 = vmatprep.subr.bf16.mxu0 0
        %1033 = vmatpush1.bf16.msra.mxu0 0
        %1034 = vmatprep.subr.bf16.mxu0 0
        %1035 = vmatpush1.bf16.msra.mxu0 0
        %1036 = vmatprep.subr.bf16.mxu0 0
        %1037 = vmatpush1.bf16.msra.mxu0 0
        %1038 = vmatprep.subr.bf16.mxu0 0
        %1039 = vmatpush1.bf16.msra.mxu0 0
        %1040 = vmatprep.subr.bf16.mxu0 0
        %1041 = vmatpush1.bf16.msra.mxu0 0
        %1042 = vmatprep.subr.bf16.mxu0 0
        %1043 = vmatpush1.bf16.msra.mxu0 0
        %1044 = vmatprep.subr.bf16.mxu0 0
        %1045 = vmatpush1.bf16.msra.mxu0 0
        %1046 = vmatprep.subr.bf16.mxu0 0
        %1047 = vmatpush1.bf16.msra.mxu0 0
        %1048 = vmatprep.subr.bf16.mxu0 0
        %1049 = vmatpush1.bf16.msra.mxu0 0
        %1050 = vmatprep.subr.bf16.mxu0 0
        %1051 = vmatpush1.bf16.msra.mxu0 0
        %1052 = vmatprep.subr.bf16.mxu0 0
        %1053 = vmatpush1.bf16.msra.mxu0 0
        %1054 = vmatprep.subr.bf16.mxu0 0
        %1055 = vmatpush1.bf16.msra.mxu0 0
        %1056 = vmatprep.subr.bf16.mxu0 0
        %1057 = vmatpush1.bf16.msra.mxu0 0
        %1058 = vmatprep.subr.bf16.mxu0 0
        %1059 = vmatpush1.bf16.msra.mxu0 0
        %1060 = vmatprep.mubr.bf16.mxu0 0
        %1061 = vmatmul.mubr.bf16.gmra.mrb[0].mxu0 %v985
        %v1062 = vpop.f32.mrb[0].mxu0
        %v1063 = vadd.f32 %v1022, %v1062
        %v1064 = vpop.f32.mrb[0].mxu0
        %v1065 = vpop.f32.mrb[0].mxu0
        %v1066 = vadd.f32 %v1025, %v1065
        %v1067 = vpop.f32.mrb[0].mxu0
        %1068 = vdwg.mxu0
        %v1069 = vmax.f32 %v1063, 0.0
        %v1070 = vmax.f32 %v1066, 0.0
        %s1071 = sld [smem:[#allocation2]]
        %v1072 = vstv %s1071
        %v1073 = vmul.f32 %v1072, %v716
        %v1074 = vmul.f32 %v1072, %v719
        %s1075 = sld [smem:[#allocation2 + $0x1]]
        %v1076 = vstv %s1075
        %v1077 = vmul.f32 %v1076, %v1069
        %v1078 = vmul.f32 %v1076, %v1070
        %v1079 = vadd.f32 %v1073, %v1077
        %v1080 = vadd.f32 %v1074, %v1078
        %v1081 = vrot.slane %v1079, 3
        %v1082 = vrot.slane %v1080, 3
        %v1083 = vsel %vm727, %v1081, %v1082
        %v1084 = vsel %vm727, %v1082, %v1081
        %v1085 = vmul.f32 %v1084, %v730
        %v1086 = vmul.f32 %v1083, %v731
        %v1087 = vpack.c.bf16 %v1086, %v1085
        %v1088 = vrot.slane %v1079, 4
        %v1089 = vrot.slane %v1080, 4
        %v1090 = vsel %vm737, %v1088, %v1089
        %v1091 = vsel %vm737, %v1089, %v1088
        %v1092 = vmul.f32 %v1091, %v741
        %v1093 = vmul.f32 %v1090, %v742
        %v1094 = vpack.c.bf16 %v1093, %v1092
        %v1095 = vrot.slane %v1079, 5
        %v1096 = vrot.slane %v1080, 5
        %v1097 = vsel %vm748, %v1095, %v1096
        %v1098 = vsel %vm748, %v1096, %v1095
        %v1099 = vmul.f32 %v1098, %v752
        %v1100 = vmul.f32 %v1097, %v753
        %v1101 = vpack.c.bf16 %v1100, %v1099
        %v1102 = vrot.slane %v1079, 7
        %v1103 = vrot.slane %v1080, 7
        %v1104 = vsel %vm759, %v1102, %v1103
        %v1105 = vsel %vm759, %v1103, %v1102
        %v1106 = vmul.f32 %v1105, %v763
        %v1107 = vmul.f32 %v1104, %v764
        %v1108 = vpack.c.bf16 %v1107, %v1106
        %v1109 = vpack.c.bf16 %v1080, %v1079
        %v1110 = vrot.slane %v1079, 1
        %v1111 = vrot.slane %v1080, 1
        %v1112 = vsel %vm641, %v1110, %v1111
        %v1113 = vsel %vm641, %v1111, %v1110
        %v1114 = vmul.f32 %v1112, %v774
        %v1115 = vmul.f32 %v1113, %v775
        %v1116 = vpack.c.bf16 %v1115, %v1114
        %v1117 = vmul.f32 %v1083, %v780
        %v1118 = vmul.f32 %v1084, %v781
        %v1119 = vpack.c.bf16 %v1118, %v1117
        %v1120 = vmul.f32 %v1090, %v786
        %v1121 = vmul.f32 %v1091, %v787
        %v1122 = vpack.c.bf16 %v1121, %v1120
        %v1123 = vmul.f32 %v1097, %v792
        %v1124 = vmul.f32 %v1098, %v793
        %v1125 = vpack.c.bf16 %v1124, %v1123
        %1127 = vrot.lane.b32.xlu0 %v1094, 32
        %v1128 = vpop.permute.xlu0 %1127
        %1130 = vrot.lane.b32.xlu0 %v1101, 64
        %v1131 = vpop.permute.xlu0 %1130
        %1133 = vrot.lane.b32.xlu0 %v1108, 96
        %v1134 = vpop.permute.xlu0 %1133
        %1136 = vrot.lane.b32.xlu0 %v1116, 32
        %v1137 = vpop.permute.xlu0 %1136
        %1139 = vrot.lane.b32.xlu0 %v1119, 64
        %v1140 = vpop.permute.xlu0 %1139
        %1142 = vrot.lane.b32.xlu0 %v1122, 96
        %v1143 = vpop.permute.xlu0 %1142
        %v1146 = vsel %vm815, %v1087, %v1128
        %v1148 = vsel %vm677, %v1146, %v1131
        %v1150 = vsel %vm821, %v1148, %v1134
        %v1154 = vsel %vm815, %v1109, %v1137
        %v1156 = vsel %vm677, %v1154, %v1140
        %v1158 = vsel %vm821, %v1156, %v1143
        %s1160 = scalar_lea.vmem %s5, 144
        %v1161 = vld [vmem:[%s1160] sm:$0xf]
        %v1162 = vld [vmem:[%s1160 + $0x4] sm:$0xf]
        %v1163 = vld [vmem:[%s1160 + $0x8] sm:$0xf]
        %v1164 = vld [vmem:[%s1160 + $0xc] sm:$0xf]
        %v1165 = vld [vmem:[%s1160 + $0x10] sm:$0xf]
        %v1166 = vld [vmem:[%s1160 + $0x14] sm:$0xf]
        %v1167 = vld [vmem:[%s1160 + $0x18] sm:$0xf]
        %v1168 = vld [vmem:[%s1160 + $0x1c] sm:$0xf]
        %v1169 = vld [vmem:[%s1160 + $0x20] sm:$0xf]
        %v1170 = vld [vmem:[%s1160 + $0x24] sm:$0xf]
        %v1171 = vld [vmem:[%s1160 + $0x28] sm:$0xf]
        %v1172 = vld [vmem:[%s1160 + $0x2c] sm:$0xf]
        %v1173 = vld [vmem:[%s1160 + $0x30] sm:$0xf]
        %v1174 = vld [vmem:[%s1160 + $0x34] sm:$0xf]
        %v1175 = vld [vmem:[%s1160 + $0x38] sm:$0xf]
        %v1176 = vld [vmem:[%s1160 + $0x3c] sm:$0xf]
        %v1177 = vld [vmem:[%s1160 + $0x40] sm:$0xf]
        %v1178 = vld [vmem:[%s1160 + $0x44] sm:$0xf]
        %v1179 = vld [vmem:[%s1160 + $0x48] sm:$0xf]
        %v1180 = vld [vmem:[%s1160 + $0x4c] sm:$0xf]
        %v1181 = vld [vmem:[%s1160 + $0x50] sm:$0xf]
        %v1182 = vld [vmem:[%s1160 + $0x54] sm:$0xf]
        %v1183 = vld [vmem:[%s1160 + $0x58] sm:$0xf]
        %v1184 = vld [vmem:[%s1160 + $0x5c] sm:$0xf]
        %v1185 = vld [vmem:[%s1160 + $0x60] sm:$0xf]
        %v1186 = vld [vmem:[%s1160 + $0x64] sm:$0xf]
        %v1187 = vld [vmem:[%s1160 + $0x68] sm:$0xf]
        %v1188 = vld [vmem:[%s1160 + $0x6c] sm:$0xf]
        %v1189 = vld [vmem:[%s1160 + $0x70] sm:$0xf]
        %v1190 = vld [vmem:[%s1160 + $0x74] sm:$0xf]
        %v1191 = vld [vmem:[%s1160 + $0x78] sm:$0xf]
        %v1192 = vld [vmem:[%s1160 + $0x7c] sm:$0xf]
        %v1193 = vld [vmem:[%s1160 + $0x80] sm:$0xf]
        %v1194 = vld [vmem:[%s1160 + $0x84] sm:$0xf]
        %v1195 = vld [vmem:[%s1160 + $0x88] sm:$0xf]
        %v1196 = vld [vmem:[%s1160 + $0x8c] sm:$0xf]
        %s1197 = scalar_lea.vmem %s6, 1
        %v1198 = vld [vmem:[%s1197] sm:$0x1]
        %v1200 = vlaneseq
        %v1201 = vshrl.u32 %v1200, 7
        %v1202 = vsub.s32 0, %v1201
        %v1203 = vrot.slane %v1198, %v1202
        %v1241 = vunpack.c.l.b16 %v1161
        %v1242 = vunpack.c.l.b16 %v1162
        %v1243 = vunpack.c.l.b16 %v1163
        %v1244 = vunpack.c.l.b16 %v1164
        %v1245 = vunpack.c.l.b16 %v1165
        %v1246 = vunpack.c.l.b16 %v1166
        %v1247 = vunpack.c.l.b16 %v1167
        %v1248 = vunpack.c.l.b16 %v1168
        %v1249 = vunpack.c.l.b16 %v1169
        %v1250 = vunpack.c.l.b16 %v1170
        %v1251 = vunpack.c.l.b16 %v1171
        %v1252 = vunpack.c.l.b16 %v1172
        %v1253 = vunpack.c.l.b16 %v1173
        %v1254 = vunpack.c.l.b16 %v1174
        %v1255 = vunpack.c.l.b16 %v1175
        %v1256 = vunpack.c.l.b16 %v1176
        %v1257 = vunpack.c.l.b16 %v1177
        %v1258 = vunpack.c.l.b16 %v1178
        %v1259 = vunpack.c.l.b16 %v1179
        %v1260 = vunpack.c.l.b16 %v1180
        %v1261 = vunpack.c.l.b16 %v1181
        %v1262 = vunpack.c.l.b16 %v1182
        %v1263 = vunpack.c.l.b16 %v1183
        %v1264 = vunpack.c.l.b16 %v1184
        %v1265 = vunpack.c.l.b16 %v1185
        %v1266 = vunpack.c.l.b16 %v1186
        %v1267 = vunpack.c.l.b16 %v1187
        %v1268 = vunpack.c.l.b16 %v1188
        %v1269 = vunpack.c.l.b16 %v1189
        %v1270 = vunpack.c.l.b16 %v1190
        %v1271 = vunpack.c.l.b16 %v1191
        %v1272 = vunpack.c.l.b16 %v1192
        %v1273 = vunpack.c.l.b16 %v1193
        %v1274 = vunpack.c.l.b16 %v1194
        %v1275 = vunpack.c.l.b16 %v1195
        %v1276 = vunpack.c.l.b16 %v1196
        %v1277 = vpack.c.b16 %v1242, %v1241
        %v1278 = vpack.c.b16 %v1244, %v1243
        %v1279 = vpack.c.b16 %v1246, %v1245
        %v1280 = vpack.c.b16 %v1248, %v1247
        %v1281 = vpack.c.b16 %v1250, %v1249
        %v1282 = vpack.c.b16 %v1252, %v1251
        %v1283 = vpack.c.b16 %v1254, %v1253
        %v1284 = vpack.c.b16 %v1256, %v1255
        %v1285 = vpack.c.b16 %v1258, %v1257
        %v1286 = vpack.c.b16 %v1260, %v1259
        %v1287 = vpack.c.b16 %v1262, %v1261
        %v1288 = vpack.c.b16 %v1264, %v1263
        %v1289 = vpack.c.b16 %v1266, %v1265
        %v1290 = vpack.c.b16 %v1268, %v1267
        %v1291 = vpack.c.b16 %v1270, %v1269
        %v1292 = vpack.c.b16 %v1272, %v1271
        %v1293 = vpack.c.b16 %v1274, %v1273
        %v1294 = vpack.c.b16 %v1276, %v1275
        %v1314 = vsel %vm815, %v1125, 0
        %1316 = vmatprep.subr.bf16.mxu0 0
        %1317 = vmatpush1.bf16.msra.mxu0 %v1277
        %1318 = vmatprep.subr.bf16.mxu0 0
        %1319 = vmatpush1.bf16.msra.mxu0 %v1278
        %1320 = vmatprep.subr.bf16.mxu0 0
        %1321 = vmatpush1.bf16.msra.mxu0 %v1279
        %1322 = vmatprep.subr.bf16.mxu0 0
        %1323 = vmatpush1.bf16.msra.mxu0 %v1280
        %1324 = vmatprep.subr.bf16.mxu0 0
        %1325 = vmatpush1.bf16.msra.mxu0 %v1281
        %1326 = vmatprep.subr.bf16.mxu0 0
        %1327 = vmatpush1.bf16.msra.mxu0 %v1282
        %1328 = vmatprep.subr.bf16.mxu0 0
        %1329 = vmatpush1.bf16.msra.mxu0 %v1283
        %1330 = vmatprep.subr.bf16.mxu0 0
        %1331 = vmatpush1.bf16.msra.mxu0 %v1284
        %1332 = vmatprep.subr.bf16.mxu0 0
        %1333 = vmatpush1.bf16.msra.mxu0 %v1285
        %1334 = vmatprep.subr.bf16.mxu0 0
        %1335 = vmatpush1.bf16.msra.mxu0 %v1286
        %1336 = vmatprep.subr.bf16.mxu0 0
        %1337 = vmatpush1.bf16.msra.mxu0 %v1287
        %1338 = vmatprep.subr.bf16.mxu0 0
        %1339 = vmatpush1.bf16.msra.mxu0 %v1288
        %1340 = vmatprep.subr.bf16.mxu0 0
        %1341 = vmatpush1.bf16.msra.mxu0 %v1289
        %1342 = vmatprep.subr.bf16.mxu0 0
        %1343 = vmatpush1.bf16.msra.mxu0 %v1290
        %1344 = vmatprep.subr.bf16.mxu0 0
        %1345 = vmatpush1.bf16.msra.mxu0 %v1291
        %1346 = vmatprep.subr.bf16.mxu0 0
        %1347 = vmatpush1.bf16.msra.mxu0 %v1292
        %1348 = vmatprep.mubr.bf16.mxu0 %v1158
        %1349 = vmatmul.mubr.bf16.gmra.mrb[0].mxu0 %v1150
        %v1350 = vpop.f32.mrb[0].mxu0
        %v1351 = vadd.f32 %v1203, %v1350
        %v1352 = vpop.f32.mrb[0].mxu0
        %v1353 = vpop.f32.mrb[0].mxu0
        %v1354 = vadd.f32 %v1203, %v1353
        %v1355 = vpop.f32.mrb[0].mxu0
        %1356 = vdwg.mxu0
        %1357 = vmatprep.subr.bf16.mxu0 0
        %1358 = vmatpush1.bf16.msra.mxu0 %v1293
        %1359 = vmatprep.subr.bf16.mxu0 0
        %1360 = vmatpush1.bf16.msra.mxu0 %v1294
        %1361 = vmatprep.subr.bf16.mxu0 0
        %1362 = vmatpush1.bf16.msra.mxu0 0
        %1363 = vmatprep.subr.bf16.mxu0 0
        %1364 = vmatpush1.bf16.msra.mxu0 0
        %1365 = vmatprep.subr.bf16.mxu0 0
        %1366 = vmatpush1.bf16.msra.mxu0 0
        %1367 = vmatprep.subr.bf16.mxu0 0
        %1368 = vmatpush1.bf16.msra.mxu0 0
        %1369 = vmatprep.subr.bf16.mxu0 0
        %1370 = vmatpush1.bf16.msra.mxu0 0
        %1371 = vmatprep.subr.bf16.mxu0 0
        %1372 = vmatpush1.bf16.msra.mxu0 0
        %1373 = vmatprep.subr.bf16.mxu0 0
        %1374 = vmatpush1.bf16.msra.mxu0 0
        %1375 = vmatprep.subr.bf16.mxu0 0
        %1376 = vmatpush1.bf16.msra.mxu0 0
        %1377 = vmatprep.subr.bf16.mxu0 0
        %1378 = vmatpush1.bf16.msra.mxu0 0
        %1379 = vmatprep.subr.bf16.mxu0 0
        %1380 = vmatpush1.bf16.msra.mxu0 0
        %1381 = vmatprep.subr.bf16.mxu0 0
        %1382 = vmatpush1.bf16.msra.mxu0 0
        %1383 = vmatprep.subr.bf16.mxu0 0
        %1384 = vmatpush1.bf16.msra.mxu0 0
        %1385 = vmatprep.subr.bf16.mxu0 0
        %1386 = vmatpush1.bf16.msra.mxu0 0
        %1387 = vmatprep.subr.bf16.mxu0 0
        %1388 = vmatpush1.bf16.msra.mxu0 0
        %1389 = vmatprep.mubr.bf16.mxu0 0
        %1390 = vmatmul.mubr.bf16.gmra.mrb[0].mxu0 %v1314
        %v1391 = vpop.f32.mrb[0].mxu0
        %v1392 = vadd.f32 %v1351, %v1391
        %v1393 = vpop.f32.mrb[0].mxu0
        %v1394 = vpop.f32.mrb[0].mxu0
        %v1395 = vadd.f32 %v1354, %v1394
        %v1396 = vpop.f32.mrb[0].mxu0
        %1397 = vdwg.mxu0
        %v1398 = vmax.f32 %v1392, 0.0
        %v1399 = vmax.f32 %v1395, 0.0
        %s1400 = sld [smem:[#allocation2 + $0x2]]
        %v1401 = vstv %s1400
        %v1402 = vmul.f32 %v1401, %v1079
        %v1403 = vmul.f32 %v1401, %v1080
        %s1404 = sld [smem:[#allocation2 + $0x3]]
        %v1405 = vstv %s1404
        %v1406 = vmul.f32 %v1405, %v1398
        %v1407 = vmul.f32 %v1405, %v1399
        %v1408 = vadd.f32 %v1402, %v1406
        %v1409 = vadd.f32 %v1403, %v1407
        %v1410 = vrot.slane %v1408, 3
        %v1411 = vrot.slane %v1409, 3
        %v1412 = vsel %vm727, %v1410, %v1411
        %v1413 = vsel %vm727, %v1411, %v1410
        %v1414 = vmul.f32 %v1413, %v730
        %v1415 = vmul.f32 %v1412, %v731
        %v1416 = vpack.c.bf16 %v1415, %v1414
        %v1417 = vrot.slane %v1408, 4
        %v1418 = vrot.slane %v1409, 4
        %v1419 = vsel %vm737, %v1417, %v1418
        %v1420 = vsel %vm737, %v1418, %v1417
        %v1421 = vmul.f32 %v1420, %v741
        %v1422 = vmul.f32 %v1419, %v742
        %v1423 = vpack.c.bf16 %v1422, %v1421
        %v1424 = vrot.slane %v1408, 5
        %v1425 = vrot.slane %v1409, 5
        %v1426 = vsel %vm748, %v1424, %v1425
        %v1427 = vsel %vm748, %v1425, %v1424
        %v1428 = vmul.f32 %v1427, %v752
        %v1429 = vmul.f32 %v1426, %v753
        %v1430 = vpack.c.bf16 %v1429, %v1428
        %v1431 = vrot.slane %v1408, 7
        %v1432 = vrot.slane %v1409, 7
        %v1433 = vsel %vm759, %v1431, %v1432
        %v1434 = vsel %vm759, %v1432, %v1431
        %v1435 = vmul.f32 %v1434, %v763
        %v1436 = vmul.f32 %v1433, %v764
        %v1437 = vpack.c.bf16 %v1436, %v1435
        %v1438 = vpack.c.bf16 %v1409, %v1408
        %v1439 = vrot.slane %v1408, 1
        %v1440 = vrot.slane %v1409, 1
        %v1441 = vsel %vm641, %v1439, %v1440
        %v1442 = vsel %vm641, %v1440, %v1439
        %v1443 = vmul.f32 %v1441, %v774
        %v1444 = vmul.f32 %v1442, %v775
        %v1445 = vpack.c.bf16 %v1444, %v1443
        %v1446 = vmul.f32 %v1412, %v780
        %v1447 = vmul.f32 %v1413, %v781
        %v1448 = vpack.c.bf16 %v1447, %v1446
        %v1449 = vmul.f32 %v1419, %v786
        %v1450 = vmul.f32 %v1420, %v787
        %v1451 = vpack.c.bf16 %v1450, %v1449
        %v1452 = vmul.f32 %v1426, %v792
        %v1453 = vmul.f32 %v1427, %v793
        %v1454 = vpack.c.bf16 %v1453, %v1452
        %1456 = vrot.lane.b32.xlu0 %v1423, 32
        %v1457 = vpop.permute.xlu0 %1456
        %1459 = vrot.lane.b32.xlu0 %v1430, 64
        %v1460 = vpop.permute.xlu0 %1459
        %1462 = vrot.lane.b32.xlu0 %v1437, 96
        %v1463 = vpop.permute.xlu0 %1462
        %1465 = vrot.lane.b32.xlu0 %v1445, 32
        %v1466 = vpop.permute.xlu0 %1465
        %1468 = vrot.lane.b32.xlu0 %v1448, 64
        %v1469 = vpop.permute.xlu0 %1468
        %1471 = vrot.lane.b32.xlu0 %v1451, 96
        %v1472 = vpop.permute.xlu0 %1471
        %v1475 = vsel %vm815, %v1416, %v1457
        %v1477 = vsel %vm677, %v1475, %v1460
        %v1479 = vsel %vm821, %v1477, %v1463
        %v1483 = vsel %vm815, %v1438, %v1466
        %v1485 = vsel %vm677, %v1483, %v1469
        %v1487 = vsel %vm821, %v1485, %v1472
        %s1489 = scalar_lea.vmem %s5, 288
        %v1490 = vld [vmem:[%s1489] sm:$0xf]
        %v1491 = vld [vmem:[%s1489 + $0x4] sm:$0xf]
        %v1492 = vld [vmem:[%s1489 + $0x8] sm:$0xf]
        %v1493 = vld [vmem:[%s1489 + $0xc] sm:$0xf]
        %v1494 = vld [vmem:[%s1489 + $0x10] sm:$0xf]
        %v1495 = vld [vmem:[%s1489 + $0x14] sm:$0xf]
        %v1496 = vld [vmem:[%s1489 + $0x18] sm:$0xf]
        %v1497 = vld [vmem:[%s1489 + $0x1c] sm:$0xf]
        %v1498 = vld [vmem:[%s1489 + $0x20] sm:$0xf]
        %v1499 = vld [vmem:[%s1489 + $0x24] sm:$0xf]
        %v1500 = vld [vmem:[%s1489 + $0x28] sm:$0xf]
        %v1501 = vld [vmem:[%s1489 + $0x2c] sm:$0xf]
        %v1502 = vld [vmem:[%s1489 + $0x30] sm:$0xf]
        %v1503 = vld [vmem:[%s1489 + $0x34] sm:$0xf]
        %v1504 = vld [vmem:[%s1489 + $0x38] sm:$0xf]
        %v1505 = vld [vmem:[%s1489 + $0x3c] sm:$0xf]
        %v1506 = vld [vmem:[%s1489 + $0x40] sm:$0xf]
        %v1507 = vld [vmem:[%s1489 + $0x44] sm:$0xf]
        %v1508 = vld [vmem:[%s1489 + $0x48] sm:$0xf]
        %v1509 = vld [vmem:[%s1489 + $0x4c] sm:$0xf]
        %v1510 = vld [vmem:[%s1489 + $0x50] sm:$0xf]
        %v1511 = vld [vmem:[%s1489 + $0x54] sm:$0xf]
        %v1512 = vld [vmem:[%s1489 + $0x58] sm:$0xf]
        %v1513 = vld [vmem:[%s1489 + $0x5c] sm:$0xf]
        %v1514 = vld [vmem:[%s1489 + $0x60] sm:$0xf]
        %v1515 = vld [vmem:[%s1489 + $0x64] sm:$0xf]
        %v1516 = vld [vmem:[%s1489 + $0x68] sm:$0xf]
        %v1517 = vld [vmem:[%s1489 + $0x6c] sm:$0xf]
        %v1518 = vld [vmem:[%s1489 + $0x70] sm:$0xf]
        %v1519 = vld [vmem:[%s1489 + $0x74] sm:$0xf]
        %v1520 = vld [vmem:[%s1489 + $0x78] sm:$0xf]
        %v1521 = vld [vmem:[%s1489 + $0x7c] sm:$0xf]
        %v1522 = vld [vmem:[%s1489 + $0x80] sm:$0xf]
        %v1523 = vld [vmem:[%s1489 + $0x84] sm:$0xf]
        %v1524 = vld [vmem:[%s1489 + $0x88] sm:$0xf]
        %v1525 = vld [vmem:[%s1489 + $0x8c] sm:$0xf]
        %s1526 = scalar_lea.vmem %s6, 2
        %v1527 = vld [vmem:[%s1526] sm:$0x1]
        %v1529 = vlaneseq
        %v1530 = vshrl.u32 %v1529, 7
        %v1531 = vsub.s32 0, %v1530
        %v1532 = vrot.slane %v1527, %v1531
        %v1570 = vunpack.c.l.b16 %v1490
        %v1571 = vunpack.c.l.b16 %v1491
        %v1572 = vunpack.c.l.b16 %v1492
        %v1573 = vunpack.c.l.b16 %v1493
        %v1574 = vunpack.c.l.b16 %v1494
        %v1575 = vunpack.c.l.b16 %v1495
        %v1576 = vunpack.c.l.b16 %v1496
        %v1577 = vunpack.c.l.b16 %v1497
        %v1578 = vunpack.c.l.b16 %v1498
        %v1579 = vunpack.c.l.b16 %v1499
        %v1580 = vunpack.c.l.b16 %v1500
        %v1581 = vunpack.c.l.b16 %v1501
        %v1582 = vunpack.c.l.b16 %v1502
        %v1583 = vunpack.c.l.b16 %v1503
        %v1584 = vunpack.c.l.b16 %v1504
        %v1585 = vunpack.c.l.b16 %v1505
        %v1586 = vunpack.c.l.b16 %v1506
        %v1587 = vunpack.c.l.b16 %v1507
        %v1588 = vunpack.c.l.b16 %v1508
        %v1589 = vunpack.c.l.b16 %v1509
        %v1590 = vunpack.c.l.b16 %v1510
        %v1591 = vunpack.c.l.b16 %v1511
        %v1592 = vunpack.c.l.b16 %v1512
        %v1593 = vunpack.c.l.b16 %v1513
        %v1594 = vunpack.c.l.b16 %v1514
        %v1595 = vunpack.c.l.b16 %v1515
        %v1596 = vunpack.c.l.b16 %v1516
        %v1597 = vunpack.c.l.b16 %v1517
        %v1598 = vunpack.c.l.b16 %v1518
        %v1599 = vunpack.c.l.b16 %v1519
        %v1600 = vunpack.c.l.b16 %v1520
        %v1601 = vunpack.c.l.b16 %v1521
        %v1602 = vunpack.c.l.b16 %v1522
        %v1603 = vunpack.c.l.b16 %v1523
        %v1604 = vunpack.c.l.b16 %v1524
        %v1605 = vunpack.c.l.b16 %v1525
        %v1606 = vpack.c.b16 %v1571, %v1570
        %v1607 = vpack.c.b16 %v1573, %v1572
        %v1608 = vpack.c.b16 %v1575, %v1574
        %v1609 = vpack.c.b16 %v1577, %v1576
        %v1610 = vpack.c.b16 %v1579, %v1578
        %v1611 = vpack.c.b16 %v1581, %v1580
        %v1612 = vpack.c.b16 %v1583, %v1582
        %v1613 = vpack.c.b16 %v1585, %v1584
        %v1614 = vpack.c.b16 %v1587, %v1586
        %v1615 = vpack.c.b16 %v1589, %v1588
        %v1616 = vpack.c.b16 %v1591, %v1590
        %v1617 = vpack.c.b16 %v1593, %v1592
        %v1618 = vpack.c.b16 %v1595, %v1594
        %v1619 = vpack.c.b16 %v1597, %v1596
        %v1620 = vpack.c.b16 %v1599, %v1598
        %v1621 = vpack.c.b16 %v1601, %v1600
        %v1622 = vpack.c.b16 %v1603, %v1602
        %v1623 = vpack.c.b16 %v1605, %v1604
        %v1643 = vsel %vm815, %v1454, 0
        %1645 = vmatprep.subr.bf16.mxu0 0
        %1646 = vmatpush1.bf16.msra.mxu0 %v1606
        %1647 = vmatprep.subr.bf16.mxu0 0
        %1648 = vmatpush1.bf16.msra.mxu0 %v1607
        %1649 = vmatprep.subr.bf16.mxu0 0
        %1650 = vmatpush1.bf16.msra.mxu0 %v1608
        %1651 = vmatprep.subr.bf16.mxu0 0
        %1652 = vmatpush1.bf16.msra.mxu0 %v1609
        %1653 = vmatprep.subr.bf16.mxu0 0
        %1654 = vmatpush1.bf16.msra.mxu0 %v1610
        %1655 = vmatprep.subr.bf16.mxu0 0
        %1656 = vmatpush1.bf16.msra.mxu0 %v1611
        %1657 = vmatprep.subr.bf16.mxu0 0
        %1658 = vmatpush1.bf16.msra.mxu0 %v1612
        %1659 = vmatprep.subr.bf16.mxu0 0
        %1660 = vmatpush1.bf16.msra.mxu0 %v1613
        %1661 = vmatprep.subr.bf16.mxu0 0
        %1662 = vmatpush1.bf16.msra.mxu0 %v1614
        %1663 = vmatprep.subr.bf16.mxu0 0
        %1664 = vmatpush1.bf16.msra.mxu0 %v1615
        %1665 = vmatprep.subr.bf16.mxu0 0
        %1666 = vmatpush1.bf16.msra.mxu0 %v1616
        %1667 = vmatprep.subr.bf16.mxu0 0
        %1668 = vmatpush1.bf16.msra.mxu0 %v1617
        %1669 = vmatprep.subr.bf16.mxu0 0
        %1670 = vmatpush1.bf16.msra.mxu0 %v1618
        %1671 = vmatprep.subr.bf16.mxu0 0
        %1672 = vmatpush1.bf16.msra.mxu0 %v1619
        %1673 = vmatprep.subr.bf16.mxu0 0
        %1674 = vmatpush1.bf16.msra.mxu0 %v1620
        %1675 = vmatprep.subr.bf16.mxu0 0
        %1676 = vmatpush1.bf16.msra.mxu0 %v1621
        %1677 = vmatprep.mubr.bf16.mxu0 %v1487
        %1678 = vmatmul.mubr.bf16.gmra.mrb[0].mxu0 %v1479
        %v1679 = vpop.f32.mrb[0].mxu0
        %v1680 = vadd.f32 %v1532, %v1679
        %v1681 = vpop.f32.mrb[0].mxu0
        %v1682 = vpop.f32.mrb[0].mxu0
        %v1683 = vadd.f32 %v1532, %v1682
        %v1684 = vpop.f32.mrb[0].mxu0
        %1685 = vdwg.mxu0
        %1686 = vmatprep.subr.bf16.mxu0 0
        %1687 = vmatpush1.bf16.msra.mxu0 %v1622
        %1688 = vmatprep.subr.bf16.mxu0 0
        %1689 = vmatpush1.bf16.msra.mxu0 %v1623
        %1690 = vmatprep.subr.bf16.mxu0 0
        %1691 = vmatpush1.bf16.msra.mxu0 0
        %1692 = vmatprep.subr.bf16.mxu0 0
        %1693 = vmatpush1.bf16.msra.mxu0 0
        %1694 = vmatprep.subr.bf16.mxu0 0
        %1695 = vmatpush1.bf16.msra.mxu0 0
        %1696 = vmatprep.subr.bf16.mxu0 0
        %1697 = vmatpush1.bf16.msra.mxu0 0
        %1698 = vmatprep.subr.bf16.mxu0 0
        %1699 = vmatpush1.bf16.msra.mxu0 0
        %1700 = vmatprep.subr.bf16.mxu0 0
        %1701 = vmatpush1.bf16.msra.mxu0 0
        %1702 = vmatprep.subr.bf16.mxu0 0
        %1703 = vmatpush1.bf16.msra.mxu0 0
        %1704 = vmatprep.subr.bf16.mxu0 0
        %1705 = vmatpush1.bf16.msra.mxu0 0
        %1706 = vmatprep.subr.bf16.mxu0 0
        %1707 = vmatpush1.bf16.msra.mxu0 0
        %1708 = vmatprep.subr.bf16.mxu0 0
        %1709 = vmatpush1.bf16.msra.mxu0 0
        %1710 = vmatprep.subr.bf16.mxu0 0
        %1711 = vmatpush1.bf16.msra.mxu0 0
        %1712 = vmatprep.subr.bf16.mxu0 0
        %1713 = vmatpush1.bf16.msra.mxu0 0
        %1714 = vmatprep.subr.bf16.mxu0 0
        %1715 = vmatpush1.bf16.msra.mxu0 0
        %1716 = vmatprep.subr.bf16.mxu0 0
        %1717 = vmatpush1.bf16.msra.mxu0 0
        %1718 = vmatprep.mubr.bf16.mxu0 0
        %1719 = vmatmul.mubr.bf16.gmra.mrb[0].mxu0 %v1643
        %v1720 = vpop.f32.mrb[0].mxu0
        %v1721 = vadd.f32 %v1680, %v1720
        %v1722 = vpop.f32.mrb[0].mxu0
        %v1723 = vpop.f32.mrb[0].mxu0
        %v1724 = vadd.f32 %v1683, %v1723
        %v1725 = vpop.f32.mrb[0].mxu0
        %1726 = vdwg.mxu0
        %v1727 = vmax.f32 %v1721, 0.0
        %v1728 = vmax.f32 %v1724, 0.0
        %s1729 = sld [smem:[#allocation2 + $0x4]]
        %v1730 = vstv %s1729
        %v1731 = vmul.f32 %v1730, %v1408
        %v1732 = vmul.f32 %v1730, %v1409
        %s1733 = sld [smem:[#allocation2 + $0x5]]
        %v1734 = vstv %s1733
        %v1735 = vmul.f32 %v1734, %v1727
        %v1736 = vmul.f32 %v1734, %v1728
        %v1737 = vadd.f32 %v1731, %v1735
        %v1738 = vadd.f32 %v1732, %v1736
        %v1739 = vrot.slane %v1737, 3
        %v1740 = vrot.slane %v1738, 3
        %v1741 = vsel %vm727, %v1739, %v1740
        %v1742 = vsel %vm727, %v1740, %v1739
        %v1743 = vmul.f32 %v1742, %v730
        %v1744 = vmul.f32 %v1741, %v731
        %v1745 = vpack.c.bf16 %v1744, %v1743
        %v1746 = vrot.slane %v1737, 4
        %v1747 = vrot.slane %v1738, 4
        %v1748 = vsel %vm737, %v1746, %v1747
        %v1749 = vsel %vm737, %v1747, %v1746
        %v1750 = vmul.f32 %v1749, %v741
        %v1751 = vmul.f32 %v1748, %v742
        %v1752 = vpack.c.bf16 %v1751, %v1750
        %v1753 = vrot.slane %v1737, 5
        %v1754 = vrot.slane %v1738, 5
        %v1755 = vsel %vm748, %v1753, %v1754
        %v1756 = vsel %vm748, %v1754, %v1753
        %v1757 = vmul.f32 %v1756, %v752
        %v1758 = vmul.f32 %v1755, %v753
        %v1759 = vpack.c.bf16 %v1758, %v1757
        %v1760 = vrot.slane %v1737, 7
        %v1761 = vrot.slane %v1738, 7
        %v1762 = vsel %vm759, %v1760, %v1761
        %v1763 = vsel %vm759, %v1761, %v1760
        %v1764 = vmul.f32 %v1763, %v763
        %v1765 = vmul.f32 %v1762, %v764
        %v1766 = vpack.c.bf16 %v1765, %v1764
        %v1767 = vpack.c.bf16 %v1738, %v1737
        %v1768 = vrot.slane %v1737, 1
        %v1769 = vrot.slane %v1738, 1
        %v1770 = vsel %vm641, %v1768, %v1769
        %v1771 = vsel %vm641, %v1769, %v1768
        %v1772 = vmul.f32 %v1770, %v774
        %v1773 = vmul.f32 %v1771, %v775
        %v1774 = vpack.c.bf16 %v1773, %v1772
        %v1775 = vmul.f32 %v1741, %v780
        %v1776 = vmul.f32 %v1742, %v781
        %v1777 = vpack.c.bf16 %v1776, %v1775
        %v1778 = vmul.f32 %v1748, %v786
        %v1779 = vmul.f32 %v1749, %v787
        %v1780 = vpack.c.bf16 %v1779, %v1778
        %v1781 = vmul.f32 %v1755, %v792
        %v1782 = vmul.f32 %v1756, %v793
        %v1783 = vpack.c.bf16 %v1782, %v1781
        %1785 = vrot.lane.b32.xlu0 %v1752, 32
        %v1786 = vpop.permute.xlu0 %1785
        %1788 = vrot.lane.b32.xlu0 %v1759, 64
        %v1789 = vpop.permute.xlu0 %1788
        %1791 = vrot.lane.b32.xlu0 %v1766, 96
        %v1792 = vpop.permute.xlu0 %1791
        %1794 = vrot.lane.b32.xlu0 %v1774, 32
        %v1795 = vpop.permute.xlu0 %1794
        %1797 = vrot.lane.b32.xlu0 %v1777, 64
        %v1798 = vpop.permute.xlu0 %1797
        %1800 = vrot.lane.b32.xlu0 %v1780, 96
        %v1801 = vpop.permute.xlu0 %1800
        %v1804 = vsel %vm815, %v1745, %v1786
        %v1806 = vsel %vm677, %v1804, %v1789
        %v1808 = vsel %vm821, %v1806, %v1792
        %v1812 = vsel %vm815, %v1767, %v1795
        %v1814 = vsel %vm677, %v1812, %v1798
        %v1816 = vsel %vm821, %v1814, %v1801
        %s1818 = scalar_lea.vmem %s5, 432
        %v1819 = vld [vmem:[%s1818] sm:$0xf]
        %v1820 = vld [vmem:[%s1818 + $0x4] sm:$0xf]
        %v1821 = vld [vmem:[%s1818 + $0x8] sm:$0xf]
        %v1822 = vld [vmem:[%s1818 + $0xc] sm:$0xf]
        %v1823 = vld [vmem:[%s1818 + $0x10] sm:$0xf]
        %v1824 = vld [vmem:[%s1818 + $0x14] sm:$0xf]
        %v1825 = vld [vmem:[%s1818 + $0x18] sm:$0xf]
        %v1826 = vld [vmem:[%s1818 + $0x1c] sm:$0xf]
        %v1827 = vld [vmem:[%s1818 + $0x20] sm:$0xf]
        %v1828 = vld [vmem:[%s1818 + $0x24] sm:$0xf]
        %v1829 = vld [vmem:[%s1818 + $0x28] sm:$0xf]
        %v1830 = vld [vmem:[%s1818 + $0x2c] sm:$0xf]
        %v1831 = vld [vmem:[%s1818 + $0x30] sm:$0xf]
        %v1832 = vld [vmem:[%s1818 + $0x34] sm:$0xf]
        %v1833 = vld [vmem:[%s1818 + $0x38] sm:$0xf]
        %v1834 = vld [vmem:[%s1818 + $0x3c] sm:$0xf]
        %v1835 = vld [vmem:[%s1818 + $0x40] sm:$0xf]
        %v1836 = vld [vmem:[%s1818 + $0x44] sm:$0xf]
        %v1837 = vld [vmem:[%s1818 + $0x48] sm:$0xf]
        %v1838 = vld [vmem:[%s1818 + $0x4c] sm:$0xf]
        %v1839 = vld [vmem:[%s1818 + $0x50] sm:$0xf]
        %v1840 = vld [vmem:[%s1818 + $0x54] sm:$0xf]
        %v1841 = vld [vmem:[%s1818 + $0x58] sm:$0xf]
        %v1842 = vld [vmem:[%s1818 + $0x5c] sm:$0xf]
        %v1843 = vld [vmem:[%s1818 + $0x60] sm:$0xf]
        %v1844 = vld [vmem:[%s1818 + $0x64] sm:$0xf]
        %v1845 = vld [vmem:[%s1818 + $0x68] sm:$0xf]
        %v1846 = vld [vmem:[%s1818 + $0x6c] sm:$0xf]
        %v1847 = vld [vmem:[%s1818 + $0x70] sm:$0xf]
        %v1848 = vld [vmem:[%s1818 + $0x74] sm:$0xf]
        %v1849 = vld [vmem:[%s1818 + $0x78] sm:$0xf]
        %v1850 = vld [vmem:[%s1818 + $0x7c] sm:$0xf]
        %v1851 = vld [vmem:[%s1818 + $0x80] sm:$0xf]
        %v1852 = vld [vmem:[%s1818 + $0x84] sm:$0xf]
        %v1853 = vld [vmem:[%s1818 + $0x88] sm:$0xf]
        %v1854 = vld [vmem:[%s1818 + $0x8c] sm:$0xf]
        %s1855 = scalar_lea.vmem %s6, 3
        %v1856 = vld [vmem:[%s1855] sm:$0x1]
        %v1858 = vlaneseq
        %v1859 = vshrl.u32 %v1858, 7
        %v1860 = vsub.s32 0, %v1859
        %v1861 = vrot.slane %v1856, %v1860
        %v1899 = vunpack.c.l.b16 %v1819
        %v1900 = vunpack.c.l.b16 %v1820
        %v1901 = vunpack.c.l.b16 %v1821
        %v1902 = vunpack.c.l.b16 %v1822
        %v1903 = vunpack.c.l.b16 %v1823
        %v1904 = vunpack.c.l.b16 %v1824
        %v1905 = vunpack.c.l.b16 %v1825
        %v1906 = vunpack.c.l.b16 %v1826
        %v1907 = vunpack.c.l.b16 %v1827
        %v1908 = vunpack.c.l.b16 %v1828
        %v1909 = vunpack.c.l.b16 %v1829
        %v1910 = vunpack.c.l.b16 %v1830
        %v1911 = vunpack.c.l.b16 %v1831
        %v1912 = vunpack.c.l.b16 %v1832
        %v1913 = vunpack.c.l.b16 %v1833
        %v1914 = vunpack.c.l.b16 %v1834
        %v1915 = vunpack.c.l.b16 %v1835
        %v1916 = vunpack.c.l.b16 %v1836
        %v1917 = vunpack.c.l.b16 %v1837
        %v1918 = vunpack.c.l.b16 %v1838
        %v1919 = vunpack.c.l.b16 %v1839
        %v1920 = vunpack.c.l.b16 %v1840
        %v1921 = vunpack.c.l.b16 %v1841
        %v1922 = vunpack.c.l.b16 %v1842
        %v1923 = vunpack.c.l.b16 %v1843
        %v1924 = vunpack.c.l.b16 %v1844
        %v1925 = vunpack.c.l.b16 %v1845
        %v1926 = vunpack.c.l.b16 %v1846
        %v1927 = vunpack.c.l.b16 %v1847
        %v1928 = vunpack.c.l.b16 %v1848
        %v1929 = vunpack.c.l.b16 %v1849
        %v1930 = vunpack.c.l.b16 %v1850
        %v1931 = vunpack.c.l.b16 %v1851
        %v1932 = vunpack.c.l.b16 %v1852
        %v1933 = vunpack.c.l.b16 %v1853
        %v1934 = vunpack.c.l.b16 %v1854
        %v1935 = vpack.c.b16 %v1900, %v1899
        %v1936 = vpack.c.b16 %v1902, %v1901
        %v1937 = vpack.c.b16 %v1904, %v1903
        %v1938 = vpack.c.b16 %v1906, %v1905
        %v1939 = vpack.c.b16 %v1908, %v1907
        %v1940 = vpack.c.b16 %v1910, %v1909
        %v1941 = vpack.c.b16 %v1912, %v1911
        %v1942 = vpack.c.b16 %v1914, %v1913
        %v1943 = vpack.c.b16 %v1916, %v1915
        %v1944 = vpack.c.b16 %v1918, %v1917
        %v1945 = vpack.c.b16 %v1920, %v1919
        %v1946 = vpack.c.b16 %v1922, %v1921
        %v1947 = vpack.c.b16 %v1924, %v1923
        %v1948 = vpack.c.b16 %v1926, %v1925
        %v1949 = vpack.c.b16 %v1928, %v1927
        %v1950 = vpack.c.b16 %v1930, %v1929
        %v1951 = vpack.c.b16 %v1932, %v1931
        %v1952 = vpack.c.b16 %v1934, %v1933
        %v1972 = vsel %vm815, %v1783, 0
        %1974 = vmatprep.subr.bf16.mxu0 0
        %1975 = vmatpush1.bf16.msra.mxu0 %v1935
        %1976 = vmatprep.subr.bf16.mxu0 0
        %1977 = vmatpush1.bf16.msra.mxu0 %v1936
        %1978 = vmatprep.subr.bf16.mxu0 0
        %1979 = vmatpush1.bf16.msra.mxu0 %v1937
        %1980 = vmatprep.subr.bf16.mxu0 0
        %1981 = vmatpush1.bf16.msra.mxu0 %v1938
        %1982 = vmatprep.subr.bf16.mxu0 0
        %1983 = vmatpush1.bf16.msra.mxu0 %v1939
        %1984 = vmatprep.subr.bf16.mxu0 0
        %1985 = vmatpush1.bf16.msra.mxu0 %v1940
        %1986 = vmatprep.subr.bf16.mxu0 0
        %1987 = vmatpush1.bf16.msra.mxu0 %v1941
        %1988 = vmatprep.subr.bf16.mxu0 0
        %1989 = vmatpush1.bf16.msra.mxu0 %v1942
        %1990 = vmatprep.subr.bf16.mxu0 0
        %1991 = vmatpush1.bf16.msra.mxu0 %v1943
        %1992 = vmatprep.subr.bf16.mxu0 0
        %1993 = vmatpush1.bf16.msra.mxu0 %v1944
        %1994 = vmatprep.subr.bf16.mxu0 0
        %1995 = vmatpush1.bf16.msra.mxu0 %v1945
        %1996 = vmatprep.subr.bf16.mxu0 0
        %1997 = vmatpush1.bf16.msra.mxu0 %v1946
        %1998 = vmatprep.subr.bf16.mxu0 0
        %1999 = vmatpush1.bf16.msra.mxu0 %v1947
        %2000 = vmatprep.subr.bf16.mxu0 0
        %2001 = vmatpush1.bf16.msra.mxu0 %v1948
        %2002 = vmatprep.subr.bf16.mxu0 0
        %2003 = vmatpush1.bf16.msra.mxu0 %v1949
        %2004 = vmatprep.subr.bf16.mxu0 0
        %2005 = vmatpush1.bf16.msra.mxu0 %v1950
        %2006 = vmatprep.mubr.bf16.mxu0 %v1816
        %2007 = vmatmul.mubr.bf16.gmra.mrb[0].mxu0 %v1808
        %v2008 = vpop.f32.mrb[0].mxu0
        %v2009 = vadd.f32 %v1861, %v2008
        %v2010 = vpop.f32.mrb[0].mxu0
        %v2011 = vpop.f32.mrb[0].mxu0
        %v2012 = vadd.f32 %v1861, %v2011
        %v2013 = vpop.f32.mrb[0].mxu0
        %2014 = vdwg.mxu0
        %2015 = vmatprep.subr.bf16.mxu0 0
        %2016 = vmatpush1.bf16.msra.mxu0 %v1951
        %2017 = vmatprep.subr.bf16.mxu0 0
        %2018 = vmatpush1.bf16.msra.mxu0 %v1952
        %2019 = vmatprep.subr.bf16.mxu0 0
        %2020 = vmatpush1.bf16.msra.mxu0 0
        %2021 = vmatprep.subr.bf16.mxu0 0
        %2022 = vmatpush1.bf16.msra.mxu0 0
        %2023 = vmatprep.subr.bf16.mxu0 0
        %2024 = vmatpush1.bf16.msra.mxu0 0
        %2025 = vmatprep.subr.bf16.mxu0 0
        %2026 = vmatpush1.bf16.msra.mxu0 0
        %2027 = vmatprep.subr.bf16.mxu0 0
        %2028 = vmatpush1.bf16.msra.mxu0 0
        %2029 = vmatprep.subr.bf16.mxu0 0
        %2030 = vmatpush1.bf16.msra.mxu0 0
        %2031 = vmatprep.subr.bf16.mxu0 0
        %2032 = vmatpush1.bf16.msra.mxu0 0
        %2033 = vmatprep.subr.bf16.mxu0 0
        %2034 = vmatpush1.bf16.msra.mxu0 0
        %2035 = vmatprep.subr.bf16.mxu0 0
        %2036 = vmatpush1.bf16.msra.mxu0 0
        %2037 = vmatprep.subr.bf16.mxu0 0
        %2038 = vmatpush1.bf16.msra.mxu0 0
        %2039 = vmatprep.subr.bf16.mxu0 0
        %2040 = vmatpush1.bf16.msra.mxu0 0
        %2041 = vmatprep.subr.bf16.mxu0 0
        %2042 = vmatpush1.bf16.msra.mxu0 0
        %2043 = vmatprep.subr.bf16.mxu0 0
        %2044 = vmatpush1.bf16.msra.mxu0 0
        %2045 = vmatprep.subr.bf16.mxu0 0
        %2046 = vmatpush1.bf16.msra.mxu0 0
        %2047 = vmatprep.mubr.bf16.mxu0 0
        %2048 = vmatmul.mubr.bf16.gmra.mrb[0].mxu0 %v1972
        %v2049 = vpop.f32.mrb[0].mxu0
        %v2050 = vadd.f32 %v2009, %v2049
        %v2051 = vpop.f32.mrb[0].mxu0
        %v2052 = vpop.f32.mrb[0].mxu0
        %v2053 = vadd.f32 %v2012, %v2052
        %v2054 = vpop.f32.mrb[0].mxu0
        %2055 = vdwg.mxu0
        %v2056 = vmax.f32 %v2050, 0.0
        %v2057 = vmax.f32 %v2053, 0.0
        %s2058 = sld [smem:[#allocation2 + $0x6]]
        %v2059 = vstv %s2058
        %v2060 = vmul.f32 %v2059, %v1737
        %v2061 = vmul.f32 %v2059, %v1738
        %s2062 = sld [smem:[#allocation2 + $0x7]]
        %v2063 = vstv %s2062
        %v2064 = vmul.f32 %v2063, %v2056
        %v2065 = vmul.f32 %v2063, %v2057
        %v2066 = vadd.f32 %v2060, %v2064
        %v2067 = vadd.f32 %v2061, %v2065
        %v2068 = vrot.slane %v2066, 3
        %v2069 = vrot.slane %v2067, 3
        %v2070 = vsel %vm727, %v2068, %v2069
        %v2071 = vsel %vm727, %v2069, %v2068
        %v2072 = vmul.f32 %v2071, %v730
        %v2073 = vmul.f32 %v2070, %v731
        %v2074 = vpack.c.bf16 %v2073, %v2072
        %v2075 = vrot.slane %v2066, 4
        %v2076 = vrot.slane %v2067, 4
        %v2077 = vsel %vm737, %v2075, %v2076
        %v2078 = vsel %vm737, %v2076, %v2075
        %v2079 = vmul.f32 %v2078, %v741
        %v2080 = vmul.f32 %v2077, %v742
        %v2081 = vpack.c.bf16 %v2080, %v2079
        %v2082 = vrot.slane %v2066, 5
        %v2083 = vrot.slane %v2067, 5
        %v2084 = vsel %vm748, %v2082, %v2083
        %v2085 = vsel %vm748, %v2083, %v2082
        %v2086 = vmul.f32 %v2085, %v752
        %v2087 = vmul.f32 %v2084, %v753
        %v2088 = vpack.c.bf16 %v2087, %v2086
        %v2089 = vrot.slane %v2066, 7
        %v2090 = vrot.slane %v2067, 7
        %v2091 = vsel %vm759, %v2089, %v2090
        %v2092 = vsel %vm759, %v2090, %v2089
        %v2093 = vmul.f32 %v2092, %v763
        %v2094 = vmul.f32 %v2091, %v764
        %v2095 = vpack.c.bf16 %v2094, %v2093
        %v2096 = vpack.c.bf16 %v2067, %v2066
        %v2097 = vrot.slane %v2066, 1
        %v2098 = vrot.slane %v2067, 1
        %v2099 = vsel %vm641, %v2097, %v2098
        %v2100 = vsel %vm641, %v2098, %v2097
        %v2101 = vmul.f32 %v2099, %v774
        %v2102 = vmul.f32 %v2100, %v775
        %v2103 = vpack.c.bf16 %v2102, %v2101
        %v2104 = vmul.f32 %v2070, %v780
        %v2105 = vmul.f32 %v2071, %v781
        %v2106 = vpack.c.bf16 %v2105, %v2104
        %v2107 = vmul.f32 %v2077, %v786
        %v2108 = vmul.f32 %v2078, %v787
        %v2109 = vpack.c.bf16 %v2108, %v2107
        %v2110 = vmul.f32 %v2084, %v792
        %v2111 = vmul.f32 %v2085, %v793
        %v2112 = vpack.c.bf16 %v2111, %v2110
        %2114 = vrot.lane.b32.xlu0 %v2081, 32
        %v2115 = vpop.permute.xlu0 %2114
        %2117 = vrot.lane.b32.xlu0 %v2088, 64
        %v2118 = vpop.permute.xlu0 %2117
        %2120 = vrot.lane.b32.xlu0 %v2095, 96
        %v2121 = vpop.permute.xlu0 %2120
        %2123 = vrot.lane.b32.xlu0 %v2103, 32
        %v2124 = vpop.permute.xlu0 %2123
        %2126 = vrot.lane.b32.xlu0 %v2106, 64
        %v2127 = vpop.permute.xlu0 %2126
        %2129 = vrot.lane.b32.xlu0 %v2109, 96
        %v2130 = vpop.permute.xlu0 %2129
        %v2133 = vsel %vm815, %v2074, %v2115
        %v2135 = vsel %vm677, %v2133, %v2118
        %v2137 = vsel %vm821, %v2135, %v2121
        %v2141 = vsel %vm815, %v2096, %v2124
        %v2143 = vsel %vm677, %v2141, %v2127
        %v2145 = vsel %vm821, %v2143, %v2130
        %s2147 = scalar_lea.vmem %s5, 576
        %v2148 = vld [vmem:[%s2147] sm:$0xf]
        %v2149 = vld [vmem:[%s2147 + $0x4] sm:$0xf]
        %v2150 = vld [vmem:[%s2147 + $0x8] sm:$0xf]
        %v2151 = vld [vmem:[%s2147 + $0xc] sm:$0xf]
        %v2152 = vld [vmem:[%s2147 + $0x10] sm:$0xf]
        %v2153 = vld [vmem:[%s2147 + $0x14] sm:$0xf]
        %v2154 = vld [vmem:[%s2147 + $0x18] sm:$0xf]
        %v2155 = vld [vmem:[%s2147 + $0x1c] sm:$0xf]
        %v2156 = vld [vmem:[%s2147 + $0x20] sm:$0xf]
        %v2157 = vld [vmem:[%s2147 + $0x24] sm:$0xf]
        %v2158 = vld [vmem:[%s2147 + $0x28] sm:$0xf]
        %v2159 = vld [vmem:[%s2147 + $0x2c] sm:$0xf]
        %v2160 = vld [vmem:[%s2147 + $0x30] sm:$0xf]
        %v2161 = vld [vmem:[%s2147 + $0x34] sm:$0xf]
        %v2162 = vld [vmem:[%s2147 + $0x38] sm:$0xf]
        %v2163 = vld [vmem:[%s2147 + $0x3c] sm:$0xf]
        %v2164 = vld [vmem:[%s2147 + $0x40] sm:$0xf]
        %v2165 = vld [vmem:[%s2147 + $0x44] sm:$0xf]
        %v2166 = vld [vmem:[%s2147 + $0x48] sm:$0xf]
        %v2167 = vld [vmem:[%s2147 + $0x4c] sm:$0xf]
        %v2168 = vld [vmem:[%s2147 + $0x50] sm:$0xf]
        %v2169 = vld [vmem:[%s2147 + $0x54] sm:$0xf]
        %v2170 = vld [vmem:[%s2147 + $0x58] sm:$0xf]
        %v2171 = vld [vmem:[%s2147 + $0x5c] sm:$0xf]
        %v2172 = vld [vmem:[%s2147 + $0x60] sm:$0xf]
        %v2173 = vld [vmem:[%s2147 + $0x64] sm:$0xf]
        %v2174 = vld [vmem:[%s2147 + $0x68] sm:$0xf]
        %v2175 = vld [vmem:[%s2147 + $0x6c] sm:$0xf]
        %v2176 = vld [vmem:[%s2147 + $0x70] sm:$0xf]
        %v2177 = vld [vmem:[%s2147 + $0x74] sm:$0xf]
        %v2178 = vld [vmem:[%s2147 + $0x78] sm:$0xf]
        %v2179 = vld [vmem:[%s2147 + $0x7c] sm:$0xf]
        %v2180 = vld [vmem:[%s2147 + $0x80] sm:$0xf]
        %v2181 = vld [vmem:[%s2147 + $0x84] sm:$0xf]
        %v2182 = vld [vmem:[%s2147 + $0x88] sm:$0xf]
        %v2183 = vld [vmem:[%s2147 + $0x8c] sm:$0xf]
        %s2184 = scalar_lea.vmem %s6, 4
        %v2185 = vld [vmem:[%s2184] sm:$0x1]
        %v2187 = vlaneseq
        %v2188 = vshrl.u32 %v2187, 7
        %v2189 = vsub.s32 0, %v2188
        %v2190 = vrot.slane %v2185, %v2189
        %v2228 = vunpack.c.l.b16 %v2148
        %v2229 = vunpack.c.l.b16 %v2149
        %v2230 = vunpack.c.l.b16 %v2150
        %v2231 = vunpack.c.l.b16 %v2151
        %v2232 = vunpack.c.l.b16 %v2152
        %v2233 = vunpack.c.l.b16 %v2153
        %v2234 = vunpack.c.l.b16 %v2154
        %v2235 = vunpack.c.l.b16 %v2155
        %v2236 = vunpack.c.l.b16 %v2156
        %v2237 = vunpack.c.l.b16 %v2157
        %v2238 = vunpack.c.l.b16 %v2158
        %v2239 = vunpack.c.l.b16 %v2159
        %v2240 = vunpack.c.l.b16 %v2160
        %v2241 = vunpack.c.l.b16 %v2161
        %v2242 = vunpack.c.l.b16 %v2162
        %v2243 = vunpack.c.l.b16 %v2163
        %v2244 = vunpack.c.l.b16 %v2164
        %v2245 = vunpack.c.l.b16 %v2165
        %v2246 = vunpack.c.l.b16 %v2166
        %v2247 = vunpack.c.l.b16 %v2167
        %v2248 = vunpack.c.l.b16 %v2168
        %v2249 = vunpack.c.l.b16 %v2169
        %v2250 = vunpack.c.l.b16 %v2170
        %v2251 = vunpack.c.l.b16 %v2171
        %v2252 = vunpack.c.l.b16 %v2172
        %v2253 = vunpack.c.l.b16 %v2173
        %v2254 = vunpack.c.l.b16 %v2174
        %v2255 = vunpack.c.l.b16 %v2175
        %v2256 = vunpack.c.l.b16 %v2176
        %v2257 = vunpack.c.l.b16 %v2177
        %v2258 = vunpack.c.l.b16 %v2178
        %v2259 = vunpack.c.l.b16 %v2179
        %v2260 = vunpack.c.l.b16 %v2180
        %v2261 = vunpack.c.l.b16 %v2181
        %v2262 = vunpack.c.l.b16 %v2182
        %v2263 = vunpack.c.l.b16 %v2183
        %v2264 = vpack.c.b16 %v2229, %v2228
        %v2265 = vpack.c.b16 %v2231, %v2230
        %v2266 = vpack.c.b16 %v2233, %v2232
        %v2267 = vpack.c.b16 %v2235, %v2234
        %v2268 = vpack.c.b16 %v2237, %v2236
        %v2269 = vpack.c.b16 %v2239, %v2238
        %v2270 = vpack.c.b16 %v2241, %v2240
        %v2271 = vpack.c.b16 %v2243, %v2242
        %v2272 = vpack.c.b16 %v2245, %v2244
        %v2273 = vpack.c.b16 %v2247, %v2246
        %v2274 = vpack.c.b16 %v2249, %v2248
        %v2275 = vpack.c.b16 %v2251, %v2250
        %v2276 = vpack.c.b16 %v2253, %v2252
        %v2277 = vpack.c.b16 %v2255, %v2254
        %v2278 = vpack.c.b16 %v2257, %v2256
        %v2279 = vpack.c.b16 %v2259, %v2258
        %v2280 = vpack.c.b16 %v2261, %v2260
        %v2281 = vpack.c.b16 %v2263, %v2262
        %v2301 = vsel %vm815, %v2112, 0
        %2303 = vmatprep.subr.bf16.mxu0 0
        %2304 = vmatpush1.bf16.msra.mxu0 %v2264
        %2305 = vmatprep.subr.bf16.mxu0 0
        %2306 = vmatpush1.bf16.msra.mxu0 %v2265
        %2307 = vmatprep.subr.bf16.mxu0 0
        %2308 = vmatpush1.bf16.msra.mxu0 %v2266
        %2309 = vmatprep.subr.bf16.mxu0 0
        %2310 = vmatpush1.bf16.msra.mxu0 %v2267
        %2311 = vmatprep.subr.bf16.mxu0 0
        %2312 = vmatpush1.bf16.msra.mxu0 %v2268
        %2313 = vmatprep.subr.bf16.mxu0 0
        %2314 = vmatpush1.bf16.msra.mxu0 %v2269
        %2315 = vmatprep.subr.bf16.mxu0 0
        %2316 = vmatpush1.bf16.msra.mxu0 %v2270
        %2317 = vmatprep.subr.bf16.mxu0 0
        %2318 = vmatpush1.bf16.msra.mxu0 %v2271
        %2319 = vmatprep.subr.bf16.mxu0 0
        %2320 = vmatpush1.bf16.msra.mxu0 %v2272
        %2321 = vmatprep.subr.bf16.mxu0 0
        %2322 = vmatpush1.bf16.msra.mxu0 %v2273
        %2323 = vmatprep.subr.bf16.mxu0 0
        %2324 = vmatpush1.bf16.msra.mxu0 %v2274
        %2325 = vmatprep.subr.bf16.mxu0 0
        %2326 = vmatpush1.bf16.msra.mxu0 %v2275
        %2327 = vmatprep.subr.bf16.mxu0 0
        %2328 = vmatpush1.bf16.msra.mxu0 %v2276
        %2329 = vmatprep.subr.bf16.mxu0 0
        %2330 = vmatpush1.bf16.msra.mxu0 %v2277
        %2331 = vmatprep.subr.bf16.mxu0 0
        %2332 = vmatpush1.bf16.msra.mxu0 %v2278
        %2333 = vmatprep.subr.bf16.mxu0 0
        %2334 = vmatpush1.bf16.msra.mxu0 %v2279
        %2335 = vmatprep.mubr.bf16.mxu0 %v2145
        %2336 = vmatmul.mubr.bf16.gmra.mrb[0].mxu0 %v2137
        %v2337 = vpop.f32.mrb[0].mxu0
        %v2338 = vadd.f32 %v2190, %v2337
        %v2339 = vpop.f32.mrb[0].mxu0
        %v2340 = vpop.f32.mrb[0].mxu0
        %v2341 = vadd.f32 %v2190, %v2340
        %v2342 = vpop.f32.mrb[0].mxu0
        %2343 = vdwg.mxu0
        %2344 = vmatprep.subr.bf16.mxu0 0
        %2345 = vmatpush1.bf16.msra.mxu0 %v2280
        %2346 = vmatprep.subr.bf16.mxu0 0
        %2347 = vmatpush1.bf16.msra.mxu0 %v2281
        %2348 = vmatprep.subr.bf16.mxu0 0
        %2349 = vmatpush1.bf16.msra.mxu0 0
        %2350 = vmatprep.subr.bf16.mxu0 0
        %2351 = vmatpush1.bf16.msra.mxu0 0
        %2352 = vmatprep.subr.bf16.mxu0 0
        %2353 = vmatpush1.bf16.msra.mxu0 0
        %2354 = vmatprep.subr.bf16.mxu0 0
        %2355 = vmatpush1.bf16.msra.mxu0 0
        %2356 = vmatprep.subr.bf16.mxu0 0
        %2357 = vmatpush1.bf16.msra.mxu0 0
        %2358 = vmatprep.subr.bf16.mxu0 0
        %2359 = vmatpush1.bf16.msra.mxu0 0
        %2360 = vmatprep.subr.bf16.mxu0 0
        %2361 = vmatpush1.bf16.msra.mxu0 0
        %2362 = vmatprep.subr.bf16.mxu0 0
        %2363 = vmatpush1.bf16.msra.mxu0 0
        %2364 = vmatprep.subr.bf16.mxu0 0
        %2365 = vmatpush1.bf16.msra.mxu0 0
        %2366 = vmatprep.subr.bf16.mxu0 0
        %2367 = vmatpush1.bf16.msra.mxu0 0
        %2368 = vmatprep.subr.bf16.mxu0 0
        %2369 = vmatpush1.bf16.msra.mxu0 0
        %2370 = vmatprep.subr.bf16.mxu0 0
        %2371 = vmatpush1.bf16.msra.mxu0 0
        %2372 = vmatprep.subr.bf16.mxu0 0
        %2373 = vmatpush1.bf16.msra.mxu0 0
        %2374 = vmatprep.subr.bf16.mxu0 0
        %2375 = vmatpush1.bf16.msra.mxu0 0
        %2376 = vmatprep.mubr.bf16.mxu0 0
        %2377 = vmatmul.mubr.bf16.gmra.mrb[0].mxu0 %v2301
        %v2378 = vpop.f32.mrb[0].mxu0
        %v2379 = vadd.f32 %v2338, %v2378
        %v2380 = vpop.f32.mrb[0].mxu0
        %v2381 = vpop.f32.mrb[0].mxu0
        %v2382 = vadd.f32 %v2341, %v2381
        %v2383 = vpop.f32.mrb[0].mxu0
        %2384 = vdwg.mxu0
        %v2385 = vmax.f32 %v2379, 0.0
        %v2386 = vmax.f32 %v2382, 0.0
        %s2387 = sld [smem:[#allocation2 + $0x8]]
        %v2388 = vstv %s2387
        %v2389 = vmul.f32 %v2388, %v2066
        %v2390 = vmul.f32 %v2388, %v2067
        %s2391 = sld [smem:[#allocation2 + $0x9]]
        %v2392 = vstv %s2391
        %v2393 = vmul.f32 %v2392, %v2385
        %v2394 = vmul.f32 %v2392, %v2386
        %v2395 = vadd.f32 %v2389, %v2393
        %v2396 = vadd.f32 %v2390, %v2394
        %v2397 = vpack.c.bf16 %v2396, %v2395
        %v2398 = vld [vmem:[%s8] sm:$0xf]
        %v2399 = vld [vmem:[%s8 + $0x4] sm:$0xf]
        %v2400 = vld [vmem:[%s8 + $0x8] sm:$0xf]
        %v2401 = vld [vmem:[%s8 + $0xc] sm:$0xf]
        %v2402 = vld [vmem:[%s9] sm:$0x1]
        %v2404 = vlaneseq
        %v2405 = vshrl.u32 %v2404, 7
        %v2406 = vsub.s32 0, %v2405
        %v2407 = vrot.slane %v2402, %v2406
        %v2413 = vunpack.c.l.b16 %v2398
        %v2414 = vunpack.c.l.b16 %v2399
        %v2415 = vunpack.c.l.b16 %v2400
        %v2416 = vunpack.c.l.b16 %v2401
        %v2417 = vpack.c.b16 %v2414, %v2413
        %v2418 = vpack.c.b16 %v2416, %v2415
        %v2422 = vsel %vm815, %v2397, 0
        %2424 = vmatprep.subr.bf16.mxu0 0
        %2425 = vmatpush1.bf16.msra.mxu0 %v2417
        %2426 = vmatprep.subr.bf16.mxu0 0
        %2427 = vmatpush1.bf16.msra.mxu0 %v2418
        %2428 = vmatprep.subr.bf16.mxu0 0
        %2429 = vmatpush1.bf16.msra.mxu0 0
        %2430 = vmatprep.subr.bf16.mxu0 0
        %2431 = vmatpush1.bf16.msra.mxu0 0
        %2432 = vmatprep.subr.bf16.mxu0 0
        %2433 = vmatpush1.bf16.msra.mxu0 0
        %2434 = vmatprep.subr.bf16.mxu0 0
        %2435 = vmatpush1.bf16.msra.mxu0 0
        %2436 = vmatprep.subr.bf16.mxu0 0
        %2437 = vmatpush1.bf16.msra.mxu0 0
        %2438 = vmatprep.subr.bf16.mxu0 0
        %2439 = vmatpush1.bf16.msra.mxu0 0
        %2440 = vmatprep.subr.bf16.mxu0 0
        %2441 = vmatpush1.bf16.msra.mxu0 0
        %2442 = vmatprep.subr.bf16.mxu0 0
        %2443 = vmatpush1.bf16.msra.mxu0 0
        %2444 = vmatprep.subr.bf16.mxu0 0
        %2445 = vmatpush1.bf16.msra.mxu0 0
        %2446 = vmatprep.subr.bf16.mxu0 0
        %2447 = vmatpush1.bf16.msra.mxu0 0
        %2448 = vmatprep.subr.bf16.mxu0 0
        %2449 = vmatpush1.bf16.msra.mxu0 0
        %2450 = vmatprep.subr.bf16.mxu0 0
        %2451 = vmatpush1.bf16.msra.mxu0 0
        %2452 = vmatprep.subr.bf16.mxu0 0
        %2453 = vmatpush1.bf16.msra.mxu0 0
        %2454 = vmatprep.subr.bf16.mxu0 0
        %2455 = vmatpush1.bf16.msra.mxu0 0
        %2456 = vmatprep.mubr.bf16.mxu0 0
        %2457 = vmatmul.mubr.bf16.gmra.mrb[0].mxu0 %v2422
        %v2458 = vpop.f32.mrb[0].mxu0
        %v2459 = vadd.f32 %v2407, %v2458
        %v2460 = vpop.f32.mrb[0].mxu0
        %v2461 = vpop.f32.mrb[0].mxu0
        %v2462 = vadd.f32 %v2407, %v2461
        %v2463 = vpop.f32.mrb[0].mxu0
        %2464 = vdwg.mxu0
        %v2465 = vmul.f32 %v2459, 0.5
        %v2466 = vmul.f32 %v2462, 0.5
        %v2467 = vsel %vm724, %v2465, %v2459
        %v2468 = vsel %vm724, %v2466, %v2462
        %v2469 = vtanh.pop %v2467
        %v2470 = vtanh.pop %v2468
        %v2471 = vmul.f32 %v2469, 0.5
        %v2472 = vmul.f32 %v2470, 0.5
        %v2473 = vadd.f32 %v2471, 0.5
        %v2474 = vadd.f32 %v2472, 0.5
        %v2475 = vsel %vm724, %v2473, %v2469
        %v2476 = vsel %vm724, %v2474, %v2470
        %2477 = vst [vmem:[%s365] sm:$0xff] %v2475
        %2478 = vst [vmem:[%s365 + $0x8] sm:$0xff] %v2476
        %v2479 = vrot.slane %v2395, 3
        %v2480 = vrot.slane %v2396, 3
        %v2481 = vsel %vm727, %v2479, %v2480
        %v2482 = vsel %vm727, %v2480, %v2479
        %v2483 = vld [vmem:[%s4] sm:$0xff]
        %v2484 = vld [vmem:[%s4 + $0x8] sm:$0xff]
        %v2485 = vmul.f32 %v2482, %v2483
        %v2486 = vmul.f32 %v2481, %v2484
        %v2487 = vpack.c.bf16 %v2486, %v2485
        %v2488 = vrot.slane %v2395, 4
        %v2489 = vrot.slane %v2396, 4
        %v2490 = vsel %vm737, %v2488, %v2489
        %v2491 = vsel %vm737, %v2489, %v2488
        %v2492 = vld [vmem:[%s740] sm:$0xff]
        %v2493 = vld [vmem:[%s740 + $0x8] sm:$0xff]
        %v2494 = vmul.f32 %v2491, %v2492
        %v2495 = vmul.f32 %v2490, %v2493
        %v2496 = vpack.c.bf16 %v2495, %v2494
        %v2497 = vrot.slane %v2395, 5
        %v2498 = vrot.slane %v2396, 5
        %v2499 = vsel %vm748, %v2497, %v2498
        %v2500 = vsel %vm748, %v2498, %v2497
        %v2501 = vld [vmem:[%s751] sm:$0xff]
        %v2502 = vld [vmem:[%s751 + $0x8] sm:$0xff]
        %v2503 = vmul.f32 %v2500, %v2501
        %v2504 = vmul.f32 %v2499, %v2502
        %v2505 = vpack.c.bf16 %v2504, %v2503
        %v2506 = vrot.slane %v2395, 7
        %v2507 = vrot.slane %v2396, 7
        %v2508 = vsel %vm759, %v2506, %v2507
        %v2509 = vsel %vm759, %v2507, %v2506
        %v2510 = vld [vmem:[%s762] sm:$0xff]
        %v2511 = vld [vmem:[%s762 + $0x8] sm:$0xff]
        %v2512 = vmul.f32 %v2509, %v2510
        %v2513 = vmul.f32 %v2508, %v2511
        %v2514 = vpack.c.bf16 %v2513, %v2512
        %v2515 = vrot.slane %v2395, 1
        %v2516 = vrot.slane %v2396, 1
        %v2517 = vsel %vm641, %v2515, %v2516
        %v2518 = vsel %vm641, %v2516, %v2515
        %v2519 = vld [vmem:[%s773] sm:$0xff]
        %v2520 = vld [vmem:[%s773 + $0x8] sm:$0xff]
        %v2521 = vmul.f32 %v2517, %v2519
        %v2522 = vmul.f32 %v2518, %v2520
        %v2523 = vpack.c.bf16 %v2522, %v2521
        %v2524 = vld [vmem:[%s779] sm:$0xff]
        %v2525 = vld [vmem:[%s779 + $0x8] sm:$0xff]
        %v2526 = vmul.f32 %v2481, %v2524
        %v2527 = vmul.f32 %v2482, %v2525
        %v2528 = vpack.c.bf16 %v2527, %v2526
        %v2529 = vld [vmem:[%s785] sm:$0xff]
        %v2530 = vld [vmem:[%s785 + $0x8] sm:$0xff]
        %v2531 = vmul.f32 %v2490, %v2529
        %v2532 = vmul.f32 %v2491, %v2530
        %v2533 = vpack.c.bf16 %v2532, %v2531
        %v2534 = vld [vmem:[%s791] sm:$0xff]
        %v2535 = vld [vmem:[%s791 + $0x8] sm:$0xff]
        %v2536 = vmul.f32 %v2499, %v2534
        %v2537 = vmul.f32 %v2500, %v2535
        %v2538 = vpack.c.bf16 %v2537, %v2536
        %2540 = vrot.lane.b32.xlu0 %v2496, 32
        %v2541 = vpop.permute.xlu0 %2540
        %2543 = vrot.lane.b32.xlu0 %v2505, 64
        %v2544 = vpop.permute.xlu0 %2543
        %2546 = vrot.lane.b32.xlu0 %v2514, 96
        %v2547 = vpop.permute.xlu0 %2546
        %2549 = vrot.lane.b32.xlu0 %v2523, 32
        %v2550 = vpop.permute.xlu0 %2549
        %2552 = vrot.lane.b32.xlu0 %v2528, 64
        %v2553 = vpop.permute.xlu0 %2552
        %2555 = vrot.lane.b32.xlu0 %v2533, 96
        %v2556 = vpop.permute.xlu0 %2555
        %v2559 = vsel %vm815, %v2487, %v2541
        %v2561 = vsel %vm677, %v2559, %v2544
        %v2563 = vsel %vm821, %v2561, %v2547
        %v2566 = vsel %vm815, %v2397, %v2550
        %v2568 = vsel %vm677, %v2566, %v2553
        %v2570 = vsel %vm821, %v2568, %v2556
        %s2572 = scalar_lea.vmem %s5, 720
        %v2573 = vld [vmem:[%s2572] sm:$0xf]
        %v2574 = vld [vmem:[%s2572 + $0x4] sm:$0xf]
        %v2575 = vld [vmem:[%s2572 + $0x8] sm:$0xf]
        %v2576 = vld [vmem:[%s2572 + $0xc] sm:$0xf]
        %v2577 = vld [vmem:[%s2572 + $0x10] sm:$0xf]
        %v2578 = vld [vmem:[%s2572 + $0x14] sm:$0xf]
        %v2579 = vld [vmem:[%s2572 + $0x18] sm:$0xf]
        %v2580 = vld [vmem:[%s2572 + $0x1c] sm:$0xf]
        %v2581 = vld [vmem:[%s2572 + $0x20] sm:$0xf]
        %v2582 = vld [vmem:[%s2572 + $0x24] sm:$0xf]
        %v2583 = vld [vmem:[%s2572 + $0x28] sm:$0xf]
        %v2584 = vld [vmem:[%s2572 + $0x2c] sm:$0xf]
        %v2585 = vld [vmem:[%s2572 + $0x30] sm:$0xf]
        %v2586 = vld [vmem:[%s2572 + $0x34] sm:$0xf]
        %v2587 = vld [vmem:[%s2572 + $0x38] sm:$0xf]
        %v2588 = vld [vmem:[%s2572 + $0x3c] sm:$0xf]
        %v2589 = vld [vmem:[%s2572 + $0x40] sm:$0xf]
        %v2590 = vld [vmem:[%s2572 + $0x44] sm:$0xf]
        %v2591 = vld [vmem:[%s2572 + $0x48] sm:$0xf]
        %v2592 = vld [vmem:[%s2572 + $0x4c] sm:$0xf]
        %v2593 = vld [vmem:[%s2572 + $0x50] sm:$0xf]
        %v2594 = vld [vmem:[%s2572 + $0x54] sm:$0xf]
        %v2595 = vld [vmem:[%s2572 + $0x58] sm:$0xf]
        %v2596 = vld [vmem:[%s2572 + $0x5c] sm:$0xf]
        %v2597 = vld [vmem:[%s2572 + $0x60] sm:$0xf]
        %v2598 = vld [vmem:[%s2572 + $0x64] sm:$0xf]
        %v2599 = vld [vmem:[%s2572 + $0x68] sm:$0xf]
        %v2600 = vld [vmem:[%s2572 + $0x6c] sm:$0xf]
        %v2601 = vld [vmem:[%s2572 + $0x70] sm:$0xf]
        %v2602 = vld [vmem:[%s2572 + $0x74] sm:$0xf]
        %v2603 = vld [vmem:[%s2572 + $0x78] sm:$0xf]
        %v2604 = vld [vmem:[%s2572 + $0x7c] sm:$0xf]
        %v2605 = vld [vmem:[%s2572 + $0x80] sm:$0xf]
        %v2606 = vld [vmem:[%s2572 + $0x84] sm:$0xf]
        %v2607 = vld [vmem:[%s2572 + $0x88] sm:$0xf]
        %v2608 = vld [vmem:[%s2572 + $0x8c] sm:$0xf]
        %s2609 = scalar_lea.vmem %s6, 5
        %v2610 = vld [vmem:[%s2609] sm:$0x1]
        %v2612 = vlaneseq
        %v2613 = vshrl.u32 %v2612, 7
        %v2614 = vsub.s32 0, %v2613
        %v2615 = vrot.slane %v2610, %v2614
        %v2653 = vunpack.c.l.b16 %v2573
        %v2654 = vunpack.c.l.b16 %v2574
        %v2655 = vunpack.c.l.b16 %v2575
        %v2656 = vunpack.c.l.b16 %v2576
        %v2657 = vunpack.c.l.b16 %v2577
        %v2658 = vunpack.c.l.b16 %v2578
        %v2659 = vunpack.c.l.b16 %v2579
        %v2660 = vunpack.c.l.b16 %v2580
        %v2661 = vunpack.c.l.b16 %v2581
        %v2662 = vunpack.c.l.b16 %v2582
        %v2663 = vunpack.c.l.b16 %v2583
        %v2664 = vunpack.c.l.b16 %v2584
        %v2665 = vunpack.c.l.b16 %v2585
        %v2666 = vunpack.c.l.b16 %v2586
        %v2667 = vunpack.c.l.b16 %v2587
        %v2668 = vunpack.c.l.b16 %v2588
        %v2669 = vunpack.c.l.b16 %v2589
        %v2670 = vunpack.c.l.b16 %v2590
        %v2671 = vunpack.c.l.b16 %v2591
        %v2672 = vunpack.c.l.b16 %v2592
        %v2673 = vunpack.c.l.b16 %v2593
        %v2674 = vunpack.c.l.b16 %v2594
        %v2675 = vunpack.c.l.b16 %v2595
        %v2676 = vunpack.c.l.b16 %v2596
        %v2677 = vunpack.c.l.b16 %v2597
        %v2678 = vunpack.c.l.b16 %v2598
        %v2679 = vunpack.c.l.b16 %v2599
        %v2680 = vunpack.c.l.b16 %v2600
        %v2681 = vunpack.c.l.b16 %v2601
        %v2682 = vunpack.c.l.b16 %v2602
        %v2683 = vunpack.c.l.b16 %v2603
        %v2684 = vunpack.c.l.b16 %v2604
        %v2685 = vunpack.c.l.b16 %v2605
        %v2686 = vunpack.c.l.b16 %v2606
        %v2687 = vunpack.c.l.b16 %v2607
        %v2688 = vunpack.c.l.b16 %v2608
        %v2689 = vpack.c.b16 %v2654, %v2653
        %v2690 = vpack.c.b16 %v2656, %v2655
        %v2691 = vpack.c.b16 %v2658, %v2657
        %v2692 = vpack.c.b16 %v2660, %v2659
        %v2693 = vpack.c.b16 %v2662, %v2661
        %v2694 = vpack.c.b16 %v2664, %v2663
        %v2695 = vpack.c.b16 %v2666, %v2665
        %v2696 = vpack.c.b16 %v2668, %v2667
        %v2697 = vpack.c.b16 %v2670, %v2669
        %v2698 = vpack.c.b16 %v2672, %v2671
        %v2699 = vpack.c.b16 %v2674, %v2673
        %v2700 = vpack.c.b16 %v2676, %v2675
        %v2701 = vpack.c.b16 %v2678, %v2677
        %v2702 = vpack.c.b16 %v2680, %v2679
        %v2703 = vpack.c.b16 %v2682, %v2681
        %v2704 = vpack.c.b16 %v2684, %v2683
        %v2705 = vpack.c.b16 %v2686, %v2685
        %v2706 = vpack.c.b16 %v2688, %v2687
        %v2726 = vsel %vm815, %v2538, 0
        %2728 = vmatprep.subr.bf16.mxu0 0
        %2729 = vmatpush1.bf16.msra.mxu0 %v2689
        %2730 = vmatprep.subr.bf16.mxu0 0
        %2731 = vmatpush1.bf16.msra.mxu0 %v2690
        %2732 = vmatprep.subr.bf16.mxu0 0
        %2733 = vmatpush1.bf16.msra.mxu0 %v2691
        %2734 = vmatprep.subr.bf16.mxu0 0
        %2735 = vmatpush1.bf16.msra.mxu0 %v2692
        %2736 = vmatprep.subr.bf16.mxu0 0
        %2737 = vmatpush1.bf16.msra.mxu0 %v2693
        %2738 = vmatprep.subr.bf16.mxu0 0
        %2739 = vmatpush1.bf16.msra.mxu0 %v2694
        %2740 = vmatprep.subr.bf16.mxu0 0
        %2741 = vmatpush1.bf16.msra.mxu0 %v2695
        %2742 = vmatprep.subr.bf16.mxu0 0
        %2743 = vmatpush1.bf16.msra.mxu0 %v2696
        %2744 = vmatprep.subr.bf16.mxu0 0
        %2745 = vmatpush1.bf16.msra.mxu0 %v2697
        %2746 = vmatprep.subr.bf16.mxu0 0
        %2747 = vmatpush1.bf16.msra.mxu0 %v2698
        %2748 = vmatprep.subr.bf16.mxu0 0
        %2749 = vmatpush1.bf16.msra.mxu0 %v2699
        %2750 = vmatprep.subr.bf16.mxu0 0
        %2751 = vmatpush1.bf16.msra.mxu0 %v2700
        %2752 = vmatprep.subr.bf16.mxu0 0
        %2753 = vmatpush1.bf16.msra.mxu0 %v2701
        %2754 = vmatprep.subr.bf16.mxu0 0
        %2755 = vmatpush1.bf16.msra.mxu0 %v2702
        %2756 = vmatprep.subr.bf16.mxu0 0
        %2757 = vmatpush1.bf16.msra.mxu0 %v2703
        %2758 = vmatprep.subr.bf16.mxu0 0
        %2759 = vmatpush1.bf16.msra.mxu0 %v2704
        %2760 = vmatprep.mubr.bf16.mxu0 %v2570
        %2761 = vmatmul.mubr.bf16.gmra.mrb[0].mxu0 %v2563
        %v2762 = vpop.f32.mrb[0].mxu0
        %v2763 = vadd.f32 %v2615, %v2762
        %v2764 = vpop.f32.mrb[0].mxu0
        %v2765 = vpop.f32.mrb[0].mxu0
        %v2766 = vadd.f32 %v2615, %v2765
        %v2767 = vpop.f32.mrb[0].mxu0
        %2768 = vdwg.mxu0
        %2769 = vmatprep.subr.bf16.mxu0 0
        %2770 = vmatpush1.bf16.msra.mxu0 %v2705
        %2771 = vmatprep.subr.bf16.mxu0 0
        %2772 = vmatpush1.bf16.msra.mxu0 %v2706
        %2773 = vmatprep.subr.bf16.mxu0 0
        %2774 = vmatpush1.bf16.msra.mxu0 0
        %2775 = vmatprep.subr.bf16.mxu0 0
        %2776 = vmatpush1.bf16.msra.mxu0 0
        %2777 = vmatprep.subr.bf16.mxu0 0
        %2778 = vmatpush1.bf16.msra.mxu0 0
        %2779 = vmatprep.subr.bf16.mxu0 0
        %2780 = vmatpush1.bf16.msra.mxu0 0
        %2781 = vmatprep.subr.bf16.mxu0 0
        %2782 = vmatpush1.bf16.msra.mxu0 0
        %2783 = vmatprep.subr.bf16.mxu0 0
        %2784 = vmatpush1.bf16.msra.mxu0 0
        %2785 = vmatprep.subr.bf16.mxu0 0
        %2786 = vmatpush1.bf16.msra.mxu0 0
        %2787 = vmatprep.subr.bf16.mxu0 0
        %2788 = vmatpush1.bf16.msra.mxu0 0
        %2789 = vmatprep.subr.bf16.mxu0 0
        %2790 = vmatpush1.bf16.msra.mxu0 0
        %2791 = vmatprep.subr.bf16.mxu0 0
        %2792 = vmatpush1.bf16.msra.mxu0 0
        %2793 = vmatprep.subr.bf16.mxu0 0
        %2794 = vmatpush1.bf16.msra.mxu0 0
        %2795 = vmatprep.subr.bf16.mxu0 0
        %2796 = vmatpush1.bf16.msra.mxu0 0
        %2797 = vmatprep.subr.bf16.mxu0 0
        %2798 = vmatpush1.bf16.msra.mxu0 0
        %2799 = vmatprep.subr.bf16.mxu0 0
        %2800 = vmatpush1.bf16.msra.mxu0 0
        %2801 = vmatprep.mubr.bf16.mxu0 0
        %2802 = vmatmul.mubr.bf16.gmra.mrb[0].mxu0 %v2726
        %v2803 = vpop.f32.mrb[0].mxu0
        %v2804 = vadd.f32 %v2763, %v2803
        %v2805 = vpop.f32.mrb[0].mxu0
        %v2806 = vpop.f32.mrb[0].mxu0
        %v2807 = vadd.f32 %v2766, %v2806
        %v2808 = vpop.f32.mrb[0].mxu0
        %2809 = vdwg.mxu0
        %v2810 = vmax.f32 %v2804, 0.0
        %v2811 = vmax.f32 %v2807, 0.0
        %s2812 = sld [smem:[#allocation2 + $0xa]]
        %v2813 = vstv %s2812
        %v2814 = vmul.f32 %v2813, %v2395
        %v2815 = vmul.f32 %v2813, %v2396
        %s2816 = sld [smem:[#allocation2 + $0xb]]
        %v2817 = vstv %s2816
        %v2818 = vmul.f32 %v2817, %v2810
        %v2819 = vmul.f32 %v2817, %v2811
        %v2820 = vadd.f32 %v2814, %v2818
        %v2821 = vadd.f32 %v2815, %v2819
        %v2822 = vrot.slane %v2820, 3
        %v2823 = vrot.slane %v2821, 3
        %v2824 = vsel %vm727, %v2822, %v2823
        %v2825 = vsel %vm727, %v2823, %v2822
        %v2826 = vmul.f32 %v2825, %v2483
        %v2827 = vmul.f32 %v2824, %v2484
        %v2828 = vpack.c.bf16 %v2827, %v2826
        %v2829 = vrot.slane %v2820, 4
        %v2830 = vrot.slane %v2821, 4
        %v2831 = vsel %vm737, %v2829, %v2830
        %v2832 = vsel %vm737, %v2830, %v2829
        %v2833 = vmul.f32 %v2832, %v2492
        %v2834 = vmul.f32 %v2831, %v2493
        %v2835 = vpack.c.bf16 %v2834, %v2833
        %v2836 = vrot.slane %v2820, 5
        %v2837 = vrot.slane %v2821, 5
        %v2838 = vsel %vm748, %v2836, %v2837
        %v2839 = vsel %vm748, %v2837, %v2836
        %v2840 = vmul.f32 %v2839, %v2501
        %v2841 = vmul.f32 %v2838, %v2502
        %v2842 = vpack.c.bf16 %v2841, %v2840
        %v2843 = vrot.slane %v2820, 7
        %v2844 = vrot.slane %v2821, 7
        %v2845 = vsel %vm759, %v2843, %v2844
        %v2846 = vsel %vm759, %v2844, %v2843
        %v2847 = vmul.f32 %v2846, %v2510
        %v2848 = vmul.f32 %v2845, %v2511
        %v2849 = vpack.c.bf16 %v2848, %v2847
        %v2850 = vpack.c.bf16 %v2821, %v2820
        %v2851 = vrot.slane %v2820, 1
        %v2852 = vrot.slane %v2821, 1
        %v2853 = vsel %vm641, %v2851, %v2852
        %v2854 = vsel %vm641, %v2852, %v2851
        %v2855 = vmul.f32 %v2853, %v2519
        %v2856 = vmul.f32 %v2854, %v2520
        %v2857 = vpack.c.bf16 %v2856, %v2855
        %v2858 = vmul.f32 %v2824, %v2524
        %v2859 = vmul.f32 %v2825, %v2525
        %v2860 = vpack.c.bf16 %v2859, %v2858
        %v2861 = vmul.f32 %v2831, %v2529
        %v2862 = vmul.f32 %v2832, %v2530
        %v2863 = vpack.c.bf16 %v2862, %v2861
        %v2864 = vmul.f32 %v2838, %v2534
        %v2865 = vmul.f32 %v2839, %v2535
        %v2866 = vpack.c.bf16 %v2865, %v2864
        %2868 = vrot.lane.b32.xlu0 %v2835, 32
        %v2869 = vpop.permute.xlu0 %2868
        %2871 = vrot.lane.b32.xlu0 %v2842, 64
        %v2872 = vpop.permute.xlu0 %2871
        %2874 = vrot.lane.b32.xlu0 %v2849, 96
        %v2875 = vpop.permute.xlu0 %2874
        %2877 = vrot.lane.b32.xlu0 %v2857, 32
        %v2878 = vpop.permute.xlu0 %2877
        %2880 = vrot.lane.b32.xlu0 %v2860, 64
        %v2881 = vpop.permute.xlu0 %2880
        %2883 = vrot.lane.b32.xlu0 %v2863, 96
        %v2884 = vpop.permute.xlu0 %2883
        %v2887 = vsel %vm815, %v2828, %v2869
        %v2889 = vsel %vm677, %v2887, %v2872
        %v2891 = vsel %vm821, %v2889, %v2875
        %v2895 = vsel %vm815, %v2850, %v2878
        %v2897 = vsel %vm677, %v2895, %v2881
        %v2899 = vsel %vm821, %v2897, %v2884
        %s2901 = scalar_lea.vmem %s5, 864
        %v2902 = vld [vmem:[%s2901] sm:$0xf]
        %v2903 = vld [vmem:[%s2901 + $0x4] sm:$0xf]
        %v2904 = vld [vmem:[%s2901 + $0x8] sm:$0xf]
        %v2905 = vld [vmem:[%s2901 + $0xc] sm:$0xf]
        %v2906 = vld [vmem:[%s2901 + $0x10] sm:$0xf]
        %v2907 = vld [vmem:[%s2901 + $0x14] sm:$0xf]
        %v2908 = vld [vmem:[%s2901 + $0x18] sm:$0xf]
        %v2909 = vld [vmem:[%s2901 + $0x1c] sm:$0xf]
        %v2910 = vld [vmem:[%s2901 + $0x20] sm:$0xf]
        %v2911 = vld [vmem:[%s2901 + $0x24] sm:$0xf]
        %v2912 = vld [vmem:[%s2901 + $0x28] sm:$0xf]
        %v2913 = vld [vmem:[%s2901 + $0x2c] sm:$0xf]
        %v2914 = vld [vmem:[%s2901 + $0x30] sm:$0xf]
        %v2915 = vld [vmem:[%s2901 + $0x34] sm:$0xf]
        %v2916 = vld [vmem:[%s2901 + $0x38] sm:$0xf]
        %v2917 = vld [vmem:[%s2901 + $0x3c] sm:$0xf]
        %v2918 = vld [vmem:[%s2901 + $0x40] sm:$0xf]
        %v2919 = vld [vmem:[%s2901 + $0x44] sm:$0xf]
        %v2920 = vld [vmem:[%s2901 + $0x48] sm:$0xf]
        %v2921 = vld [vmem:[%s2901 + $0x4c] sm:$0xf]
        %v2922 = vld [vmem:[%s2901 + $0x50] sm:$0xf]
        %v2923 = vld [vmem:[%s2901 + $0x54] sm:$0xf]
        %v2924 = vld [vmem:[%s2901 + $0x58] sm:$0xf]
        %v2925 = vld [vmem:[%s2901 + $0x5c] sm:$0xf]
        %v2926 = vld [vmem:[%s2901 + $0x60] sm:$0xf]
        %v2927 = vld [vmem:[%s2901 + $0x64] sm:$0xf]
        %v2928 = vld [vmem:[%s2901 + $0x68] sm:$0xf]
        %v2929 = vld [vmem:[%s2901 + $0x6c] sm:$0xf]
        %v2930 = vld [vmem:[%s2901 + $0x70] sm:$0xf]
        %v2931 = vld [vmem:[%s2901 + $0x74] sm:$0xf]
        %v2932 = vld [vmem:[%s2901 + $0x78] sm:$0xf]
        %v2933 = vld [vmem:[%s2901 + $0x7c] sm:$0xf]
        %v2934 = vld [vmem:[%s2901 + $0x80] sm:$0xf]
        %v2935 = vld [vmem:[%s2901 + $0x84] sm:$0xf]
        %v2936 = vld [vmem:[%s2901 + $0x88] sm:$0xf]
        %v2937 = vld [vmem:[%s2901 + $0x8c] sm:$0xf]
        %s2938 = scalar_lea.vmem %s6, 6
        %v2939 = vld [vmem:[%s2938] sm:$0x1]
        %v2941 = vlaneseq
        %v2942 = vshrl.u32 %v2941, 7
        %v2943 = vsub.s32 0, %v2942
        %v2944 = vrot.slane %v2939, %v2943
        %v2982 = vunpack.c.l.b16 %v2902
        %v2983 = vunpack.c.l.b16 %v2903
        %v2984 = vunpack.c.l.b16 %v2904
        %v2985 = vunpack.c.l.b16 %v2905
        %v2986 = vunpack.c.l.b16 %v2906
        %v2987 = vunpack.c.l.b16 %v2907
        %v2988 = vunpack.c.l.b16 %v2908
        %v2989 = vunpack.c.l.b16 %v2909
        %v2990 = vunpack.c.l.b16 %v2910
        %v2991 = vunpack.c.l.b16 %v2911
        %v2992 = vunpack.c.l.b16 %v2912
        %v2993 = vunpack.c.l.b16 %v2913
        %v2994 = vunpack.c.l.b16 %v2914
        %v2995 = vunpack.c.l.b16 %v2915
        %v2996 = vunpack.c.l.b16 %v2916
        %v2997 = vunpack.c.l.b16 %v2917
        %v2998 = vunpack.c.l.b16 %v2918
        %v2999 = vunpack.c.l.b16 %v2919
        %v3000 = vunpack.c.l.b16 %v2920
        %v3001 = vunpack.c.l.b16 %v2921
        %v3002 = vunpack.c.l.b16 %v2922
        %v3003 = vunpack.c.l.b16 %v2923
        %v3004 = vunpack.c.l.b16 %v2924
        %v3005 = vunpack.c.l.b16 %v2925
        %v3006 = vunpack.c.l.b16 %v2926
        %v3007 = vunpack.c.l.b16 %v2927
        %v3008 = vunpack.c.l.b16 %v2928
        %v3009 = vunpack.c.l.b16 %v2929
        %v3010 = vunpack.c.l.b16 %v2930
        %v3011 = vunpack.c.l.b16 %v2931
        %v3012 = vunpack.c.l.b16 %v2932
        %v3013 = vunpack.c.l.b16 %v2933
        %v3014 = vunpack.c.l.b16 %v2934
        %v3015 = vunpack.c.l.b16 %v2935
        %v3016 = vunpack.c.l.b16 %v2936
        %v3017 = vunpack.c.l.b16 %v2937
        %v3018 = vpack.c.b16 %v2983, %v2982
        %v3019 = vpack.c.b16 %v2985, %v2984
        %v3020 = vpack.c.b16 %v2987, %v2986
        %v3021 = vpack.c.b16 %v2989, %v2988
        %v3022 = vpack.c.b16 %v2991, %v2990
        %v3023 = vpack.c.b16 %v2993, %v2992
        %v3024 = vpack.c.b16 %v2995, %v2994
        %v3025 = vpack.c.b16 %v2997, %v2996
        %v3026 = vpack.c.b16 %v2999, %v2998
        %v3027 = vpack.c.b16 %v3001, %v3000
        %v3028 = vpack.c.b16 %v3003, %v3002
        %v3029 = vpack.c.b16 %v3005, %v3004
        %v3030 = vpack.c.b16 %v3007, %v3006
        %v3031 = vpack.c.b16 %v3009, %v3008
        %v3032 = vpack.c.b16 %v3011, %v3010
        %v3033 = vpack.c.b16 %v3013, %v3012
        %v3034 = vpack.c.b16 %v3015, %v3014
        %v3035 = vpack.c.b16 %v3017, %v3016
        %v3055 = vsel %vm815, %v2866, 0
        %3057 = vmatprep.subr.bf16.mxu0 0
        %3058 = vmatpush1.bf16.msra.mxu0 %v3018
        %3059 = vmatprep.subr.bf16.mxu0 0
        %3060 = vmatpush1.bf16.msra.mxu0 %v3019
        %3061 = vmatprep.subr.bf16.mxu0 0
        %3062 = vmatpush1.bf16.msra.mxu0 %v3020
        %3063 = vmatprep.subr.bf16.mxu0 0
        %3064 = vmatpush1.bf16.msra.mxu0 %v3021
        %3065 = vmatprep.subr.bf16.mxu0 0
        %3066 = vmatpush1.bf16.msra.mxu0 %v3022
        %3067 = vmatprep.subr.bf16.mxu0 0
        %3068 = vmatpush1.bf16.msra.mxu0 %v3023
        %3069 = vmatprep.subr.bf16.mxu0 0
        %3070 = vmatpush1.bf16.msra.mxu0 %v3024
        %3071 = vmatprep.subr.bf16.mxu0 0
        %3072 = vmatpush1.bf16.msra.mxu0 %v3025
        %3073 = vmatprep.subr.bf16.mxu0 0
        %3074 = vmatpush1.bf16.msra.mxu0 %v3026
        %3075 = vmatprep.subr.bf16.mxu0 0
        %3076 = vmatpush1.bf16.msra.mxu0 %v3027
        %3077 = vmatprep.subr.bf16.mxu0 0
        %3078 = vmatpush1.bf16.msra.mxu0 %v3028
        %3079 = vmatprep.subr.bf16.mxu0 0
        %3080 = vmatpush1.bf16.msra.mxu0 %v3029
        %3081 = vmatprep.subr.bf16.mxu0 0
        %3082 = vmatpush1.bf16.msra.mxu0 %v3030
        %3083 = vmatprep.subr.bf16.mxu0 0
        %3084 = vmatpush1.bf16.msra.mxu0 %v3031
        %3085 = vmatprep.subr.bf16.mxu0 0
        %3086 = vmatpush1.bf16.msra.mxu0 %v3032
        %3087 = vmatprep.subr.bf16.mxu0 0
        %3088 = vmatpush1.bf16.msra.mxu0 %v3033
        %3089 = vmatprep.mubr.bf16.mxu0 %v2899
        %3090 = vmatmul.mubr.bf16.gmra.mrb[0].mxu0 %v2891
        %v3091 = vpop.f32.mrb[0].mxu0
        %v3092 = vadd.f32 %v2944, %v3091
        %v3093 = vpop.f32.mrb[0].mxu0
        %v3094 = vpop.f32.mrb[0].mxu0
        %v3095 = vadd.f32 %v2944, %v3094
        %v3096 = vpop.f32.mrb[0].mxu0
        %3097 = vdwg.mxu0
        %3098 = vmatprep.subr.bf16.mxu0 0
        %3099 = vmatpush1.bf16.msra.mxu0 %v3034
        %3100 = vmatprep.subr.bf16.mxu0 0
        %3101 = vmatpush1.bf16.msra.mxu0 %v3035
        %3102 = vmatprep.subr.bf16.mxu0 0
        %3103 = vmatpush1.bf16.msra.mxu0 0
        %3104 = vmatprep.subr.bf16.mxu0 0
        %3105 = vmatpush1.bf16.msra.mxu0 0
        %3106 = vmatprep.subr.bf16.mxu0 0
        %3107 = vmatpush1.bf16.msra.mxu0 0
        %3108 = vmatprep.subr.bf16.mxu0 0
        %3109 = vmatpush1.bf16.msra.mxu0 0
        %3110 = vmatprep.subr.bf16.mxu0 0
        %3111 = vmatpush1.bf16.msra.mxu0 0
        %3112 = vmatprep.subr.bf16.mxu0 0
        %3113 = vmatpush1.bf16.msra.mxu0 0
        %3114 = vmatprep.subr.bf16.mxu0 0
        %3115 = vmatpush1.bf16.msra.mxu0 0
        %3116 = vmatprep.subr.bf16.mxu0 0
        %3117 = vmatpush1.bf16.msra.mxu0 0
        %3118 = vmatprep.subr.bf16.mxu0 0
        %3119 = vmatpush1.bf16.msra.mxu0 0
        %3120 = vmatprep.subr.bf16.mxu0 0
        %3121 = vmatpush1.bf16.msra.mxu0 0
        %3122 = vmatprep.subr.bf16.mxu0 0
        %3123 = vmatpush1.bf16.msra.mxu0 0
        %3124 = vmatprep.subr.bf16.mxu0 0
        %3125 = vmatpush1.bf16.msra.mxu0 0
        %3126 = vmatprep.subr.bf16.mxu0 0
        %3127 = vmatpush1.bf16.msra.mxu0 0
        %3128 = vmatprep.subr.bf16.mxu0 0
        %3129 = vmatpush1.bf16.msra.mxu0 0
        %3130 = vmatprep.mubr.bf16.mxu0 0
        %3131 = vmatmul.mubr.bf16.gmra.mrb[0].mxu0 %v3055
        %v3132 = vpop.f32.mrb[0].mxu0
        %v3133 = vadd.f32 %v3092, %v3132
        %v3134 = vpop.f32.mrb[0].mxu0
        %v3135 = vpop.f32.mrb[0].mxu0
        %v3136 = vadd.f32 %v3095, %v3135
        %v3137 = vpop.f32.mrb[0].mxu0
        %3138 = vdwg.mxu0
        %v3139 = vmax.f32 %v3133, 0.0
        %v3140 = vmax.f32 %v3136, 0.0
        %s3141 = sld [smem:[#allocation2 + $0xc]]
        %v3142 = vstv %s3141
        %v3143 = vmul.f32 %v3142, %v2820
        %v3144 = vmul.f32 %v3142, %v2821
        %s3145 = sld [smem:[#allocation2 + $0xd]]
        %v3146 = vstv %s3145
        %v3147 = vmul.f32 %v3146, %v3139
        %v3148 = vmul.f32 %v3146, %v3140
        %v3149 = vadd.f32 %v3143, %v3147
        %v3150 = vadd.f32 %v3144, %v3148
        %v3151 = vrot.slane %v3149, 3
        %v3152 = vrot.slane %v3150, 3
        %v3153 = vsel %vm727, %v3151, %v3152
        %v3154 = vsel %vm727, %v3152, %v3151
        %v3155 = vmul.f32 %v3154, %v2483
        %v3156 = vmul.f32 %v3153, %v2484
        %v3157 = vpack.c.bf16 %v3156, %v3155
        %v3158 = vrot.slane %v3149, 4
        %v3159 = vrot.slane %v3150, 4
        %v3160 = vsel %vm737, %v3158, %v3159
        %v3161 = vsel %vm737, %v3159, %v3158
        %v3162 = vmul.f32 %v3161, %v2492
        %v3163 = vmul.f32 %v3160, %v2493
        %v3164 = vpack.c.bf16 %v3163, %v3162
        %v3165 = vrot.slane %v3149, 5
        %v3166 = vrot.slane %v3150, 5
        %v3167 = vsel %vm748, %v3165, %v3166
        %v3168 = vsel %vm748, %v3166, %v3165
        %v3169 = vmul.f32 %v3168, %v2501
        %v3170 = vmul.f32 %v3167, %v2502
        %v3171 = vpack.c.bf16 %v3170, %v3169
        %v3172 = vrot.slane %v3149, 7
        %v3173 = vrot.slane %v3150, 7
        %v3174 = vsel %vm759, %v3172, %v3173
        %v3175 = vsel %vm759, %v3173, %v3172
        %v3176 = vmul.f32 %v3175, %v2510
        %v3177 = vmul.f32 %v3174, %v2511
        %v3178 = vpack.c.bf16 %v3177, %v3176
        %v3179 = vpack.c.bf16 %v3150, %v3149
        %v3180 = vrot.slane %v3149, 1
        %v3181 = vrot.slane %v3150, 1
        %v3182 = vsel %vm641, %v3180, %v3181
        %v3183 = vsel %vm641, %v3181, %v3180
        %v3184 = vmul.f32 %v3182, %v2519
        %v3185 = vmul.f32 %v3183, %v2520
        %v3186 = vpack.c.bf16 %v3185, %v3184
        %v3187 = vmul.f32 %v3153, %v2524
        %v3188 = vmul.f32 %v3154, %v2525
        %v3189 = vpack.c.bf16 %v3188, %v3187
        %v3190 = vmul.f32 %v3160, %v2529
        %v3191 = vmul.f32 %v3161, %v2530
        %v3192 = vpack.c.bf16 %v3191, %v3190
        %v3193 = vmul.f32 %v3167, %v2534
        %v3194 = vmul.f32 %v3168, %v2535
        %v3195 = vpack.c.bf16 %v3194, %v3193
        %3197 = vrot.lane.b32.xlu0 %v3164, 32
        %v3198 = vpop.permute.xlu0 %3197
        %3200 = vrot.lane.b32.xlu0 %v3171, 64
        %v3201 = vpop.permute.xlu0 %3200
        %3203 = vrot.lane.b32.xlu0 %v3178, 96
        %v3204 = vpop.permute.xlu0 %3203
        %3206 = vrot.lane.b32.xlu0 %v3186, 32
        %v3207 = vpop.permute.xlu0 %3206
        %3209 = vrot.lane.b32.xlu0 %v3189, 64
        %v3210 = vpop.permute.xlu0 %3209
        %3212 = vrot.lane.b32.xlu0 %v3192, 96
        %v3213 = vpop.permute.xlu0 %3212
        %v3216 = vsel %vm815, %v3157, %v3198
        %v3218 = vsel %vm677, %v3216, %v3201
        %v3220 = vsel %vm821, %v3218, %v3204
        %v3224 = vsel %vm815, %v3179, %v3207
        %v3226 = vsel %vm677, %v3224, %v3210
        %v3228 = vsel %vm821, %v3226, %v3213
        %s3230 = scalar_lea.vmem %s5, 1008
        %v3231 = vld [vmem:[%s3230] sm:$0xf]
        %v3232 = vld [vmem:[%s3230 + $0x4] sm:$0xf]
        %v3233 = vld [vmem:[%s3230 + $0x8] sm:$0xf]
        %v3234 = vld [vmem:[%s3230 + $0xc] sm:$0xf]
        %v3235 = vld [vmem:[%s3230 + $0x10] sm:$0xf]
        %v3236 = vld [vmem:[%s3230 + $0x14] sm:$0xf]
        %v3237 = vld [vmem:[%s3230 + $0x18] sm:$0xf]
        %v3238 = vld [vmem:[%s3230 + $0x1c] sm:$0xf]
        %v3239 = vld [vmem:[%s3230 + $0x20] sm:$0xf]
        %v3240 = vld [vmem:[%s3230 + $0x24] sm:$0xf]
        %v3241 = vld [vmem:[%s3230 + $0x28] sm:$0xf]
        %v3242 = vld [vmem:[%s3230 + $0x2c] sm:$0xf]
        %v3243 = vld [vmem:[%s3230 + $0x30] sm:$0xf]
        %v3244 = vld [vmem:[%s3230 + $0x34] sm:$0xf]
        %v3245 = vld [vmem:[%s3230 + $0x38] sm:$0xf]
        %v3246 = vld [vmem:[%s3230 + $0x3c] sm:$0xf]
        %v3247 = vld [vmem:[%s3230 + $0x40] sm:$0xf]
        %v3248 = vld [vmem:[%s3230 + $0x44] sm:$0xf]
        %v3249 = vld [vmem:[%s3230 + $0x48] sm:$0xf]
        %v3250 = vld [vmem:[%s3230 + $0x4c] sm:$0xf]
        %v3251 = vld [vmem:[%s3230 + $0x50] sm:$0xf]
        %v3252 = vld [vmem:[%s3230 + $0x54] sm:$0xf]
        %v3253 = vld [vmem:[%s3230 + $0x58] sm:$0xf]
        %v3254 = vld [vmem:[%s3230 + $0x5c] sm:$0xf]
        %v3255 = vld [vmem:[%s3230 + $0x60] sm:$0xf]
        %v3256 = vld [vmem:[%s3230 + $0x64] sm:$0xf]
        %v3257 = vld [vmem:[%s3230 + $0x68] sm:$0xf]
        %v3258 = vld [vmem:[%s3230 + $0x6c] sm:$0xf]
        %v3259 = vld [vmem:[%s3230 + $0x70] sm:$0xf]
        %v3260 = vld [vmem:[%s3230 + $0x74] sm:$0xf]
        %v3261 = vld [vmem:[%s3230 + $0x78] sm:$0xf]
        %v3262 = vld [vmem:[%s3230 + $0x7c] sm:$0xf]
        %v3263 = vld [vmem:[%s3230 + $0x80] sm:$0xf]
        %v3264 = vld [vmem:[%s3230 + $0x84] sm:$0xf]
        %v3265 = vld [vmem:[%s3230 + $0x88] sm:$0xf]
        %v3266 = vld [vmem:[%s3230 + $0x8c] sm:$0xf]
        %s3267 = scalar_lea.vmem %s6, 7
        %v3268 = vld [vmem:[%s3267] sm:$0x1]
        %v3270 = vlaneseq
        %v3271 = vshrl.u32 %v3270, 7
        %v3272 = vsub.s32 0, %v3271
        %v3273 = vrot.slane %v3268, %v3272
        %v3311 = vunpack.c.l.b16 %v3231
        %v3312 = vunpack.c.l.b16 %v3232
        %v3313 = vunpack.c.l.b16 %v3233
        %v3314 = vunpack.c.l.b16 %v3234
        %v3315 = vunpack.c.l.b16 %v3235
        %v3316 = vunpack.c.l.b16 %v3236
        %v3317 = vunpack.c.l.b16 %v3237
        %v3318 = vunpack.c.l.b16 %v3238
        %v3319 = vunpack.c.l.b16 %v3239
        %v3320 = vunpack.c.l.b16 %v3240
        %v3321 = vunpack.c.l.b16 %v3241
        %v3322 = vunpack.c.l.b16 %v3242
        %v3323 = vunpack.c.l.b16 %v3243
        %v3324 = vunpack.c.l.b16 %v3244
        %v3325 = vunpack.c.l.b16 %v3245
        %v3326 = vunpack.c.l.b16 %v3246
        %v3327 = vunpack.c.l.b16 %v3247
        %v3328 = vunpack.c.l.b16 %v3248
        %v3329 = vunpack.c.l.b16 %v3249
        %v3330 = vunpack.c.l.b16 %v3250
        %v3331 = vunpack.c.l.b16 %v3251
        %v3332 = vunpack.c.l.b16 %v3252
        %v3333 = vunpack.c.l.b16 %v3253
        %v3334 = vunpack.c.l.b16 %v3254
        %v3335 = vunpack.c.l.b16 %v3255
        %v3336 = vunpack.c.l.b16 %v3256
        %v3337 = vunpack.c.l.b16 %v3257
        %v3338 = vunpack.c.l.b16 %v3258
        %v3339 = vunpack.c.l.b16 %v3259
        %v3340 = vunpack.c.l.b16 %v3260
        %v3341 = vunpack.c.l.b16 %v3261
        %v3342 = vunpack.c.l.b16 %v3262
        %v3343 = vunpack.c.l.b16 %v3263
        %v3344 = vunpack.c.l.b16 %v3264
        %v3345 = vunpack.c.l.b16 %v3265
        %v3346 = vunpack.c.l.b16 %v3266
        %v3347 = vpack.c.b16 %v3312, %v3311
        %v3348 = vpack.c.b16 %v3314, %v3313
        %v3349 = vpack.c.b16 %v3316, %v3315
        %v3350 = vpack.c.b16 %v3318, %v3317
        %v3351 = vpack.c.b16 %v3320, %v3319
        %v3352 = vpack.c.b16 %v3322, %v3321
        %v3353 = vpack.c.b16 %v3324, %v3323
        %v3354 = vpack.c.b16 %v3326, %v3325
        %v3355 = vpack.c.b16 %v3328, %v3327
        %v3356 = vpack.c.b16 %v3330, %v3329
        %v3357 = vpack.c.b16 %v3332, %v3331
        %v3358 = vpack.c.b16 %v3334, %v3333
        %v3359 = vpack.c.b16 %v3336, %v3335
        %v3360 = vpack.c.b16 %v3338, %v3337
        %v3361 = vpack.c.b16 %v3340, %v3339
        %v3362 = vpack.c.b16 %v3342, %v3341
        %v3363 = vpack.c.b16 %v3344, %v3343
        %v3364 = vpack.c.b16 %v3346, %v3345
        %v3384 = vsel %vm815, %v3195, 0
        %3386 = vmatprep.subr.bf16.mxu0 0
        %3387 = vmatpush1.bf16.msra.mxu0 %v3347
        %3388 = vmatprep.subr.bf16.mxu0 0
        %3389 = vmatpush1.bf16.msra.mxu0 %v3348
        %3390 = vmatprep.subr.bf16.mxu0 0
        %3391 = vmatpush1.bf16.msra.mxu0 %v3349
        %3392 = vmatprep.subr.bf16.mxu0 0
        %3393 = vmatpush1.bf16.msra.mxu0 %v3350
        %3394 = vmatprep.subr.bf16.mxu0 0
        %3395 = vmatpush1.bf16.msra.mxu0 %v3351
        %3396 = vmatprep.subr.bf16.mxu0 0
        %3397 = vmatpush1.bf16.msra.mxu0 %v3352
        %3398 = vmatprep.subr.bf16.mxu0 0
        %3399 = vmatpush1.bf16.msra.mxu0 %v3353
        %3400 = vmatprep.subr.bf16.mxu0 0
        %3401 = vmatpush1.bf16.msra.mxu0 %v3354
        %3402 = vmatprep.subr.bf16.mxu0 0
        %3403 = vmatpush1.bf16.msra.mxu0 %v3355
        %3404 = vmatprep.subr.bf16.mxu0 0
        %3405 = vmatpush1.bf16.msra.mxu0 %v3356
        %3406 = vmatprep.subr.bf16.mxu0 0
        %3407 = vmatpush1.bf16.msra.mxu0 %v3357
        %3408 = vmatprep.subr.bf16.mxu0 0
        %3409 = vmatpush1.bf16.msra.mxu0 %v3358
        %3410 = vmatprep.subr.bf16.mxu0 0
        %3411 = vmatpush1.bf16.msra.mxu0 %v3359
        %3412 = vmatprep.subr.bf16.mxu0 0
        %3413 = vmatpush1.bf16.msra.mxu0 %v3360
        %3414 = vmatprep.subr.bf16.mxu0 0
        %3415 = vmatpush1.bf16.msra.mxu0 %v3361
        %3416 = vmatprep.subr.bf16.mxu0 0
        %3417 = vmatpush1.bf16.msra.mxu0 %v3362
        %3418 = vmatprep.mubr.bf16.mxu0 %v3228
        %3419 = vmatmul.mubr.bf16.gmra.mrb[0].mxu0 %v3220
        %v3420 = vpop.f32.mrb[0].mxu0
        %v3421 = vadd.f32 %v3273, %v3420
        %v3422 = vpop.f32.mrb[0].mxu0
        %v3423 = vpop.f32.mrb[0].mxu0
        %v3424 = vadd.f32 %v3273, %v3423
        %v3425 = vpop.f32.mrb[0].mxu0
        %3426 = vdwg.mxu0
        %3427 = vmatprep.subr.bf16.mxu0 0
        %3428 = vmatpush1.bf16.msra.mxu0 %v3363
        %3429 = vmatprep.subr.bf16.mxu0 0
        %3430 = vmatpush1.bf16.msra.mxu0 %v3364
        %3431 = vmatprep.subr.bf16.mxu0 0
        %3432 = vmatpush1.bf16.msra.mxu0 0
        %3433 = vmatprep.subr.bf16.mxu0 0
        %3434 = vmatpush1.bf16.msra.mxu0 0
        %3435 = vmatprep.subr.bf16.mxu0 0
        %3436 = vmatpush1.bf16.msra.mxu0 0
        %3437 = vmatprep.subr.bf16.mxu0 0
        %3438 = vmatpush1.bf16.msra.mxu0 0
        %3439 = vmatprep.subr.bf16.mxu0 0
        %3440 = vmatpush1.bf16.msra.mxu0 0
        %3441 = vmatprep.subr.bf16.mxu0 0
        %3442 = vmatpush1.bf16.msra.mxu0 0
        %3443 = vmatprep.subr.bf16.mxu0 0
        %3444 = vmatpush1.bf16.msra.mxu0 0
        %3445 = vmatprep.subr.bf16.mxu0 0
        %3446 = vmatpush1.bf16.msra.mxu0 0
        %3447 = vmatprep.subr.bf16.mxu0 0
        %3448 = vmatpush1.bf16.msra.mxu0 0
        %3449 = vmatprep.subr.bf16.mxu0 0
        %3450 = vmatpush1.bf16.msra.mxu0 0
        %3451 = vmatprep.subr.bf16.mxu0 0
        %3452 = vmatpush1.bf16.msra.mxu0 0
        %3453 = vmatprep.subr.bf16.mxu0 0
        %3454 = vmatpush1.bf16.msra.mxu0 0
        %3455 = vmatprep.subr.bf16.mxu0 0
        %3456 = vmatpush1.bf16.msra.mxu0 0
        %3457 = vmatprep.subr.bf16.mxu0 0
        %3458 = vmatpush1.bf16.msra.mxu0 0
        %3459 = vmatprep.mubr.bf16.mxu0 0
        %3460 = vmatmul.mubr.bf16.gmra.mrb[0].mxu0 %v3384
        %v3461 = vpop.f32.mrb[0].mxu0
        %v3462 = vadd.f32 %v3421, %v3461
        %v3463 = vpop.f32.mrb[0].mxu0
        %v3464 = vpop.f32.mrb[0].mxu0
        %v3465 = vadd.f32 %v3424, %v3464
        %v3466 = vpop.f32.mrb[0].mxu0
        %3467 = vdwg.mxu0
        %v3468 = vmax.f32 %v3462, 0.0
        %v3469 = vmax.f32 %v3465, 0.0
        %s3470 = sld [smem:[#allocation2 + $0xe]]
        %v3471 = vstv %s3470
        %v3472 = vmul.f32 %v3471, %v3149
        %v3473 = vmul.f32 %v3471, %v3150
        %s3474 = sld [smem:[#allocation2 + $0xf]]
        %v3475 = vstv %s3474
        %v3476 = vmul.f32 %v3475, %v3468
        %v3477 = vmul.f32 %v3475, %v3469
        %v3478 = vadd.f32 %v3472, %v3476
        %v3479 = vadd.f32 %v3473, %v3477
        %v3480 = vrot.slane %v3478, 3
        %v3481 = vrot.slane %v3479, 3
        %v3482 = vsel %vm727, %v3480, %v3481
        %v3483 = vsel %vm727, %v3481, %v3480
        %v3484 = vmul.f32 %v3483, %v2483
        %v3485 = vmul.f32 %v3482, %v2484
        %v3486 = vpack.c.bf16 %v3485, %v3484
        %v3487 = vrot.slane %v3478, 4
        %v3488 = vrot.slane %v3479, 4
        %v3489 = vsel %vm737, %v3487, %v3488
        %v3490 = vsel %vm737, %v3488, %v3487
        %v3491 = vmul.f32 %v3490, %v2492
        %v3492 = vmul.f32 %v3489, %v2493
        %v3493 = vpack.c.bf16 %v3492, %v3491
        %v3494 = vrot.slane %v3478, 5
        %v3495 = vrot.slane %v3479, 5
        %v3496 = vsel %vm748, %v3494, %v3495
        %v3497 = vsel %vm748, %v3495, %v3494
        %v3498 = vmul.f32 %v3497, %v2501
        %v3499 = vmul.f32 %v3496, %v2502
        %v3500 = vpack.c.bf16 %v3499, %v3498
        %v3501 = vrot.slane %v3478, 7
        %v3502 = vrot.slane %v3479, 7
        %v3503 = vsel %vm759, %v3501, %v3502
        %v3504 = vsel %vm759, %v3502, %v3501
        %v3505 = vmul.f32 %v3504, %v2510
        %v3506 = vmul.f32 %v3503, %v2511
        %v3507 = vpack.c.bf16 %v3506, %v3505
        %v3508 = vpack.c.bf16 %v3479, %v3478
        %v3509 = vrot.slane %v3478, 1
        %v3510 = vrot.slane %v3479, 1
        %v3511 = vsel %vm641, %v3509, %v3510
        %v3512 = vsel %vm641, %v3510, %v3509
        %v3513 = vmul.f32 %v3511, %v2519
        %v3514 = vmul.f32 %v3512, %v2520
        %v3515 = vpack.c.bf16 %v3514, %v3513
        %v3516 = vmul.f32 %v3482, %v2524
        %v3517 = vmul.f32 %v3483, %v2525
        %v3518 = vpack.c.bf16 %v3517, %v3516
        %v3519 = vmul.f32 %v3489, %v2529
        %v3520 = vmul.f32 %v3490, %v2530
        %v3521 = vpack.c.bf16 %v3520, %v3519
        %v3522 = vmul.f32 %v3496, %v2534
        %v3523 = vmul.f32 %v3497, %v2535
        %v3524 = vpack.c.bf16 %v3523, %v3522
        %3526 = vrot.lane.b32.xlu0 %v3493, 32
        %v3527 = vpop.permute.xlu0 %3526
        %3529 = vrot.lane.b32.xlu0 %v3500, 64
        %v3530 = vpop.permute.xlu0 %3529
        %3532 = vrot.lane.b32.xlu0 %v3507, 96
        %v3533 = vpop.permute.xlu0 %3532
        %3535 = vrot.lane.b32.xlu0 %v3515, 32
        %v3536 = vpop.permute.xlu0 %3535
        %3538 = vrot.lane.b32.xlu0 %v3518, 64
        %v3539 = vpop.permute.xlu0 %3538
        %3541 = vrot.lane.b32.xlu0 %v3521, 96
        %v3542 = vpop.permute.xlu0 %3541
        %v3545 = vsel %vm815, %v3486, %v3527
        %v3547 = vsel %vm677, %v3545, %v3530
        %v3549 = vsel %vm821, %v3547, %v3533
        %v3553 = vsel %vm815, %v3508, %v3536
        %v3555 = vsel %vm677, %v3553, %v3539
        %v3557 = vsel %vm821, %v3555, %v3542
        %s3559 = scalar_lea.vmem %s5, 1152
        %v3560 = vld [vmem:[%s3559] sm:$0xf]
        %v3561 = vld [vmem:[%s3559 + $0x4] sm:$0xf]
        %v3562 = vld [vmem:[%s3559 + $0x8] sm:$0xf]
        %v3563 = vld [vmem:[%s3559 + $0xc] sm:$0xf]
        %v3564 = vld [vmem:[%s3559 + $0x10] sm:$0xf]
        %v3565 = vld [vmem:[%s3559 + $0x14] sm:$0xf]
        %v3566 = vld [vmem:[%s3559 + $0x18] sm:$0xf]
        %v3567 = vld [vmem:[%s3559 + $0x1c] sm:$0xf]
        %v3568 = vld [vmem:[%s3559 + $0x20] sm:$0xf]
        %v3569 = vld [vmem:[%s3559 + $0x24] sm:$0xf]
        %v3570 = vld [vmem:[%s3559 + $0x28] sm:$0xf]
        %v3571 = vld [vmem:[%s3559 + $0x2c] sm:$0xf]
        %v3572 = vld [vmem:[%s3559 + $0x30] sm:$0xf]
        %v3573 = vld [vmem:[%s3559 + $0x34] sm:$0xf]
        %v3574 = vld [vmem:[%s3559 + $0x38] sm:$0xf]
        %v3575 = vld [vmem:[%s3559 + $0x3c] sm:$0xf]
        %v3576 = vld [vmem:[%s3559 + $0x40] sm:$0xf]
        %v3577 = vld [vmem:[%s3559 + $0x44] sm:$0xf]
        %v3578 = vld [vmem:[%s3559 + $0x48] sm:$0xf]
        %v3579 = vld [vmem:[%s3559 + $0x4c] sm:$0xf]
        %v3580 = vld [vmem:[%s3559 + $0x50] sm:$0xf]
        %v3581 = vld [vmem:[%s3559 + $0x54] sm:$0xf]
        %v3582 = vld [vmem:[%s3559 + $0x58] sm:$0xf]
        %v3583 = vld [vmem:[%s3559 + $0x5c] sm:$0xf]
        %v3584 = vld [vmem:[%s3559 + $0x60] sm:$0xf]
        %v3585 = vld [vmem:[%s3559 + $0x64] sm:$0xf]
        %v3586 = vld [vmem:[%s3559 + $0x68] sm:$0xf]
        %v3587 = vld [vmem:[%s3559 + $0x6c] sm:$0xf]
        %v3588 = vld [vmem:[%s3559 + $0x70] sm:$0xf]
        %v3589 = vld [vmem:[%s3559 + $0x74] sm:$0xf]
        %v3590 = vld [vmem:[%s3559 + $0x78] sm:$0xf]
        %v3591 = vld [vmem:[%s3559 + $0x7c] sm:$0xf]
        %v3592 = vld [vmem:[%s3559 + $0x80] sm:$0xf]
        %v3593 = vld [vmem:[%s3559 + $0x84] sm:$0xf]
        %v3594 = vld [vmem:[%s3559 + $0x88] sm:$0xf]
        %v3595 = vld [vmem:[%s3559 + $0x8c] sm:$0xf]
        %s3596 = scalar_lea.vmem %s6, 8
        %v3597 = vld [vmem:[%s3596] sm:$0x1]
        %v3599 = vlaneseq
        %v3600 = vshrl.u32 %v3599, 7
        %v3601 = vsub.s32 0, %v3600
        %v3602 = vrot.slane %v3597, %v3601
        %v3640 = vunpack.c.l.b16 %v3560
        %v3641 = vunpack.c.l.b16 %v3561
        %v3642 = vunpack.c.l.b16 %v3562
        %v3643 = vunpack.c.l.b16 %v3563
        %v3644 = vunpack.c.l.b16 %v3564
        %v3645 = vunpack.c.l.b16 %v3565
        %v3646 = vunpack.c.l.b16 %v3566
        %v3647 = vunpack.c.l.b16 %v3567
        %v3648 = vunpack.c.l.b16 %v3568
        %v3649 = vunpack.c.l.b16 %v3569
        %v3650 = vunpack.c.l.b16 %v3570
        %v3651 = vunpack.c.l.b16 %v3571
        %v3652 = vunpack.c.l.b16 %v3572
        %v3653 = vunpack.c.l.b16 %v3573
        %v3654 = vunpack.c.l.b16 %v3574
        %v3655 = vunpack.c.l.b16 %v3575
        %v3656 = vunpack.c.l.b16 %v3576
        %v3657 = vunpack.c.l.b16 %v3577
        %v3658 = vunpack.c.l.b16 %v3578
        %v3659 = vunpack.c.l.b16 %v3579
        %v3660 = vunpack.c.l.b16 %v3580
        %v3661 = vunpack.c.l.b16 %v3581
        %v3662 = vunpack.c.l.b16 %v3582
        %v3663 = vunpack.c.l.b16 %v3583
        %v3664 = vunpack.c.l.b16 %v3584
        %v3665 = vunpack.c.l.b16 %v3585
        %v3666 = vunpack.c.l.b16 %v3586
        %v3667 = vunpack.c.l.b16 %v3587
        %v3668 = vunpack.c.l.b16 %v3588
        %v3669 = vunpack.c.l.b16 %v3589
        %v3670 = vunpack.c.l.b16 %v3590
        %v3671 = vunpack.c.l.b16 %v3591
        %v3672 = vunpack.c.l.b16 %v3592
        %v3673 = vunpack.c.l.b16 %v3593
        %v3674 = vunpack.c.l.b16 %v3594
        %v3675 = vunpack.c.l.b16 %v3595
        %v3676 = vpack.c.b16 %v3641, %v3640
        %v3677 = vpack.c.b16 %v3643, %v3642
        %v3678 = vpack.c.b16 %v3645, %v3644
        %v3679 = vpack.c.b16 %v3647, %v3646
        %v3680 = vpack.c.b16 %v3649, %v3648
        %v3681 = vpack.c.b16 %v3651, %v3650
        %v3682 = vpack.c.b16 %v3653, %v3652
        %v3683 = vpack.c.b16 %v3655, %v3654
        %v3684 = vpack.c.b16 %v3657, %v3656
        %v3685 = vpack.c.b16 %v3659, %v3658
        %v3686 = vpack.c.b16 %v3661, %v3660
        %v3687 = vpack.c.b16 %v3663, %v3662
        %v3688 = vpack.c.b16 %v3665, %v3664
        %v3689 = vpack.c.b16 %v3667, %v3666
        %v3690 = vpack.c.b16 %v3669, %v3668
        %v3691 = vpack.c.b16 %v3671, %v3670
        %v3692 = vpack.c.b16 %v3673, %v3672
        %v3693 = vpack.c.b16 %v3675, %v3674
        %v3713 = vsel %vm815, %v3524, 0
        %3715 = vmatprep.subr.bf16.mxu0 0
        %3716 = vmatpush1.bf16.msra.mxu0 %v3676
        %3717 = vmatprep.subr.bf16.mxu0 0
        %3718 = vmatpush1.bf16.msra.mxu0 %v3677
        %3719 = vmatprep.subr.bf16.mxu0 0
        %3720 = vmatpush1.bf16.msra.mxu0 %v3678
        %3721 = vmatprep.subr.bf16.mxu0 0
        %3722 = vmatpush1.bf16.msra.mxu0 %v3679
        %3723 = vmatprep.subr.bf16.mxu0 0
        %3724 = vmatpush1.bf16.msra.mxu0 %v3680
        %3725 = vmatprep.subr.bf16.mxu0 0
        %3726 = vmatpush1.bf16.msra.mxu0 %v3681
        %3727 = vmatprep.subr.bf16.mxu0 0
        %3728 = vmatpush1.bf16.msra.mxu0 %v3682
        %3729 = vmatprep.subr.bf16.mxu0 0
        %3730 = vmatpush1.bf16.msra.mxu0 %v3683
        %3731 = vmatprep.subr.bf16.mxu0 0
        %3732 = vmatpush1.bf16.msra.mxu0 %v3684
        %3733 = vmatprep.subr.bf16.mxu0 0
        %3734 = vmatpush1.bf16.msra.mxu0 %v3685
        %3735 = vmatprep.subr.bf16.mxu0 0
        %3736 = vmatpush1.bf16.msra.mxu0 %v3686
        %3737 = vmatprep.subr.bf16.mxu0 0
        %3738 = vmatpush1.bf16.msra.mxu0 %v3687
        %3739 = vmatprep.subr.bf16.mxu0 0
        %3740 = vmatpush1.bf16.msra.mxu0 %v3688
        %3741 = vmatprep.subr.bf16.mxu0 0
        %3742 = vmatpush1.bf16.msra.mxu0 %v3689
        %3743 = vmatprep.subr.bf16.mxu0 0
        %3744 = vmatpush1.bf16.msra.mxu0 %v3690
        %3745 = vmatprep.subr.bf16.mxu0 0
        %3746 = vmatpush1.bf16.msra.mxu0 %v3691
        %3747 = vmatprep.mubr.bf16.mxu0 %v3557
        %3748 = vmatmul.mubr.bf16.gmra.mrb[0].mxu0 %v3549
        %v3749 = vpop.f32.mrb[0].mxu0
        %v3750 = vadd.f32 %v3602, %v3749
        %v3751 = vpop.f32.mrb[0].mxu0
        %v3752 = vpop.f32.mrb[0].mxu0
        %v3753 = vadd.f32 %v3602, %v3752
        %v3754 = vpop.f32.mrb[0].mxu0
        %3755 = vdwg.mxu0
        %3756 = vmatprep.subr.bf16.mxu0 0
        %3757 = vmatpush1.bf16.msra.mxu0 %v3692
        %3758 = vmatprep.subr.bf16.mxu0 0
        %3759 = vmatpush1.bf16.msra.mxu0 %v3693
        %3760 = vmatprep.subr.bf16.mxu0 0
        %3761 = vmatpush1.bf16.msra.mxu0 0
        %3762 = vmatprep.subr.bf16.mxu0 0
        %3763 = vmatpush1.bf16.msra.mxu0 0
        %3764 = vmatprep.subr.bf16.mxu0 0
        %3765 = vmatpush1.bf16.msra.mxu0 0
        %3766 = vmatprep.subr.bf16.mxu0 0
        %3767 = vmatpush1.bf16.msra.mxu0 0
        %3768 = vmatprep.subr.bf16.mxu0 0
        %3769 = vmatpush1.bf16.msra.mxu0 0
        %3770 = vmatprep.subr.bf16.mxu0 0
        %3771 = vmatpush1.bf16.msra.mxu0 0
        %3772 = vmatprep.subr.bf16.mxu0 0
        %3773 = vmatpush1.bf16.msra.mxu0 0
        %3774 = vmatprep.subr.bf16.mxu0 0
        %3775 = vmatpush1.bf16.msra.mxu0 0
        %3776 = vmatprep.subr.bf16.mxu0 0
        %3777 = vmatpush1.bf16.msra.mxu0 0
        %3778 = vmatprep.subr.bf16.mxu0 0
        %3779 = vmatpush1.bf16.msra.mxu0 0
        %3780 = vmatprep.subr.bf16.mxu0 0
        %3781 = vmatpush1.bf16.msra.mxu0 0
        %3782 = vmatprep.subr.bf16.mxu0 0
        %3783 = vmatpush1.bf16.msra.mxu0 0
        %3784 = vmatprep.subr.bf16.mxu0 0
        %3785 = vmatpush1.bf16.msra.mxu0 0
        %3786 = vmatprep.subr.bf16.mxu0 0
        %3787 = vmatpush1.bf16.msra.mxu0 0
        %3788 = vmatprep.mubr.bf16.mxu0 0
        %3789 = vmatmul.mubr.bf16.gmra.mrb[0].mxu0 %v3713
        %v3790 = vpop.f32.mrb[0].mxu0
        %v3791 = vadd.f32 %v3750, %v3790
        %v3792 = vpop.f32.mrb[0].mxu0
        %v3793 = vpop.f32.mrb[0].mxu0
        %v3794 = vadd.f32 %v3753, %v3793
        %v3795 = vpop.f32.mrb[0].mxu0
        %3796 = vdwg.mxu0
        %v3797 = vmax.f32 %v3791, 0.0
        %v3798 = vmax.f32 %v3794, 0.0
        %s3799 = sld [smem:[#allocation2 + $0x10]]
        %v3800 = vstv %s3799
        %v3801 = vmul.f32 %v3800, %v3478
        %v3802 = vmul.f32 %v3800, %v3479
        %s3803 = sld [smem:[#allocation2 + $0x11]]
        %v3804 = vstv %s3803
        %v3805 = vmul.f32 %v3804, %v3797
        %v3806 = vmul.f32 %v3804, %v3798
        %v3807 = vadd.f32 %v3801, %v3805
        %v3808 = vadd.f32 %v3802, %v3806
        %v3809 = vpack.c.bf16 %v3808, %v3807
        %s3810 = scalar_lea.vmem %s8, 16
        %v3811 = vld [vmem:[%s3810] sm:$0xf]
        %v3812 = vld [vmem:[%s3810 + $0x4] sm:$0xf]
        %v3813 = vld [vmem:[%s3810 + $0x8] sm:$0xf]
        %v3814 = vld [vmem:[%s3810 + $0xc] sm:$0xf]
        %s3815 = scalar_lea.vmem %s9, 1
        %v3816 = vld [vmem:[%s3815] sm:$0x1]
        %v3818 = vlaneseq
        %v3819 = vshrl.u32 %v3818, 7
        %v3820 = vsub.s32 0, %v3819
        %v3821 = vrot.slane %v3816, %v3820
        %v3827 = vunpack.c.l.b16 %v3811
        %v3828 = vunpack.c.l.b16 %v3812
        %v3829 = vunpack.c.l.b16 %v3813
        %v3830 = vunpack.c.l.b16 %v3814
        %v3831 = vpack.c.b16 %v3828, %v3827
        %v3832 = vpack.c.b16 %v3830, %v3829
        %v3836 = vsel %vm815, %v3809, 0
        %3838 = vmatprep.subr.bf16.mxu0 0
        %3839 = vmatpush1.bf16.msra.mxu0 %v3831
        %3840 = vmatprep.subr.bf16.mxu0 0
        %3841 = vmatpush1.bf16.msra.mxu0 %v3832
        %3842 = vmatprep.subr.bf16.mxu0 0
        %3843 = vmatpush1.bf16.msra.mxu0 0
        %3844 = vmatprep.subr.bf16.mxu0 0
        %3845 = vmatpush1.bf16.msra.mxu0 0
        %3846 = vmatprep.subr.bf16.mxu0 0
        %3847 = vmatpush1.bf16.msra.mxu0 0
        %3848 = vmatprep.subr.bf16.mxu0 0
        %3849 = vmatpush1.bf16.msra.mxu0 0
        %3850 = vmatprep.subr.bf16.mxu0 0
        %3851 = vmatpush1.bf16.msra.mxu0 0
        %3852 = vmatprep.subr.bf16.mxu0 0
        %3853 = vmatpush1.bf16.msra.mxu0 0
        %3854 = vmatprep.subr.bf16.mxu0 0
        %3855 = vmatpush1.bf16.msra.mxu0 0
        %3856 = vmatprep.subr.bf16.mxu0 0
        %3857 = vmatpush1.bf16.msra.mxu0 0
        %3858 = vmatprep.subr.bf16.mxu0 0
        %3859 = vmatpush1.bf16.msra.mxu0 0
        %3860 = vmatprep.subr.bf16.mxu0 0
        %3861 = vmatpush1.bf16.msra.mxu0 0
        %3862 = vmatprep.subr.bf16.mxu0 0
        %3863 = vmatpush1.bf16.msra.mxu0 0
        %3864 = vmatprep.subr.bf16.mxu0 0
        %3865 = vmatpush1.bf16.msra.mxu0 0
        %3866 = vmatprep.subr.bf16.mxu0 0
        %3867 = vmatpush1.bf16.msra.mxu0 0
        %3868 = vmatprep.subr.bf16.mxu0 0
        %3869 = vmatpush1.bf16.msra.mxu0 0
        %3870 = vmatprep.mubr.bf16.mxu0 0
        %3871 = vmatmul.mubr.bf16.gmra.mrb[0].mxu0 %v3836
        %v3872 = vpop.f32.mrb[0].mxu0
        %v3873 = vadd.f32 %v3821, %v3872
        %v3874 = vpop.f32.mrb[0].mxu0
        %v3875 = vpop.f32.mrb[0].mxu0
        %v3876 = vadd.f32 %v3821, %v3875
        %v3877 = vpop.f32.mrb[0].mxu0
        %3878 = vdwg.mxu0
        %v3879 = vmul.f32 %v3873, 0.5
        %v3880 = vmul.f32 %v3876, 0.5
        %v3881 = vsel %vm724, %v3879, %v3873
        %v3882 = vsel %vm724, %v3880, %v3876
        %v3883 = vtanh.pop %v3881
        %v3884 = vtanh.pop %v3882
        %v3885 = vmul.f32 %v3883, 0.5
        %v3886 = vmul.f32 %v3884, 0.5
        %v3887 = vadd.f32 %v3885, 0.5
        %v3888 = vadd.f32 %v3886, 0.5
        %v3889 = vsel %vm724, %v3887, %v3883
        %v3890 = vsel %vm724, %v3888, %v3884
        %s3891 = scalar_lea.vmem %s365, 16 [#allocation4]
        %3892 = vst [vmem:[%s3891] sm:$0xff] %v3889
        %3893 = vst [vmem:[%s3891 + $0x8] sm:$0xff] %v3890
        %s3894 = sand.u32 %s245, 1
        %s3895 = sand.u32 %s245, 1
        %s3896 = smul.addr %s3895, 32
        %s3897 = scalar_lea.vmem [#allocation4], %s3896
        // Predicated region
        $region65: #{forward.1} parent=59 // pred_check
          %p3898 = pneg %p255
        $region66: #{forward.1} parent=59 // pred_check_branch
          %3900 = sbr.rel (%p3898) target = $region68
        $region67: #{forward.1} parent=59 // pred_region
          %s3901 = smul.u32 2, %s22
          %s3902 = smul.addr %s3901, 8
          %s3903 = scalar_lea.vmem %s10, %s3902
          // Predicated region
          $region69: #{forward.1} parent=67 // pred_check
            _
          $region70: #{forward.1} parent=67 // pred_check_branch
            %3905 = sbr.rel (0) target = $region72
          $region71: #{forward.1} parent=67 // pred_region
            // Predicated region
            $region73: #{forward.1} parent=71 // pred_check
              _
            $region74: #{forward.1} parent=71 // pred_check_branch
              %3907 = sbr.rel (0) target = $region76
            $region75: #{forward.1} parent=71 // pred_region
              // Predicated region
              $region88: #{forward.1} parent=75 // pred_check
                _
              $region89: #{forward.1} parent=75 // pred_check_branch
                %3928 = sbr.rel (0) target = $region91
              $region90: #{forward.1} parent=75 // pred_region
                loop: start=0, step=1, limit=1
                $region92: #{forward.1} parent=90 // loop_pre_header
                  _
                $region93: #{forward.1} parent=90 // loop_header
                  %s3930 = sphi 0, %s3934
                  %p3931 = scmp.ge.s32.totalorder %s3930, 1
                  %s3935 = sphi %s3897, %s3897
                  %s3936 = sphi %s3903, %s3903
                $region94: #{forward.1} parent=90 // loop_header_branch
                  %3933 = sbr.rel (%p3931) target = $region98
                $region95: #{forward.1} parent=90 // loop_body
                  %v3937 = vld [vmem:[%s3935] sm:$0xff]
                  %3938 = vst [vmem:[%s3936] sm:$0xff] %v3937
                  %v3939 = vld [vmem:[%s3935 + $0x8] sm:$0xff]
                  %3940 = vst [vmem:[%s3936 + $0x8] sm:$0xff] %v3939
                  %v3941 = vld [vmem:[%s3935 + $0x10] sm:$0xff]
                  %3942 = vst [vmem:[%s3936 + $0x20] sm:$0xff] %v3941
                  %v3943 = vld [vmem:[%s3935 + $0x18] sm:$0xff]
                  %3944 = vst [vmem:[%s3936 + $0x28] sm:$0xff] %v3943
                $region96: #{forward.1} parent=90 // loop_footer
                  %s3934 = sadd.s32 1, %s3930
                $region97: #{forward.1} parent=90 // loop_footer_branch
                  %3929 = sbr.rel target = $region93
                $region98: #{forward.1} parent=90 // loop_exit
                  _
              $region91: #{forward.1} parent=75 // pred_fallthru
                _
              // Predicated region
              $region99: #{forward.1} parent=75 // pred_check
                _
              $region100: #{forward.1} parent=75 // pred_check_branch
                %3946 = sbr.rel target = $region102
              $region101: #{forward.1} parent=75 // pred_region
                _
              $region102: #{forward.1} parent=75 // pred_fallthru
                _
            $region76: #{forward.1} parent=71 // pred_fallthru
              _
            // Predicated region
            $region77: #{forward.1} parent=71 // pred_check
              _
            $region78: #{forward.1} parent=71 // pred_check_branch
              %3909 = sbr.rel target = $region80
            $region79: #{forward.1} parent=71 // pred_region
              loop: start=0, step=1, limit=1
              $region81: #{forward.1} parent=79 // loop_pre_header
                _
              $region82: #{forward.1} parent=79 // loop_header
                %s3912 = sphi 0, %s3916
                %p3913 = scmp.ge.s32.totalorder %s3912, 1
                %s3917 = sphi %s3897, %s3897
                %s3918 = sphi %s3903, %s3903
              $region83: #{forward.1} parent=79 // loop_header_branch
                %3915 = sbr.rel (%p3913) target = $region87
              $region84: #{forward.1} parent=79 // loop_body
                %v3919 = vld [vmem:[%s3917] sm:$0xff]
                %3920 = vst [vmem:[%s3918] sm:$0xff] %v3919
                %v3921 = vld [vmem:[%s3917 + $0x8] sm:$0xff]
                %3922 = vst [vmem:[%s3918 + $0x8] sm:$0xff] %v3921
                %v3923 = vld [vmem:[%s3917 + $0x10] sm:$0xff]
                %3924 = vst [vmem:[%s3918 + $0x20] sm:$0xff] %v3923
                %v3925 = vld [vmem:[%s3917 + $0x18] sm:$0xff]
                %3926 = vst [vmem:[%s3918 + $0x28] sm:$0xff] %v3925
              $region85: #{forward.1} parent=79 // loop_footer
                %s3916 = sadd.s32 1, %s3912
              $region86: #{forward.1} parent=79 // loop_footer_branch
                %3911 = sbr.rel target = $region82
              $region87: #{forward.1} parent=79 // loop_exit
                _
            $region80: #{forward.1} parent=71 // pred_fallthru
              _
          $region72: #{forward.1} parent=67 // pred_fallthru
            _
          %3947 = vnop
        $region68: #{forward.1} parent=59 // pred_fallthru
          _
      $region60: #{forward.1} parent=5 // pred_fallthru
        _
      %p3948 = scmp.le.s32.totalorder 2, %s17
      // Predicated region
      $region103: #{forward.1} parent=5 // pred_check
        %p3949 = pneg %p3948
      $region104: #{forward.1} parent=5 // pred_check_branch
        %3951 = sbr.rel (%p3949) target = $region106
      $region105: #{forward.1} parent=5 // pred_region
        %s3952 = ssub.s32 %s17, 2
        // Predicated region
        $region107: #{forward.1} parent=105 // pred_check
          %p3953 = pneg %p261
        $region108: #{forward.1} parent=105 // pred_check_branch
          %3955 = sbr.rel (%p3953) target = $region110
        $region109: #{forward.1} parent=105 // pred_region
          %s3956 = sand.u32 %s246, 1
          %s3957 = sand.u32 %s246, 1
          %s3958 = smul.addr %s3957, 32
          %s3959 = scalar_lea.vmem [#allocation4], %s3958
        $region110: #{forward.1} parent=105 // pred_fallthru
          _
      $region106: #{forward.1} parent=5 // pred_fallthru
        _
    $region6: #{forward.1} parent=1 // loop_footer
      %s21 = sadd.s32 1, %s17
    $region7: #{forward.1} parent=1 // loop_footer_branch
      %16 = sbr.rel target = $region3
    $region8: #{forward.1} parent=1 // loop_exit
      _
    %3960 = vsyncpa [#allocation3], 1
    %s3961 = scalar_lea.sflag [#allocation3], 1
    %3962 = vsyncpa %s3961, 1

</llo_original>
